<compile_context>
chip_gen: v7x
topology: tpu7x:2x2x1
jax: 0.10.0
libtpu: 0.0.40
codegen_flags: <defaults>
</compile_context>

<pallas_src>
import numpy as np

import jax
import jax.numpy as jnp
from jax.experimental import pallas as pl
from jax.experimental.pallas import tpu as pltpu


# ----------------------------------------------------------------------------
# Fused kernel: fc1 -> conv1 -> conv2 -> fc2 -> sigmoid, all resident in VMEM.
# ----------------------------------------------------------------------------
def _fused_forward_kernel(img_ref, w1_ref, b1_ref, a1_ref, cb1_ref,
                          a2_ref, cb2_ref, w2_ref, b2_ref, o_ref):
    leaky = lambda t: jnp.where(t >= 0.0, t, 0.2 * t)
    bt = img_ref.shape[0]

    # fc1 (bf16 operands, f32 MXU accumulation) + LeakyReLU(0.2).
    # Output columns are pre-arranged (at init) into 15 slabs of 128 lanes:
    # slab ho holds image rows 2ho..2ho+2 (96 real lanes + 32 zero pad lanes).
    h = jnp.dot(img_ref[...], w1_ref[...], preferred_element_type=jnp.float32)
    h = leaky(h + b1_ref[...])                                   # (bt, 15*128)

    # conv1: Conv2d(1,8,3,stride=2) + LeakyReLU as one aligned 128-lane slab
    # matmul per output row.  Columns of each row = [c1*15 + wo1] (+ zero pad).
    a1 = a1_ref[...]                                             # (128,128)
    cb1 = cb1_ref[...]                                           # (1,128)
    rows = []
    for ho in range(15):
        slab = h[:, 128 * ho:128 * (ho + 1)]                     # vreg-aligned slice
        rows.append(leaky(jnp.dot(slab, a1,
                                  preferred_element_type=jnp.float32) + cb1))

    # conv2: Conv2d(8,8,3,stride=2) + LeakyReLU, then fc2 accumulated on the fly
    # (row-by-row), all on (bt,128)@(128,128) MXU dots.
    cb2 = cb2_ref[...]                                           # (1,128)
    acc = jnp.zeros((bt, 128), jnp.float32)
    for ho2 in range(7):
        z = jnp.zeros((bt, 128), jnp.float32)
        for kh in range(3):
            z = z + jnp.dot(rows[2 * ho2 + kh], a2_ref[kh],
                            preferred_element_type=jnp.float32)
        a2row = leaky(z + cb2)                                   # cols = [c2*7+wo2]
        acc = acc + jnp.dot(a2row, w2_ref[ho2],
                            preferred_element_type=jnp.float32)

    # fc2 bias folded into the fused epilogue + sigmoid.  Lane-dense (bt,128)
    # store; the real validity sits in column 0 (sliced in the wrapper).
    logits = acc + b2_ref[...]
    o_ref[...] = 1.0 / (1.0 + jnp.exp(-logits))


# ----------------------------------------------------------------------------
# Forward wrapper: single pallas_call, batch tiled over a parallel grid axis.
# ----------------------------------------------------------------------------
def conv_discriminator_forward(packed, img):
    B, dim = img.shape
    bt = B if B <= 256 else 256                 # >=256 rows/step when batched
    grid = (pl.cdiv(B, bt),)

    out = pl.pallas_call(
        _fused_forward_kernel,
        out_shape=jax.ShapeDtypeStruct((B, 128), jnp.float32),
        grid=grid,
        in_specs=[
            pl.BlockSpec((bt, dim), lambda i: (i, 0)),            # img (bf16)
            pl.BlockSpec((dim, 15 * 128), lambda i: (0, 0)),      # fc1 W (bf16)
            pl.BlockSpec((1, 15 * 128), lambda i: (0, 0)),        # fc1 b
            pl.BlockSpec((128, 128), lambda i: (0, 0)),           # conv1 operator
            pl.BlockSpec((1, 128), lambda i: (0, 0)),             # conv1 bias
            pl.BlockSpec((3, 128, 128), lambda i: (0, 0, 0)),     # conv2 operators
            pl.BlockSpec((1, 128), lambda i: (0, 0)),             # conv2 bias
            pl.BlockSpec((7, 128, 128), lambda i: (0, 0, 0)),     # fc2 (per conv2 row)
            pl.BlockSpec((1, 128), lambda i: (0, 0)),             # fc2 bias (epilogue)
        ],
        out_specs=pl.BlockSpec((bt, 128), lambda i: (i, 0)),
        compiler_params=pltpu.CompilerParams(
            dimension_semantics=("parallel",)),
    )(img.astype(jnp.bfloat16), packed["w1"], packed["b1"], packed["a1"],
      packed["cb1"], packed["a2"], packed["cb2"], packed["w2"], packed["b2"])

    return out[:, :1]                                             # (B, 1)


# ----------------------------------------------------------------------------
# Parameters (PyTorch-default-style uniform(+-1/sqrt(fan_in))).
# ----------------------------------------------------------------------------
def init_params(key, dim):
    def uni(k, shape, fan_in):
        bound = 1.0 / float(fan_in) ** 0.5
        return jax.random.uniform(k, shape, jnp.float32, -bound, bound)

    ks = jax.random.split(key, 8)
    return {
        "fc1_w": uni(ks[0], (1024, dim), dim),       # nn.Linear(dim, 1024)
        "fc1_b": uni(ks[1], (1024,), dim),
        "c1_w":  uni(ks[2], (8, 1, 3, 3), 1 * 9),    # nn.Conv2d(1, 8, 3, stride=2)
        "c1_b":  uni(ks[3], (8,), 1 * 9),
        "c2_w":  uni(ks[4], (8, 8, 3, 3), 8 * 9),    # nn.Conv2d(8, 8, 3, stride=2)
        "c2_b":  uni(ks[5], (8,), 8 * 9),
        "fc2_w": uni(ks[6], (1, 392), 392),          # nn.Linear(392, 1)
        "fc2_b": uni(ks[7], (1,), 392),
    }


# ----------------------------------------------------------------------------
# One-time (hoisted) weight preprocessing: fold im2col / transposes / bias
# packing into the weight layout so the kernel only does aligned matmuls.
# ----------------------------------------------------------------------------
def pack_params(params):
    fc1_w = np.asarray(params["fc1_w"], np.float32)   # (1024, dim)
    fc1_b = np.asarray(params["fc1_b"], np.float32)   # (1024,)
    c1_w = np.asarray(params["c1_w"], np.float32)     # (8,1,3,3)
    c1_b = np.asarray(params["c1_b"], np.float32)     # (8,)
    c2_w = np.asarray(params["c2_w"], np.float32)     # (8,8,3,3)
    c2_b = np.asarray(params["c2_b"], np.float32)     # (8,)
    fc2_w = np.asarray(params["fc2_w"], np.float32)   # (1, 392)
    fc2_b = np.asarray(params["fc2_b"], np.float32)   # (1,)
    dim = fc1_w.shape[1]

    # fc1 expanded: slab ho (128 lanes) = image rows 2ho, 2ho+1, 2ho+2 (32 px each).
    w1e = np.zeros((dim, 15, 128), np.float32)
    b1e = np.zeros((15, 128), np.float32)
    for ho in range(15):
        for kh in range(3):
            units = (2 * ho + kh) * 32 + np.arange(32)      # original fc1 outputs
            w1e[:, ho, kh * 32:kh * 32 + 32] = fc1_w[units, :].T
            b1e[ho, kh * 32:kh * 32 + 32] = fc1_b[units]
    w1e = w1e.reshape(dim, 15 * 128)
    b1e = b1e.reshape(1, 15 * 128)

    # conv1 operator: A1[kh*32 + iw, c1*15 + wo] = c1_w[c1, 0, kh, iw - 2*wo]
    a1 = np.zeros((128, 128), np.float32)
    for c1 in range(8):
        for wo in range(15):
            for kh in range(3):
                for kw in range(3):
                    a1[kh * 32 + 2 * wo + kw, c1 * 15 + wo] = c1_w[c1, 0, kh, kw]
    cb1 = np.zeros((1, 128), np.float32)
    cb1[0, :120] = np.repeat(c1_b, 15)

    # conv2 operators (one per kh): rows indexed by [c1*15+wo1], cols by [c2*7+wo2].
    a2 = np.zeros((3, 128, 128), np.float32)
    for c2 in range(8):
        for c1 in range(8):
            for kh in range(3):
                for kw in range(3):
                    for wo2 in range(7):
                        a2[kh, c1 * 15 + 2 * wo2 + kw, c2 * 7 + wo2] = \
                            c2_w[c2, c1, kh, kw]
    cb2 = np.zeros((1, 128), np.float32)
    cb2[0, :56] = np.repeat(c2_b, 7)

    # fc2 split per conv2 output row; matches PyTorch NCHW flatten c2*49+ho2*7+wo2.
    w2p = np.zeros((7, 128, 128), np.float32)
    for ho2 in range(7):
        for c2 in range(8):
            for wo2 in range(7):
                w2p[ho2, c2 * 7 + wo2, 0] = fc2_w[0, c2 * 49 + ho2 * 7 + wo2]
    b2 = np.full((1, 128), fc2_b[0], np.float32)

    return {
        "w1": jnp.asarray(w1e, jnp.bfloat16),   # bf16 operands, f32 accumulation
        "b1": jnp.asarray(b1e, jnp.float32),
        "a1": jnp.asarray(a1, jnp.float32),
        "cb1": jnp.asarray(cb1, jnp.float32),
        "a2": jnp.asarray(a2, jnp.float32),
        "cb2": jnp.asarray(cb2, jnp.float32),
        "w2": jnp.asarray(w2p, jnp.float32),
        "b2": jnp.asarray(b2, jnp.float32),
    }


# ----------------------------------------------------------------------------
# Pure-JAX reference (correctness check only).
# ----------------------------------------------------------------------------
def reference_forward(params, img):
    lrelu = lambda t: jnp.where(t >= 0, t, 0.2 * t)
    h = lrelu(img @ params["fc1_w"].T + params["fc1_b"])
    x = h.reshape(img.shape[0], 1, 32, 32)
    x = jax.lax.conv_general_dilated(x, params["c1_w"], (2, 2), "VALID",
                                     dimension_numbers=("NCHW", "OIHW", "NCHW"))
    x = lrelu(x + params["c1_b"][None, :, None, None])
    x = jax.lax.conv_general_dilated(x, params["c2_w"], (2, 2), "VALID",
                                     dimension_numbers=("NCHW", "OIHW", "NCHW"))
    x = lrelu(x + params["c2_b"][None, :, None, None])
    flat = x.reshape(img.shape[0], -1)
    return 1.0 / (1.0 + jnp.exp(-(flat @ params["fc2_w"].T + params["fc2_b"])))


if __name__ == "__main__":
    key = jax.random.PRNGKey(0)
    k_param, k_img = jax.random.split(key)

    B, DIM = 4, 64                                   # opt.dim = 64 (small, synthetic)
    params = init_params(k_param, DIM)
    packed = pack_params(params)                     # hoisted, one-time preprocessing
    img = jax.random.normal(k_img, (B, DIM), jnp.float32)

    forward = jax.jit(conv_discriminator_forward)
    out = jax.block_until_ready(forward(packed, img))
    assert out.shape == (B, 1), out.shape

    ref = jax.block_until_ready(reference_forward(params, img))
    assert jnp.allclose(out, ref, atol=1e-2, rtol=1e-2), (out, ref)

    print("KERNEL_OK")
</pallas_src>

<mosaic_0001>
module attributes {stable_mosaic.version = 11 : i64} {
  func.func @_fused_forward_kernel(%arg0: i32, %arg1: memref<4x64xbf16, #tpu.memory_space<vmem>>, %arg2: memref<64x1920xbf16, #tpu.memory_space<vmem>>, %arg3: memref<1x1920xf32, #tpu.memory_space<vmem>>, %arg4: memref<128x128xf32, #tpu.memory_space<vmem>>, %arg5: memref<1x128xf32, #tpu.memory_space<vmem>>, %arg6: memref<3x128x128xf32, #tpu.memory_space<vmem>>, %arg7: memref<1x128xf32, #tpu.memory_space<vmem>>, %arg8: memref<7x128x128xf32, #tpu.memory_space<vmem>>, %arg9: memref<1x128xf32, #tpu.memory_space<vmem>>, %arg10: memref<4x128xf32, #tpu.memory_space<vmem>>) attributes {dimension_semantics = [#tpu.dimension_semantics<parallel>], iteration_bounds = array<i64: 1>, scalar_prefetch = 0 : i64, scratch_operands = 0 : i64, tpu.core_type = #tpu.core_type<tc>, window_params = [{transform_indices = @transform_0, window_bounds = array<i64: 4, 64>}, {pipeline_mode = #tpu.pipeline_mode<synchronous>, transform_indices = @transform_1, window_bounds = array<i64: 64, 1920>}, {pipeline_mode = #tpu.pipeline_mode<synchronous>, transform_indices = @transform_2, window_bounds = array<i64: 1, 1920>}, {pipeline_mode = #tpu.pipeline_mode<synchronous>, transform_indices = @transform_3, window_bounds = array<i64: 128, 128>}, {pipeline_mode = #tpu.pipeline_mode<synchronous>, transform_indices = @transform_4, window_bounds = array<i64: 1, 128>}, {pipeline_mode = #tpu.pipeline_mode<synchronous>, transform_indices = @transform_5, window_bounds = array<i64: 3, 128, 128>}, {pipeline_mode = #tpu.pipeline_mode<synchronous>, transform_indices = @transform_6, window_bounds = array<i64: 1, 128>}, {pipeline_mode = #tpu.pipeline_mode<synchronous>, transform_indices = @transform_7, window_bounds = array<i64: 7, 128, 128>}, {pipeline_mode = #tpu.pipeline_mode<synchronous>, transform_indices = @transform_8, window_bounds = array<i64: 1, 128>}, {transform_indices = @transform_9, window_bounds = array<i64: 4, 128>}]} {
    %c0 = arith.constant 0 : index
    %c0_0 = arith.constant 0 : index
    %0 = vector.load %arg1[%c0, %c0_0] : memref<4x64xbf16, #tpu.memory_space<vmem>>, vector<4x64xbf16>
    %c0_1 = arith.constant 0 : index
    %c0_2 = arith.constant 0 : index
    %1 = vector.load %arg2[%c0_1, %c0_2] : memref<64x1920xbf16, #tpu.memory_space<vmem>>, vector<64x1920xbf16>
    %cst = arith.constant dense<0.000000e+00> : vector<4x1920xf32>
    %2 = tpu.matmul %0, %1, %cst {dimension_numbers = #tpu.dot_dimension_numbers<[1], [0], [0], [1], [0, 0, 1, 1], [], []>} : vector<4x64xbf16>, vector<64x1920xbf16>, vector<4x1920xf32> -> vector<4x1920xf32>
    %c0_3 = arith.constant 0 : index
    %c0_4 = arith.constant 0 : index
    %3 = vector.load %arg3[%c0_3, %c0_4] : memref<1x1920xf32, #tpu.memory_space<vmem>>, vector<1x1920xf32>
    %4 = vector.broadcast %3 : vector<1x1920xf32> to vector<4x1920xf32>
    %5 = arith.addf %2, %4 : vector<4x1920xf32>
    %cst_5 = arith.constant 0.000000e+00 : f32
    %6 = vector.broadcast %cst_5 : f32 to vector<4x1920xf32>
    %7 = arith.cmpf oge, %5, %6 : vector<4x1920xf32>
    %cst_6 = arith.constant 2.000000e-01 : f32
    %8 = vector.broadcast %cst_6 : f32 to vector<4x1920xf32>
    %9 = arith.mulf %8, %5 : vector<4x1920xf32>
    %10 = arith.select %7, %5, %9 : vector<4x1920xi1>, vector<4x1920xf32>
    %c0_7 = arith.constant 0 : index
    %c0_8 = arith.constant 0 : index
    %11 = vector.load %arg4[%c0_7, %c0_8] : memref<128x128xf32, #tpu.memory_space<vmem>>, vector<128x128xf32>
    %c0_9 = arith.constant 0 : index
    %c0_10 = arith.constant 0 : index
    %12 = vector.load %arg5[%c0_9, %c0_10] : memref<1x128xf32, #tpu.memory_space<vmem>>, vector<1x128xf32>
    %13 = vector.extract_strided_slice %10 {offsets = [0, 0], sizes = [4, 128], strides = [1, 1]} : vector<4x1920xf32> to vector<4x128xf32>
    %cst_11 = arith.constant dense<0.000000e+00> : vector<4x128xf32>
    %14 = tpu.matmul %13, %11, %cst_11 {dimension_numbers = #tpu.dot_dimension_numbers<[1], [0], [0], [1], [0, 0, 1, 1], [], []>} : vector<4x128xf32>, vector<128x128xf32>, vector<4x128xf32> -> vector<4x128xf32>
    %15 = vector.broadcast %12 : vector<1x128xf32> to vector<4x128xf32>
    %16 = arith.addf %14, %15 : vector<4x128xf32>
    %cst_12 = arith.constant 0.000000e+00 : f32
    %17 = vector.broadcast %cst_12 : f32 to vector<4x128xf32>
    %18 = arith.cmpf oge, %16, %17 : vector<4x128xf32>
    %cst_13 = arith.constant 2.000000e-01 : f32
    %19 = vector.broadcast %cst_13 : f32 to vector<4x128xf32>
    %20 = arith.mulf %19, %16 : vector<4x128xf32>
    %21 = arith.select %18, %16, %20 : vector<4x128xi1>, vector<4x128xf32>
    %22 = vector.extract_strided_slice %10 {offsets = [0, 128], sizes = [4, 128], strides = [1, 1]} : vector<4x1920xf32> to vector<4x128xf32>
    %cst_14 = arith.constant dense<0.000000e+00> : vector<4x128xf32>
    %23 = tpu.matmul %22, %11, %cst_14 {dimension_numbers = #tpu.dot_dimension_numbers<[1], [0], [0], [1], [0, 0, 1, 1], [], []>} : vector<4x128xf32>, vector<128x128xf32>, vector<4x128xf32> -> vector<4x128xf32>
    %24 = vector.broadcast %12 : vector<1x128xf32> to vector<4x128xf32>
    %25 = arith.addf %23, %24 : vector<4x128xf32>
    %cst_15 = arith.constant 0.000000e+00 : f32
    %26 = vector.broadcast %cst_15 : f32 to vector<4x128xf32>
    %27 = arith.cmpf oge, %25, %26 : vector<4x128xf32>
    %cst_16 = arith.constant 2.000000e-01 : f32
    %28 = vector.broadcast %cst_16 : f32 to vector<4x128xf32>
    %29 = arith.mulf %28, %25 : vector<4x128xf32>
    %30 = arith.select %27, %25, %29 : vector<4x128xi1>, vector<4x128xf32>
    %31 = vector.extract_strided_slice %10 {offsets = [0, 256], sizes = [4, 128], strides = [1, 1]} : vector<4x1920xf32> to vector<4x128xf32>
    %cst_17 = arith.constant dense<0.000000e+00> : vector<4x128xf32>
    %32 = tpu.matmul %31, %11, %cst_17 {dimension_numbers = #tpu.dot_dimension_numbers<[1], [0], [0], [1], [0, 0, 1, 1], [], []>} : vector<4x128xf32>, vector<128x128xf32>, vector<4x128xf32> -> vector<4x128xf32>
    %33 = vector.broadcast %12 : vector<1x128xf32> to vector<4x128xf32>
    %34 = arith.addf %32, %33 : vector<4x128xf32>
    %cst_18 = arith.constant 0.000000e+00 : f32
    %35 = vector.broadcast %cst_18 : f32 to vector<4x128xf32>
    %36 = arith.cmpf oge, %34, %35 : vector<4x128xf32>
    %cst_19 = arith.constant 2.000000e-01 : f32
    %37 = vector.broadcast %cst_19 : f32 to vector<4x128xf32>
    %38 = arith.mulf %37, %34 : vector<4x128xf32>
    %39 = arith.select %36, %34, %38 : vector<4x128xi1>, vector<4x128xf32>
    %40 = vector.extract_strided_slice %10 {offsets = [0, 384], sizes = [4, 128], strides = [1, 1]} : vector<4x1920xf32> to vector<4x128xf32>
    %cst_20 = arith.constant dense<0.000000e+00> : vector<4x128xf32>
    %41 = tpu.matmul %40, %11, %cst_20 {dimension_numbers = #tpu.dot_dimension_numbers<[1], [0], [0], [1], [0, 0, 1, 1], [], []>} : vector<4x128xf32>, vector<128x128xf32>, vector<4x128xf32> -> vector<4x128xf32>
    %42 = vector.broadcast %12 : vector<1x128xf32> to vector<4x128xf32>
    %43 = arith.addf %41, %42 : vector<4x128xf32>
    %cst_21 = arith.constant 0.000000e+00 : f32
    %44 = vector.broadcast %cst_21 : f32 to vector<4x128xf32>
    %45 = arith.cmpf oge, %43, %44 : vector<4x128xf32>
    %cst_22 = arith.constant 2.000000e-01 : f32
    %46 = vector.broadcast %cst_22 : f32 to vector<4x128xf32>
    %47 = arith.mulf %46, %43 : vector<4x128xf32>
    %48 = arith.select %45, %43, %47 : vector<4x128xi1>, vector<4x128xf32>
    %49 = vector.extract_strided_slice %10 {offsets = [0, 512], sizes = [4, 128], strides = [1, 1]} : vector<4x1920xf32> to vector<4x128xf32>
    %cst_23 = arith.constant dense<0.000000e+00> : vector<4x128xf32>
    %50 = tpu.matmul %49, %11, %cst_23 {dimension_numbers = #tpu.dot_dimension_numbers<[1], [0], [0], [1], [0, 0, 1, 1], [], []>} : vector<4x128xf32>, vector<128x128xf32>, vector<4x128xf32> -> vector<4x128xf32>
    %51 = vector.broadcast %12 : vector<1x128xf32> to vector<4x128xf32>
    %52 = arith.addf %50, %51 : vector<4x128xf32>
    %cst_24 = arith.constant 0.000000e+00 : f32
    %53 = vector.broadcast %cst_24 : f32 to vector<4x128xf32>
    %54 = arith.cmpf oge, %52, %53 : vector<4x128xf32>
    %cst_25 = arith.constant 2.000000e-01 : f32
    %55 = vector.broadcast %cst_25 : f32 to vector<4x128xf32>
    %56 = arith.mulf %55, %52 : vector<4x128xf32>
    %57 = arith.select %54, %52, %56 : vector<4x128xi1>, vector<4x128xf32>
    %58 = vector.extract_strided_slice %10 {offsets = [0, 640], sizes = [4, 128], strides = [1, 1]} : vector<4x1920xf32> to vector<4x128xf32>
    %cst_26 = arith.constant dense<0.000000e+00> : vector<4x128xf32>
    %59 = tpu.matmul %58, %11, %cst_26 {dimension_numbers = #tpu.dot_dimension_numbers<[1], [0], [0], [1], [0, 0, 1, 1], [], []>} : vector<4x128xf32>, vector<128x128xf32>, vector<4x128xf32> -> vector<4x128xf32>
    %60 = vector.broadcast %12 : vector<1x128xf32> to vector<4x128xf32>
    %61 = arith.addf %59, %60 : vector<4x128xf32>
    %cst_27 = arith.constant 0.000000e+00 : f32
    %62 = vector.broadcast %cst_27 : f32 to vector<4x128xf32>
    %63 = arith.cmpf oge, %61, %62 : vector<4x128xf32>
    %cst_28 = arith.constant 2.000000e-01 : f32
    %64 = vector.broadcast %cst_28 : f32 to vector<4x128xf32>
    %65 = arith.mulf %64, %61 : vector<4x128xf32>
    %66 = arith.select %63, %61, %65 : vector<4x128xi1>, vector<4x128xf32>
    %67 = vector.extract_strided_slice %10 {offsets = [0, 768], sizes = [4, 128], strides = [1, 1]} : vector<4x1920xf32> to vector<4x128xf32>
    %cst_29 = arith.constant dense<0.000000e+00> : vector<4x128xf32>
    %68 = tpu.matmul %67, %11, %cst_29 {dimension_numbers = #tpu.dot_dimension_numbers<[1], [0], [0], [1], [0, 0, 1, 1], [], []>} : vector<4x128xf32>, vector<128x128xf32>, vector<4x128xf32> -> vector<4x128xf32>
    %69 = vector.broadcast %12 : vector<1x128xf32> to vector<4x128xf32>
    %70 = arith.addf %68, %69 : vector<4x128xf32>
    %cst_30 = arith.constant 0.000000e+00 : f32
    %71 = vector.broadcast %cst_30 : f32 to vector<4x128xf32>
    %72 = arith.cmpf oge, %70, %71 : vector<4x128xf32>
    %cst_31 = arith.constant 2.000000e-01 : f32
    %73 = vector.broadcast %cst_31 : f32 to vector<4x128xf32>
    %74 = arith.mulf %73, %70 : vector<4x128xf32>
    %75 = arith.select %72, %70, %74 : vector<4x128xi1>, vector<4x128xf32>
    %76 = vector.extract_strided_slice %10 {offsets = [0, 896], sizes = [4, 128], strides = [1, 1]} : vector<4x1920xf32> to vector<4x128xf32>
    %cst_32 = arith.constant dense<0.000000e+00> : vector<4x128xf32>
    %77 = tpu.matmul %76, %11, %cst_32 {dimension_numbers = #tpu.dot_dimension_numbers<[1], [0], [0], [1], [0, 0, 1, 1], [], []>} : vector<4x128xf32>, vector<128x128xf32>, vector<4x128xf32> -> vector<4x128xf32>
    %78 = vector.broadcast %12 : vector<1x128xf32> to vector<4x128xf32>
    %79 = arith.addf %77, %78 : vector<4x128xf32>
    %cst_33 = arith.constant 0.000000e+00 : f32
    %80 = vector.broadcast %cst_33 : f32 to vector<4x128xf32>
    %81 = arith.cmpf oge, %79, %80 : vector<4x128xf32>
    %cst_34 = arith.constant 2.000000e-01 : f32
    %82 = vector.broadcast %cst_34 : f32 to vector<4x128xf32>
    %83 = arith.mulf %82, %79 : vector<4x128xf32>
    %84 = arith.select %81, %79, %83 : vector<4x128xi1>, vector<4x128xf32>
    %85 = vector.extract_strided_slice %10 {offsets = [0, 1024], sizes = [4, 128], strides = [1, 1]} : vector<4x1920xf32> to vector<4x128xf32>
    %cst_35 = arith.constant dense<0.000000e+00> : vector<4x128xf32>
    %86 = tpu.matmul %85, %11, %cst_35 {dimension_numbers = #tpu.dot_dimension_numbers<[1], [0], [0], [1], [0, 0, 1, 1], [], []>} : vector<4x128xf32>, vector<128x128xf32>, vector<4x128xf32> -> vector<4x128xf32>
    %87 = vector.broadcast %12 : vector<1x128xf32> to vector<4x128xf32>
    %88 = arith.addf %86, %87 : vector<4x128xf32>
    %cst_36 = arith.constant 0.000000e+00 : f32
    %89 = vector.broadcast %cst_36 : f32 to vector<4x128xf32>
    %90 = arith.cmpf oge, %88, %89 : vector<4x128xf32>
    %cst_37 = arith.constant 2.000000e-01 : f32
    %91 = vector.broadcast %cst_37 : f32 to vector<4x128xf32>
    %92 = arith.mulf %91, %88 : vector<4x128xf32>
    %93 = arith.select %90, %88, %92 : vector<4x128xi1>, vector<4x128xf32>
    %94 = vector.extract_strided_slice %10 {offsets = [0, 1152], sizes = [4, 128], strides = [1, 1]} : vector<4x1920xf32> to vector<4x128xf32>
    %cst_38 = arith.constant dense<0.000000e+00> : vector<4x128xf32>
    %95 = tpu.matmul %94, %11, %cst_38 {dimension_numbers = #tpu.dot_dimension_numbers<[1], [0], [0], [1], [0, 0, 1, 1], [], []>} : vector<4x128xf32>, vector<128x128xf32>, vector<4x128xf32> -> vector<4x128xf32>
    %96 = vector.broadcast %12 : vector<1x128xf32> to vector<4x128xf32>
    %97 = arith.addf %95, %96 : vector<4x128xf32>
    %cst_39 = arith.constant 0.000000e+00 : f32
    %98 = vector.broadcast %cst_39 : f32 to vector<4x128xf32>
    %99 = arith.cmpf oge, %97, %98 : vector<4x128xf32>
    %cst_40 = arith.constant 2.000000e-01 : f32
    %100 = vector.broadcast %cst_40 : f32 to vector<4x128xf32>
    %101 = arith.mulf %100, %97 : vector<4x128xf32>
    %102 = arith.select %99, %97, %101 : vector<4x128xi1>, vector<4x128xf32>
    %103 = vector.extract_strided_slice %10 {offsets = [0, 1280], sizes = [4, 128], strides = [1, 1]} : vector<4x1920xf32> to vector<4x128xf32>
    %cst_41 = arith.constant dense<0.000000e+00> : vector<4x128xf32>
    %104 = tpu.matmul %103, %11, %cst_41 {dimension_numbers = #tpu.dot_dimension_numbers<[1], [0], [0], [1], [0, 0, 1, 1], [], []>} : vector<4x128xf32>, vector<128x128xf32>, vector<4x128xf32> -> vector<4x128xf32>
    %105 = vector.broadcast %12 : vector<1x128xf32> to vector<4x128xf32>
    %106 = arith.addf %104, %105 : vector<4x128xf32>
    %cst_42 = arith.constant 0.000000e+00 : f32
    %107 = vector.broadcast %cst_42 : f32 to vector<4x128xf32>
    %108 = arith.cmpf oge, %106, %107 : vector<4x128xf32>
    %cst_43 = arith.constant 2.000000e-01 : f32
    %109 = vector.broadcast %cst_43 : f32 to vector<4x128xf32>
    %110 = arith.mulf %109, %106 : vector<4x128xf32>
    %111 = arith.select %108, %106, %110 : vector<4x128xi1>, vector<4x128xf32>
    %112 = vector.extract_strided_slice %10 {offsets = [0, 1408], sizes = [4, 128], strides = [1, 1]} : vector<4x1920xf32> to vector<4x128xf32>
    %cst_44 = arith.constant dense<0.000000e+00> : vector<4x128xf32>
    %113 = tpu.matmul %112, %11, %cst_44 {dimension_numbers = #tpu.dot_dimension_numbers<[1], [0], [0], [1], [0, 0, 1, 1], [], []>} : vector<4x128xf32>, vector<128x128xf32>, vector<4x128xf32> -> vector<4x128xf32>
    %114 = vector.broadcast %12 : vector<1x128xf32> to vector<4x128xf32>
    %115 = arith.addf %113, %114 : vector<4x128xf32>
    %cst_45 = arith.constant 0.000000e+00 : f32
    %116 = vector.broadcast %cst_45 : f32 to vector<4x128xf32>
    %117 = arith.cmpf oge, %115, %116 : vector<4x128xf32>
    %cst_46 = arith.constant 2.000000e-01 : f32
    %118 = vector.broadcast %cst_46 : f32 to vector<4x128xf32>
    %119 = arith.mulf %118, %115 : vector<4x128xf32>
    %120 = arith.select %117, %115, %119 : vector<4x128xi1>, vector<4x128xf32>
    %121 = vector.extract_strided_slice %10 {offsets = [0, 1536], sizes = [4, 128], strides = [1, 1]} : vector<4x1920xf32> to vector<4x128xf32>
    %cst_47 = arith.constant dense<0.000000e+00> : vector<4x128xf32>
    %122 = tpu.matmul %121, %11, %cst_47 {dimension_numbers = #tpu.dot_dimension_numbers<[1], [0], [0], [1], [0, 0, 1, 1], [], []>} : vector<4x128xf32>, vector<128x128xf32>, vector<4x128xf32> -> vector<4x128xf32>
    %123 = vector.broadcast %12 : vector<1x128xf32> to vector<4x128xf32>
    %124 = arith.addf %122, %123 : vector<4x128xf32>
    %cst_48 = arith.constant 0.000000e+00 : f32
    %125 = vector.broadcast %cst_48 : f32 to vector<4x128xf32>
    %126 = arith.cmpf oge, %124, %125 : vector<4x128xf32>
    %cst_49 = arith.constant 2.000000e-01 : f32
    %127 = vector.broadcast %cst_49 : f32 to vector<4x128xf32>
    %128 = arith.mulf %127, %124 : vector<4x128xf32>
    %129 = arith.select %126, %124, %128 : vector<4x128xi1>, vector<4x128xf32>
    %130 = vector.extract_strided_slice %10 {offsets = [0, 1664], sizes = [4, 128], strides = [1, 1]} : vector<4x1920xf32> to vector<4x128xf32>
    %cst_50 = arith.constant dense<0.000000e+00> : vector<4x128xf32>
    %131 = tpu.matmul %130, %11, %cst_50 {dimension_numbers = #tpu.dot_dimension_numbers<[1], [0], [0], [1], [0, 0, 1, 1], [], []>} : vector<4x128xf32>, vector<128x128xf32>, vector<4x128xf32> -> vector<4x128xf32>
    %132 = vector.broadcast %12 : vector<1x128xf32> to vector<4x128xf32>
    %133 = arith.addf %131, %132 : vector<4x128xf32>
    %cst_51 = arith.constant 0.000000e+00 : f32
    %134 = vector.broadcast %cst_51 : f32 to vector<4x128xf32>
    %135 = arith.cmpf oge, %133, %134 : vector<4x128xf32>
    %cst_52 = arith.constant 2.000000e-01 : f32
    %136 = vector.broadcast %cst_52 : f32 to vector<4x128xf32>
    %137 = arith.mulf %136, %133 : vector<4x128xf32>
    %138 = arith.select %135, %133, %137 : vector<4x128xi1>, vector<4x128xf32>
    %139 = vector.extract_strided_slice %10 {offsets = [0, 1792], sizes = [4, 128], strides = [1, 1]} : vector<4x1920xf32> to vector<4x128xf32>
    %cst_53 = arith.constant dense<0.000000e+00> : vector<4x128xf32>
    %140 = tpu.matmul %139, %11, %cst_53 {dimension_numbers = #tpu.dot_dimension_numbers<[1], [0], [0], [1], [0, 0, 1, 1], [], []>} : vector<4x128xf32>, vector<128x128xf32>, vector<4x128xf32> -> vector<4x128xf32>
    %141 = vector.broadcast %12 : vector<1x128xf32> to vector<4x128xf32>
    %142 = arith.addf %140, %141 : vector<4x128xf32>
    %cst_54 = arith.constant 0.000000e+00 : f32
    %143 = vector.broadcast %cst_54 : f32 to vector<4x128xf32>
    %144 = arith.cmpf oge, %142, %143 : vector<4x128xf32>
    %cst_55 = arith.constant 2.000000e-01 : f32
    %145 = vector.broadcast %cst_55 : f32 to vector<4x128xf32>
    %146 = arith.mulf %145, %142 : vector<4x128xf32>
    %147 = arith.select %144, %142, %146 : vector<4x128xi1>, vector<4x128xf32>
    %c0_56 = arith.constant 0 : index
    %c0_57 = arith.constant 0 : index
    %148 = vector.load %arg7[%c0_56, %c0_57] : memref<1x128xf32, #tpu.memory_space<vmem>>, vector<1x128xf32>
    %cst_58 = arith.constant 0.000000e+00 : f32
    %149 = vector.broadcast %cst_58 : f32 to vector<4x128xf32>
    %cst_59 = arith.constant 0.000000e+00 : f32
    %150 = vector.broadcast %cst_59 : f32 to vector<4x128xf32>
    %c0_60 = arith.constant 0 : index
    %c0_61 = arith.constant 0 : index
    %c0_62 = arith.constant 0 : index
    %151 = vector.load %arg6[%c0_60, %c0_61, %c0_62] : memref<3x128x128xf32, #tpu.memory_space<vmem>>, vector<1x128x128xf32>
    %152 = vector.shape_cast %151 : vector<1x128x128xf32> to vector<128x128xf32>
    %cst_63 = arith.constant dense<0.000000e+00> : vector<4x128xf32>
    %153 = tpu.matmul %21, %152, %cst_63 {dimension_numbers = #tpu.dot_dimension_numbers<[1], [0], [0], [1], [0, 0, 1, 1], [], []>} : vector<4x128xf32>, vector<128x128xf32>, vector<4x128xf32> -> vector<4x128xf32>
    %154 = arith.addf %150, %153 : vector<4x128xf32>
    %c1 = arith.constant 1 : index
    %c0_64 = arith.constant 0 : index
    %c0_65 = arith.constant 0 : index
    %155 = vector.load %arg6[%c1, %c0_64, %c0_65] : memref<3x128x128xf32, #tpu.memory_space<vmem>>, vector<1x128x128xf32>
    %156 = vector.shape_cast %155 : vector<1x128x128xf32> to vector<128x128xf32>
    %cst_66 = arith.constant dense<0.000000e+00> : vector<4x128xf32>
    %157 = tpu.matmul %30, %156, %cst_66 {dimension_numbers = #tpu.dot_dimension_numbers<[1], [0], [0], [1], [0, 0, 1, 1], [], []>} : vector<4x128xf32>, vector<128x128xf32>, vector<4x128xf32> -> vector<4x128xf32>
    %158 = arith.addf %154, %157 : vector<4x128xf32>
    %c2 = arith.constant 2 : index
    %c0_67 = arith.constant 0 : index
    %c0_68 = arith.constant 0 : index
    %159 = vector.load %arg6[%c2, %c0_67, %c0_68] : memref<3x128x128xf32, #tpu.memory_space<vmem>>, vector<1x128x128xf32>
    %160 = vector.shape_cast %159 : vector<1x128x128xf32> to vector<128x128xf32>
    %cst_69 = arith.constant dense<0.000000e+00> : vector<4x128xf32>
    %161 = tpu.matmul %39, %160, %cst_69 {dimension_numbers = #tpu.dot_dimension_numbers<[1], [0], [0], [1], [0, 0, 1, 1], [], []>} : vector<4x128xf32>, vector<128x128xf32>, vector<4x128xf32> -> vector<4x128xf32>
    %162 = arith.addf %158, %161 : vector<4x128xf32>
    %163 = vector.broadcast %148 : vector<1x128xf32> to vector<4x128xf32>
    %164 = arith.addf %162, %163 : vector<4x128xf32>
    %cst_70 = arith.constant 0.000000e+00 : f32
    %165 = vector.broadcast %cst_70 : f32 to vector<4x128xf32>
    %166 = arith.cmpf oge, %164, %165 : vector<4x128xf32>
    %cst_71 = arith.constant 2.000000e-01 : f32
    %167 = vector.broadcast %cst_71 : f32 to vector<4x128xf32>
    %168 = arith.mulf %167, %164 : vector<4x128xf32>
    %169 = arith.select %166, %164, %168 : vector<4x128xi1>, vector<4x128xf32>
    %c0_72 = arith.constant 0 : index
    %c0_73 = arith.constant 0 : index
    %c0_74 = arith.constant 0 : index
    %170 = vector.load %arg8[%c0_72, %c0_73, %c0_74] : memref<7x128x128xf32, #tpu.memory_space<vmem>>, vector<1x128x128xf32>
    %171 = vector.shape_cast %170 : vector<1x128x128xf32> to vector<128x128xf32>
    %cst_75 = arith.constant dense<0.000000e+00> : vector<4x128xf32>
    %172 = tpu.matmul %169, %171, %cst_75 {dimension_numbers = #tpu.dot_dimension_numbers<[1], [0], [0], [1], [0, 0, 1, 1], [], []>} : vector<4x128xf32>, vector<128x128xf32>, vector<4x128xf32> -> vector<4x128xf32>
    %173 = arith.addf %149, %172 : vector<4x128xf32>
    %cst_76 = arith.constant 0.000000e+00 : f32
    %174 = vector.broadcast %cst_76 : f32 to vector<4x128xf32>
    %c0_77 = arith.constant 0 : index
    %c0_78 = arith.constant 0 : index
    %c0_79 = arith.constant 0 : index
    %175 = vector.load %arg6[%c0_77, %c0_78, %c0_79] : memref<3x128x128xf32, #tpu.memory_space<vmem>>, vector<1x128x128xf32>
    %176 = vector.shape_cast %175 : vector<1x128x128xf32> to vector<128x128xf32>
    %cst_80 = arith.constant dense<0.000000e+00> : vector<4x128xf32>
    %177 = tpu.matmul %39, %176, %cst_80 {dimension_numbers = #tpu.dot_dimension_numbers<[1], [0], [0], [1], [0, 0, 1, 1], [], []>} : vector<4x128xf32>, vector<128x128xf32>, vector<4x128xf32> -> vector<4x128xf32>
    %178 = arith.addf %174, %177 : vector<4x128xf32>
    %c1_81 = arith.constant 1 : index
    %c0_82 = arith.constant 0 : index
    %c0_83 = arith.constant 0 : index
    %179 = vector.load %arg6[%c1_81, %c0_82, %c0_83] : memref<3x128x128xf32, #tpu.memory_space<vmem>>, vector<1x128x128xf32>
    %180 = vector.shape_cast %179 : vector<1x128x128xf32> to vector<128x128xf32>
    %cst_84 = arith.constant dense<0.000000e+00> : vector<4x128xf32>
    %181 = tpu.matmul %48, %180, %cst_84 {dimension_numbers = #tpu.dot_dimension_numbers<[1], [0], [0], [1], [0, 0, 1, 1], [], []>} : vector<4x128xf32>, vector<128x128xf32>, vector<4x128xf32> -> vector<4x128xf32>
    %182 = arith.addf %178, %181 : vector<4x128xf32>
    %c2_85 = arith.constant 2 : index
    %c0_86 = arith.constant 0 : index
    %c0_87 = arith.constant 0 : index
    %183 = vector.load %arg6[%c2_85, %c0_86, %c0_87] : memref<3x128x128xf32, #tpu.memory_space<vmem>>, vector<1x128x128xf32>
    %184 = vector.shape_cast %183 : vector<1x128x128xf32> to vector<128x128xf32>
    %cst_88 = arith.constant dense<0.000000e+00> : vector<4x128xf32>
    %185 = tpu.matmul %57, %184, %cst_88 {dimension_numbers = #tpu.dot_dimension_numbers<[1], [0], [0], [1], [0, 0, 1, 1], [], []>} : vector<4x128xf32>, vector<128x128xf32>, vector<4x128xf32> -> vector<4x128xf32>
    %186 = arith.addf %182, %185 : vector<4x128xf32>
    %187 = vector.broadcast %148 : vector<1x128xf32> to vector<4x128xf32>
    %188 = arith.addf %186, %187 : vector<4x128xf32>
    %cst_89 = arith.constant 0.000000e+00 : f32
    %189 = vector.broadcast %cst_89 : f32 to vector<4x128xf32>
    %190 = arith.cmpf oge, %188, %189 : vector<4x128xf32>
    %cst_90 = arith.constant 2.000000e-01 : f32
    %191 = vector.broadcast %cst_90 : f32 to vector<4x128xf32>
    %192 = arith.mulf %191, %188 : vector<4x128xf32>
    %193 = arith.select %190, %188, %192 : vector<4x128xi1>, vector<4x128xf32>
    %c1_91 = arith.constant 1 : index
    %c0_92 = arith.constant 0 : index
    %c0_93 = arith.constant 0 : index
    %194 = vector.load %arg8[%c1_91, %c0_92, %c0_93] : memref<7x128x128xf32, #tpu.memory_space<vmem>>, vector<1x128x128xf32>
    %195 = vector.shape_cast %194 : vector<1x128x128xf32> to vector<128x128xf32>
    %cst_94 = arith.constant dense<0.000000e+00> : vector<4x128xf32>
    %196 = tpu.matmul %193, %195, %cst_94 {dimension_numbers = #tpu.dot_dimension_numbers<[1], [0], [0], [1], [0, 0, 1, 1], [], []>} : vector<4x128xf32>, vector<128x128xf32>, vector<4x128xf32> -> vector<4x128xf32>
    %197 = arith.addf %173, %196 : vector<4x128xf32>
    %cst_95 = arith.constant 0.000000e+00 : f32
    %198 = vector.broadcast %cst_95 : f32 to vector<4x128xf32>
    %c0_96 = arith.constant 0 : index
    %c0_97 = arith.constant 0 : index
    %c0_98 = arith.constant 0 : index
    %199 = vector.load %arg6[%c0_96, %c0_97, %c0_98] : memref<3x128x128xf32, #tpu.memory_space<vmem>>, vector<1x128x128xf32>
    %200 = vector.shape_cast %199 : vector<1x128x128xf32> to vector<128x128xf32>
    %cst_99 = arith.constant dense<0.000000e+00> : vector<4x128xf32>
    %201 = tpu.matmul %57, %200, %cst_99 {dimension_numbers = #tpu.dot_dimension_numbers<[1], [0], [0], [1], [0, 0, 1, 1], [], []>} : vector<4x128xf32>, vector<128x128xf32>, vector<4x128xf32> -> vector<4x128xf32>
    %202 = arith.addf %198, %201 : vector<4x128xf32>
    %c1_100 = arith.constant 1 : index
    %c0_101 = arith.constant 0 : index
    %c0_102 = arith.constant 0 : index
    %203 = vector.load %arg6[%c1_100, %c0_101, %c0_102] : memref<3x128x128xf32, #tpu.memory_space<vmem>>, vector<1x128x128xf32>
    %204 = vector.shape_cast %203 : vector<1x128x128xf32> to vector<128x128xf32>
    %cst_103 = arith.constant dense<0.000000e+00> : vector<4x128xf32>
    %205 = tpu.matmul %66, %204, %cst_103 {dimension_numbers = #tpu.dot_dimension_numbers<[1], [0], [0], [1], [0, 0, 1, 1], [], []>} : vector<4x128xf32>, vector<128x128xf32>, vector<4x128xf32> -> vector<4x128xf32>
    %206 = arith.addf %202, %205 : vector<4x128xf32>
    %c2_104 = arith.constant 2 : index
    %c0_105 = arith.constant 0 : index
    %c0_106 = arith.constant 0 : index
    %207 = vector.load %arg6[%c2_104, %c0_105, %c0_106] : memref<3x128x128xf32, #tpu.memory_space<vmem>>, vector<1x128x128xf32>
    %208 = vector.shape_cast %207 : vector<1x128x128xf32> to vector<128x128xf32>
    %cst_107 = arith.constant dense<0.000000e+00> : vector<4x128xf32>
    %209 = tpu.matmul %75, %208, %cst_107 {dimension_numbers = #tpu.dot_dimension_numbers<[1], [0], [0], [1], [0, 0, 1, 1], [], []>} : vector<4x128xf32>, vector<128x128xf32>, vector<4x128xf32> -> vector<4x128xf32>
    %210 = arith.addf %206, %209 : vector<4x128xf32>
    %211 = vector.broadcast %148 : vector<1x128xf32> to vector<4x128xf32>
    %212 = arith.addf %210, %211 : vector<4x128xf32>
    %cst_108 = arith.constant 0.000000e+00 : f32
    %213 = vector.broadcast %cst_108 : f32 to vector<4x128xf32>
    %214 = arith.cmpf oge, %212, %213 : vector<4x128xf32>
    %cst_109 = arith.constant 2.000000e-01 : f32
    %215 = vector.broadcast %cst_109 : f32 to vector<4x128xf32>
    %216 = arith.mulf %215, %212 : vector<4x128xf32>
    %217 = arith.select %214, %212, %216 : vector<4x128xi1>, vector<4x128xf32>
    %c2_110 = arith.constant 2 : index
    %c0_111 = arith.constant 0 : index
    %c0_112 = arith.constant 0 : index
    %218 = vector.load %arg8[%c2_110, %c0_111, %c0_112] : memref<7x128x128xf32, #tpu.memory_space<vmem>>, vector<1x128x128xf32>
    %219 = vector.shape_cast %218 : vector<1x128x128xf32> to vector<128x128xf32>
    %cst_113 = arith.constant dense<0.000000e+00> : vector<4x128xf32>
    %220 = tpu.matmul %217, %219, %cst_113 {dimension_numbers = #tpu.dot_dimension_numbers<[1], [0], [0], [1], [0, 0, 1, 1], [], []>} : vector<4x128xf32>, vector<128x128xf32>, vector<4x128xf32> -> vector<4x128xf32>
    %221 = arith.addf %197, %220 : vector<4x128xf32>
    %cst_114 = arith.constant 0.000000e+00 : f32
    %222 = vector.broadcast %cst_114 : f32 to vector<4x128xf32>
    %c0_115 = arith.constant 0 : index
    %c0_116 = arith.constant 0 : index
    %c0_117 = arith.constant 0 : index
    %223 = vector.load %arg6[%c0_115, %c0_116, %c0_117] : memref<3x128x128xf32, #tpu.memory_space<vmem>>, vector<1x128x128xf32>
    %224 = vector.shape_cast %223 : vector<1x128x128xf32> to vector<128x128xf32>
    %cst_118 = arith.constant dense<0.000000e+00> : vector<4x128xf32>
    %225 = tpu.matmul %75, %224, %cst_118 {dimension_numbers = #tpu.dot_dimension_numbers<[1], [0], [0], [1], [0, 0, 1, 1], [], []>} : vector<4x128xf32>, vector<128x128xf32>, vector<4x128xf32> -> vector<4x128xf32>
    %226 = arith.addf %222, %225 : vector<4x128xf32>
    %c1_119 = arith.constant 1 : index
    %c0_120 = arith.constant 0 : index
    %c0_121 = arith.constant 0 : index
    %227 = vector.load %arg6[%c1_119, %c0_120, %c0_121] : memref<3x128x128xf32, #tpu.memory_space<vmem>>, vector<1x128x128xf32>
    %228 = vector.shape_cast %227 : vector<1x128x128xf32> to vector<128x128xf32>
    %cst_122 = arith.constant dense<0.000000e+00> : vector<4x128xf32>
    %229 = tpu.matmul %84, %228, %cst_122 {dimension_numbers = #tpu.dot_dimension_numbers<[1], [0], [0], [1], [0, 0, 1, 1], [], []>} : vector<4x128xf32>, vector<128x128xf32>, vector<4x128xf32> -> vector<4x128xf32>
    %230 = arith.addf %226, %229 : vector<4x128xf32>
    %c2_123 = arith.constant 2 : index
    %c0_124 = arith.constant 0 : index
    %c0_125 = arith.constant 0 : index
    %231 = vector.load %arg6[%c2_123, %c0_124, %c0_125] : memref<3x128x128xf32, #tpu.memory_space<vmem>>, vector<1x128x128xf32>
    %232 = vector.shape_cast %231 : vector<1x128x128xf32> to vector<128x128xf32>
    %cst_126 = arith.constant dense<0.000000e+00> : vector<4x128xf32>
    %233 = tpu.matmul %93, %232, %cst_126 {dimension_numbers = #tpu.dot_dimension_numbers<[1], [0], [0], [1], [0, 0, 1, 1], [], []>} : vector<4x128xf32>, vector<128x128xf32>, vector<4x128xf32> -> vector<4x128xf32>
    %234 = arith.addf %230, %233 : vector<4x128xf32>
    %235 = vector.broadcast %148 : vector<1x128xf32> to vector<4x128xf32>
    %236 = arith.addf %234, %235 : vector<4x128xf32>
    %cst_127 = arith.constant 0.000000e+00 : f32
    %237 = vector.broadcast %cst_127 : f32 to vector<4x128xf32>
    %238 = arith.cmpf oge, %236, %237 : vector<4x128xf32>
    %cst_128 = arith.constant 2.000000e-01 : f32
    %239 = vector.broadcast %cst_128 : f32 to vector<4x128xf32>
    %240 = arith.mulf %239, %236 : vector<4x128xf32>
    %241 = arith.select %238, %236, %240 : vector<4x128xi1>, vector<4x128xf32>
    %c3 = arith.constant 3 : index
    %c0_129 = arith.constant 0 : index
    %c0_130 = arith.constant 0 : index
    %242 = vector.load %arg8[%c3, %c0_129, %c0_130] : memref<7x128x128xf32, #tpu.memory_space<vmem>>, vector<1x128x128xf32>
    %243 = vector.shape_cast %242 : vector<1x128x128xf32> to vector<128x128xf32>
    %cst_131 = arith.constant dense<0.000000e+00> : vector<4x128xf32>
    %244 = tpu.matmul %241, %243, %cst_131 {dimension_numbers = #tpu.dot_dimension_numbers<[1], [0], [0], [1], [0, 0, 1, 1], [], []>} : vector<4x128xf32>, vector<128x128xf32>, vector<4x128xf32> -> vector<4x128xf32>
    %245 = arith.addf %221, %244 : vector<4x128xf32>
    %cst_132 = arith.constant 0.000000e+00 : f32
    %246 = vector.broadcast %cst_132 : f32 to vector<4x128xf32>
    %c0_133 = arith.constant 0 : index
    %c0_134 = arith.constant 0 : index
    %c0_135 = arith.constant 0 : index
    %247 = vector.load %arg6[%c0_133, %c0_134, %c0_135] : memref<3x128x128xf32, #tpu.memory_space<vmem>>, vector<1x128x128xf32>
    %248 = vector.shape_cast %247 : vector<1x128x128xf32> to vector<128x128xf32>
    %cst_136 = arith.constant dense<0.000000e+00> : vector<4x128xf32>
    %249 = tpu.matmul %93, %248, %cst_136 {dimension_numbers = #tpu.dot_dimension_numbers<[1], [0], [0], [1], [0, 0, 1, 1], [], []>} : vector<4x128xf32>, vector<128x128xf32>, vector<4x128xf32> -> vector<4x128xf32>
    %250 = arith.addf %246, %249 : vector<4x128xf32>
    %c1_137 = arith.constant 1 : index
    %c0_138 = arith.constant 0 : index
    %c0_139 = arith.constant 0 : index
    %251 = vector.load %arg6[%c1_137, %c0_138, %c0_139] : memref<3x128x128xf32, #tpu.memory_space<vmem>>, vector<1x128x128xf32>
    %252 = vector.shape_cast %251 : vector<1x128x128xf32> to vector<128x128xf32>
    %cst_140 = arith.constant dense<0.000000e+00> : vector<4x128xf32>
    %253 = tpu.matmul %102, %252, %cst_140 {dimension_numbers = #tpu.dot_dimension_numbers<[1], [0], [0], [1], [0, 0, 1, 1], [], []>} : vector<4x128xf32>, vector<128x128xf32>, vector<4x128xf32> -> vector<4x128xf32>
    %254 = arith.addf %250, %253 : vector<4x128xf32>
    %c2_141 = arith.constant 2 : index
    %c0_142 = arith.constant 0 : index
    %c0_143 = arith.constant 0 : index
    %255 = vector.load %arg6[%c2_141, %c0_142, %c0_143] : memref<3x128x128xf32, #tpu.memory_space<vmem>>, vector<1x128x128xf32>
    %256 = vector.shape_cast %255 : vector<1x128x128xf32> to vector<128x128xf32>
    %cst_144 = arith.constant dense<0.000000e+00> : vector<4x128xf32>
    %257 = tpu.matmul %111, %256, %cst_144 {dimension_numbers = #tpu.dot_dimension_numbers<[1], [0], [0], [1], [0, 0, 1, 1], [], []>} : vector<4x128xf32>, vector<128x128xf32>, vector<4x128xf32> -> vector<4x128xf32>
    %258 = arith.addf %254, %257 : vector<4x128xf32>
    %259 = vector.broadcast %148 : vector<1x128xf32> to vector<4x128xf32>
    %260 = arith.addf %258, %259 : vector<4x128xf32>
    %cst_145 = arith.constant 0.000000e+00 : f32
    %261 = vector.broadcast %cst_145 : f32 to vector<4x128xf32>
    %262 = arith.cmpf oge, %260, %261 : vector<4x128xf32>
    %cst_146 = arith.constant 2.000000e-01 : f32
    %263 = vector.broadcast %cst_146 : f32 to vector<4x128xf32>
    %264 = arith.mulf %263, %260 : vector<4x128xf32>
    %265 = arith.select %262, %260, %264 : vector<4x128xi1>, vector<4x128xf32>
    %c4 = arith.constant 4 : index
    %c0_147 = arith.constant 0 : index
    %c0_148 = arith.constant 0 : index
    %266 = vector.load %arg8[%c4, %c0_147, %c0_148] : memref<7x128x128xf32, #tpu.memory_space<vmem>>, vector<1x128x128xf32>
    %267 = vector.shape_cast %266 : vector<1x128x128xf32> to vector<128x128xf32>
    %cst_149 = arith.constant dense<0.000000e+00> : vector<4x128xf32>
    %268 = tpu.matmul %265, %267, %cst_149 {dimension_numbers = #tpu.dot_dimension_numbers<[1], [0], [0], [1], [0, 0, 1, 1], [], []>} : vector<4x128xf32>, vector<128x128xf32>, vector<4x128xf32> -> vector<4x128xf32>
    %269 = arith.addf %245, %268 : vector<4x128xf32>
    %cst_150 = arith.constant 0.000000e+00 : f32
    %270 = vector.broadcast %cst_150 : f32 to vector<4x128xf32>
    %c0_151 = arith.constant 0 : index
    %c0_152 = arith.constant 0 : index
    %c0_153 = arith.constant 0 : index
    %271 = vector.load %arg6[%c0_151, %c0_152, %c0_153] : memref<3x128x128xf32, #tpu.memory_space<vmem>>, vector<1x128x128xf32>
    %272 = vector.shape_cast %271 : vector<1x128x128xf32> to vector<128x128xf32>
    %cst_154 = arith.constant dense<0.000000e+00> : vector<4x128xf32>
    %273 = tpu.matmul %111, %272, %cst_154 {dimension_numbers = #tpu.dot_dimension_numbers<[1], [0], [0], [1], [0, 0, 1, 1], [], []>} : vector<4x128xf32>, vector<128x128xf32>, vector<4x128xf32> -> vector<4x128xf32>
    %274 = arith.addf %270, %273 : vector<4x128xf32>
    %c1_155 = arith.constant 1 : index
    %c0_156 = arith.constant 0 : index
    %c0_157 = arith.constant 0 : index
    %275 = vector.load %arg6[%c1_155, %c0_156, %c0_157] : memref<3x128x128xf32, #tpu.memory_space<vmem>>, vector<1x128x128xf32>
    %276 = vector.shape_cast %275 : vector<1x128x128xf32> to vector<128x128xf32>
    %cst_158 = arith.constant dense<0.000000e+00> : vector<4x128xf32>
    %277 = tpu.matmul %120, %276, %cst_158 {dimension_numbers = #tpu.dot_dimension_numbers<[1], [0], [0], [1], [0, 0, 1, 1], [], []>} : vector<4x128xf32>, vector<128x128xf32>, vector<4x128xf32> -> vector<4x128xf32>
    %278 = arith.addf %274, %277 : vector<4x128xf32>
    %c2_159 = arith.constant 2 : index
    %c0_160 = arith.constant 0 : index
    %c0_161 = arith.constant 0 : index
    %279 = vector.load %arg6[%c2_159, %c0_160, %c0_161] : memref<3x128x128xf32, #tpu.memory_space<vmem>>, vector<1x128x128xf32>
    %280 = vector.shape_cast %279 : vector<1x128x128xf32> to vector<128x128xf32>
    %cst_162 = arith.constant dense<0.000000e+00> : vector<4x128xf32>
    %281 = tpu.matmul %129, %280, %cst_162 {dimension_numbers = #tpu.dot_dimension_numbers<[1], [0], [0], [1], [0, 0, 1, 1], [], []>} : vector<4x128xf32>, vector<128x128xf32>, vector<4x128xf32> -> vector<4x128xf32>
    %282 = arith.addf %278, %281 : vector<4x128xf32>
    %283 = vector.broadcast %148 : vector<1x128xf32> to vector<4x128xf32>
    %284 = arith.addf %282, %283 : vector<4x128xf32>
    %cst_163 = arith.constant 0.000000e+00 : f32
    %285 = vector.broadcast %cst_163 : f32 to vector<4x128xf32>
    %286 = arith.cmpf oge, %284, %285 : vector<4x128xf32>
    %cst_164 = arith.constant 2.000000e-01 : f32
    %287 = vector.broadcast %cst_164 : f32 to vector<4x128xf32>
    %288 = arith.mulf %287, %284 : vector<4x128xf32>
    %289 = arith.select %286, %284, %288 : vector<4x128xi1>, vector<4x128xf32>
    %c5 = arith.constant 5 : index
    %c0_165 = arith.constant 0 : index
    %c0_166 = arith.constant 0 : index
    %290 = vector.load %arg8[%c5, %c0_165, %c0_166] : memref<7x128x128xf32, #tpu.memory_space<vmem>>, vector<1x128x128xf32>
    %291 = vector.shape_cast %290 : vector<1x128x128xf32> to vector<128x128xf32>
    %cst_167 = arith.constant dense<0.000000e+00> : vector<4x128xf32>
    %292 = tpu.matmul %289, %291, %cst_167 {dimension_numbers = #tpu.dot_dimension_numbers<[1], [0], [0], [1], [0, 0, 1, 1], [], []>} : vector<4x128xf32>, vector<128x128xf32>, vector<4x128xf32> -> vector<4x128xf32>
    %293 = arith.addf %269, %292 : vector<4x128xf32>
    %cst_168 = arith.constant 0.000000e+00 : f32
    %294 = vector.broadcast %cst_168 : f32 to vector<4x128xf32>
    %c0_169 = arith.constant 0 : index
    %c0_170 = arith.constant 0 : index
    %c0_171 = arith.constant 0 : index
    %295 = vector.load %arg6[%c0_169, %c0_170, %c0_171] : memref<3x128x128xf32, #tpu.memory_space<vmem>>, vector<1x128x128xf32>
    %296 = vector.shape_cast %295 : vector<1x128x128xf32> to vector<128x128xf32>
    %cst_172 = arith.constant dense<0.000000e+00> : vector<4x128xf32>
    %297 = tpu.matmul %129, %296, %cst_172 {dimension_numbers = #tpu.dot_dimension_numbers<[1], [0], [0], [1], [0, 0, 1, 1], [], []>} : vector<4x128xf32>, vector<128x128xf32>, vector<4x128xf32> -> vector<4x128xf32>
    %298 = arith.addf %294, %297 : vector<4x128xf32>
    %c1_173 = arith.constant 1 : index
    %c0_174 = arith.constant 0 : index
    %c0_175 = arith.constant 0 : index
    %299 = vector.load %arg6[%c1_173, %c0_174, %c0_175] : memref<3x128x128xf32, #tpu.memory_space<vmem>>, vector<1x128x128xf32>
    %300 = vector.shape_cast %299 : vector<1x128x128xf32> to vector<128x128xf32>
    %cst_176 = arith.constant dense<0.000000e+00> : vector<4x128xf32>
    %301 = tpu.matmul %138, %300, %cst_176 {dimension_numbers = #tpu.dot_dimension_numbers<[1], [0], [0], [1], [0, 0, 1, 1], [], []>} : vector<4x128xf32>, vector<128x128xf32>, vector<4x128xf32> -> vector<4x128xf32>
    %302 = arith.addf %298, %301 : vector<4x128xf32>
    %c2_177 = arith.constant 2 : index
    %c0_178 = arith.constant 0 : index
    %c0_179 = arith.constant 0 : index
    %303 = vector.load %arg6[%c2_177, %c0_178, %c0_179] : memref<3x128x128xf32, #tpu.memory_space<vmem>>, vector<1x128x128xf32>
    %304 = vector.shape_cast %303 : vector<1x128x128xf32> to vector<128x128xf32>
    %cst_180 = arith.constant dense<0.000000e+00> : vector<4x128xf32>
    %305 = tpu.matmul %147, %304, %cst_180 {dimension_numbers = #tpu.dot_dimension_numbers<[1], [0], [0], [1], [0, 0, 1, 1], [], []>} : vector<4x128xf32>, vector<128x128xf32>, vector<4x128xf32> -> vector<4x128xf32>
    %306 = arith.addf %302, %305 : vector<4x128xf32>
    %307 = vector.broadcast %148 : vector<1x128xf32> to vector<4x128xf32>
    %308 = arith.addf %306, %307 : vector<4x128xf32>
    %cst_181 = arith.constant 0.000000e+00 : f32
    %309 = vector.broadcast %cst_181 : f32 to vector<4x128xf32>
    %310 = arith.cmpf oge, %308, %309 : vector<4x128xf32>
    %cst_182 = arith.constant 2.000000e-01 : f32
    %311 = vector.broadcast %cst_182 : f32 to vector<4x128xf32>
    %312 = arith.mulf %311, %308 : vector<4x128xf32>
    %313 = arith.select %310, %308, %312 : vector<4x128xi1>, vector<4x128xf32>
    %c6 = arith.constant 6 : index
    %c0_183 = arith.constant 0 : index
    %c0_184 = arith.constant 0 : index
    %314 = vector.load %arg8[%c6, %c0_183, %c0_184] : memref<7x128x128xf32, #tpu.memory_space<vmem>>, vector<1x128x128xf32>
    %315 = vector.shape_cast %314 : vector<1x128x128xf32> to vector<128x128xf32>
    %cst_185 = arith.constant dense<0.000000e+00> : vector<4x128xf32>
    %316 = tpu.matmul %313, %315, %cst_185 {dimension_numbers = #tpu.dot_dimension_numbers<[1], [0], [0], [1], [0, 0, 1, 1], [], []>} : vector<4x128xf32>, vector<128x128xf32>, vector<4x128xf32> -> vector<4x128xf32>
    %317 = arith.addf %293, %316 : vector<4x128xf32>
    %c0_186 = arith.constant 0 : index
    %c0_187 = arith.constant 0 : index
    %318 = vector.load %arg9[%c0_186, %c0_187] : memref<1x128xf32, #tpu.memory_space<vmem>>, vector<1x128xf32>
    %319 = vector.broadcast %318 : vector<1x128xf32> to vector<4x128xf32>
    %320 = arith.addf %317, %319 : vector<4x128xf32>
    %cst_188 = arith.constant 0.000000e+00 : f32
    %321 = vector.broadcast %cst_188 : f32 to vector<4x128xf32>
    %322 = arith.subf %321, %320 : vector<4x128xf32>
    %323 = math.exp %322 : vector<4x128xf32>
    %cst_189 = arith.constant 1.000000e+00 : f32
    %324 = vector.broadcast %cst_189 : f32 to vector<4x128xf32>
    %325 = arith.addf %324, %323 : vector<4x128xf32>
    %cst_190 = arith.constant 1.000000e+00 : f32
    %326 = vector.broadcast %cst_190 : f32 to vector<4x128xf32>
    %327 = arith.divf %326, %325 : vector<4x128xf32>
    %c0_191 = arith.constant 0 : index
    %c0_192 = arith.constant 0 : index
    %328 = vector.load %arg10[%c0_191, %c0_192] : memref<4x128xf32, #tpu.memory_space<vmem>>, vector<4x128xf32>
    tpu.vector_store %arg10[%c0_191, %c0_192], %327 {strides = array<i32>} : memref<4x128xf32, #tpu.memory_space<vmem>>, vector<4x128xf32>,
    return
  }
  func.func @transform_0(%arg0: i32) -> (i32, i32) {
    %c0_i32 = arith.constant 0 : i32
    %c0_i32_0 = arith.constant 0 : i32
    return %arg0, %c0_i32 : i32, i32
  }
  func.func @transform_1(%arg0: i32) -> (i32, i32) {
    %c0_i32 = arith.constant 0 : i32
    %c0_i32_0 = arith.constant 0 : i32
    %c0_i32_1 = arith.constant 0 : i32
    return %c0_i32, %c0_i32_0 : i32, i32
  }
  func.func @transform_2(%arg0: i32) -> (i32, i32) {
    %c0_i32 = arith.constant 0 : i32
    %c0_i32_0 = arith.constant 0 : i32
    %c0_i32_1 = arith.constant 0 : i32
    return %c0_i32, %c0_i32_0 : i32, i32
  }
  func.func @transform_3(%arg0: i32) -> (i32, i32) {
    %c0_i32 = arith.constant 0 : i32
    %c0_i32_0 = arith.constant 0 : i32
    %c0_i32_1 = arith.constant 0 : i32
    return %c0_i32, %c0_i32_0 : i32, i32
  }
  func.func @transform_4(%arg0: i32) -> (i32, i32) {
    %c0_i32 = arith.constant 0 : i32
    %c0_i32_0 = arith.constant 0 : i32
    %c0_i32_1 = arith.constant 0 : i32
    return %c0_i32, %c0_i32_0 : i32, i32
  }
  func.func @transform_5(%arg0: i32) -> (i32, i32, i32) {
    %c0_i32 = arith.constant 0 : i32
    %c0_i32_0 = arith.constant 0 : i32
    %c0_i32_1 = arith.constant 0 : i32
    %c0_i32_2 = arith.constant 0 : i32
    return %c0_i32, %c0_i32_0, %c0_i32_1 : i32, i32, i32
  }
  func.func @transform_6(%arg0: i32) -> (i32, i32) {
    %c0_i32 = arith.constant 0 : i32
    %c0_i32_0 = arith.constant 0 : i32
    %c0_i32_1 = arith.constant 0 : i32
    return %c0_i32, %c0_i32_0 : i32, i32
  }
  func.func @transform_7(%arg0: i32) -> (i32, i32, i32) {
    %c0_i32 = arith.constant 0 : i32
    %c0_i32_0 = arith.constant 0 : i32
    %c0_i32_1 = arith.constant 0 : i32
    %c0_i32_2 = arith.constant 0 : i32
    return %c0_i32, %c0_i32_0, %c0_i32_1 : i32, i32, i32
  }
  func.func @transform_8(%arg0: i32) -> (i32, i32) {
    %c0_i32 = arith.constant 0 : i32
    %c0_i32_0 = arith.constant 0 : i32
    %c0_i32_1 = arith.constant 0 : i32
    return %c0_i32, %c0_i32_0 : i32, i32
  }
  func.func @transform_9(%arg0: i32) -> (i32, i32) {
    %c0_i32 = arith.constant 0 : i32
    %c0_i32_0 = arith.constant 0 : i32
    return %arg0, %c0_i32 : i32, i32
  }
}

</mosaic_0001>

<llo_original>
// kernel: conv_discriminator_forward.1
$region0: #{conv_discriminator_forward.1}
  #allocation0 [shape = 'u32[]', space=smem, size = 0x4, offset = 0x4, fixed_abs, tag = 'smem constant byte address 0x4 - core index']
  #allocation1 [shape = 'u32[144,128]{1,0:T(1,128)}', space=vmem, size = 0x12000, scoped, tag = 'internal scratch']
  %s0 = inlined_call_operand.vmem [shape: bf16[4,64], index: 0, kind: input, shape index: {}]
  %s1 = inlined_call_operand.hbm [shape: bf16[64,1920], index: 1, kind: input, shape index: {}]
  %s2 = inlined_call_operand.hbm [shape: f32[1,1920], index: 2, kind: input, shape index: {}]
  %s3 = inlined_call_operand.hbm [shape: f32[128,128], index: 3, kind: input, shape index: {}]
  %s4 = inlined_call_operand.vmem [shape: f32[1,128], index: 4, kind: input, shape index: {}]
  %s5 = inlined_call_operand.hbm [shape: f32[3,128,128], index: 5, kind: input, shape index: {}]
  %s6 = inlined_call_operand.vmem [shape: f32[1,128], index: 6, kind: input, shape index: {}]
  %s7 = inlined_call_operand.hbm [shape: f32[7,128,128], index: 7, kind: input, shape index: {}]
  %s8 = inlined_call_operand.vmem [shape: f32[1,128], index: 8, kind: input, shape index: {}]
  %s9 = inlined_call_operand.vmem [shape: f32[4,128], index: 9, kind: output, shape index: {}]
  %s10 = sld [smem:[#allocation0]]
  $region66: #{conv_discriminator_forward.1} parent=0
    _
  %s12 = ssub.s32 1, %s10
  %s13 = scalar_select 0, %s12, %s10
  $region1: #{conv_discriminator_forward.1} parent=0
    #allocation2 [shape = 'u8[245760]{0}', space=vmem, size = 0x3c000, scoped, tag = 'input window, operand 1, single buffered']
    #allocation3 [shape = 's32[1]{0}', space=sflag, size = 0x4, scoped, tag = 'scoped memory for conv_discriminator_forward.1']
    #allocation4 [shape = 'u8[7680]{0}', space=vmem, size = 0x2000, scoped, tag = 'input window, operand 2, single buffered']
    #allocation5 [shape = 's32[1]{0}', space=sflag, size = 0x4, scoped, tag = 'scoped memory for conv_discriminator_forward.1']
    #allocation6 [shape = 'u8[65536]{0}', space=vmem, size = 0x10000, scoped, tag = 'input window, operand 3, single buffered']
    #allocation7 [shape = 'u8[196608]{0}', space=vmem, size = 0x30000, scoped, tag = 'input window, operand 5, single buffered']
    #allocation8 [shape = 's32[1]{0}', space=sflag, size = 0x4, scoped, tag = 'scoped memory for conv_discriminator_forward.1']
    #allocation9 [shape = 'u8[458752]{0}', space=vmem, size = 0x70000, scoped, tag = 'input window, operand 7, single buffered']
    %14 = vsyncpa [#allocation3], 0
    %15 = vsyncpa [#allocation5], 0
    %16 = vsyncpa [#allocation8], 0
    // Predicated region
    $region2: #{conv_discriminator_forward.1} parent=1 // pred_check
      _
    $region3: #{conv_discriminator_forward.1} parent=1 // pred_check_branch
      %18 = sbr.rel (0) target = $region5
    $region4: #{conv_discriminator_forward.1} parent=1 // pred_region
      _
    $region5: #{conv_discriminator_forward.1} parent=1 // pred_fallthru
      _
    // Predicated region
    $region6: #{conv_discriminator_forward.1} parent=1 // pred_check
      _
    $region7: #{conv_discriminator_forward.1} parent=1 // pred_check_branch
      %20 = sbr.rel (0) target = $region9
    $region8: #{conv_discriminator_forward.1} parent=1 // pred_region
      %s22 = ssub.s32 7680, 7680
      %23 = vsyncadd [#allocation3], %s22
      %s24 = sshll.u32 [#allocation2], 4
      %s25 = int_to_ptr.vmem [resolvable:$true] %s24
      %30 = dma.hbm_to_vmem [thread:$0]  %s1, 7680, %s25, [#allocation3], 960, 960, 60
    $region9: #{conv_discriminator_forward.1} parent=1 // pred_fallthru
      _
    // Predicated region
    $region10: #{conv_discriminator_forward.1} parent=1 // pred_check
      _
    $region11: #{conv_discriminator_forward.1} parent=1 // pred_check_branch
      %32 = sbr.rel (0) target = $region13
    $region12: #{conv_discriminator_forward.1} parent=1 // pred_region
      %s34 = ssub.s32 240, 240
      %35 = vsyncadd [#allocation5], %s34
      %s37 = sshll.u32 [#allocation4], 4
      %s38 = int_to_ptr.vmem [resolvable:$true] %s37
      %40 = dma.hbm_to_vmem [thread:$0]  %s2, 240, %s38, [#allocation5]
    $region13: #{conv_discriminator_forward.1} parent=1 // pred_fallthru
      _
    // Predicated region
    $region14: #{conv_discriminator_forward.1} parent=1 // pred_check
      _
    $region15: #{conv_discriminator_forward.1} parent=1 // pred_check_branch
      %42 = sbr.rel (0) target = $region17
    $region16: #{conv_discriminator_forward.1} parent=1 // pred_region
      %s44 = ssub.s32 2048, 2048
      %45 = vsyncadd [#allocation5], %s44
      %s46 = sshll.u32 [#allocation6], 4
      %s47 = int_to_ptr.vmem [resolvable:$true] %s46
      %52 = dma.hbm_to_vmem [thread:$0]  %s3, 2048, %s47, [#allocation5], 128, 128, 8
    $region17: #{conv_discriminator_forward.1} parent=1 // pred_fallthru
      _
    // Predicated region
    $region18: #{conv_discriminator_forward.1} parent=1 // pred_check
      _
    $region19: #{conv_discriminator_forward.1} parent=1 // pred_check_branch
      %54 = sbr.rel (0) target = $region21
    $region20: #{conv_discriminator_forward.1} parent=1 // pred_region
      _
    $region21: #{conv_discriminator_forward.1} parent=1 // pred_fallthru
      _
    // Predicated region
    $region22: #{conv_discriminator_forward.1} parent=1 // pred_check
      _
    $region23: #{conv_discriminator_forward.1} parent=1 // pred_check_branch
      %56 = sbr.rel (0) target = $region25
    $region24: #{conv_discriminator_forward.1} parent=1 // pred_region
      %s58 = ssub.s32 6144, 6144
      %59 = vsyncadd [#allocation8], %s58
      %s60 = sshll.u32 [#allocation7], 4
      %s61 = int_to_ptr.vmem [resolvable:$true] %s60
      %66 = dma.hbm_to_vmem [thread:$0]  %s5, 6144, %s61, [#allocation8], 128, 128, 8
    $region25: #{conv_discriminator_forward.1} parent=1 // pred_fallthru
      _
    // Predicated region
    $region26: #{conv_discriminator_forward.1} parent=1 // pred_check
      _
    $region27: #{conv_discriminator_forward.1} parent=1 // pred_check_branch
      %68 = sbr.rel (0) target = $region29
    $region28: #{conv_discriminator_forward.1} parent=1 // pred_region
      _
    $region29: #{conv_discriminator_forward.1} parent=1 // pred_fallthru
      _
    // Predicated region
    $region30: #{conv_discriminator_forward.1} parent=1 // pred_check
      _
    $region31: #{conv_discriminator_forward.1} parent=1 // pred_check_branch
      %70 = sbr.rel (0) target = $region33
    $region32: #{conv_discriminator_forward.1} parent=1 // pred_region
      %s72 = ssub.s32 14336, 14336
      %73 = vsyncadd [#allocation8], %s72
      %s74 = sshll.u32 [#allocation9], 4
      %s75 = int_to_ptr.vmem [resolvable:$true] %s74
      %80 = dma.hbm_to_vmem [thread:$0]  %s7, 14336, %s75, [#allocation8], 128, 128, 8
    $region33: #{conv_discriminator_forward.1} parent=1 // pred_fallthru
      _
    // Predicated region
    $region34: #{conv_discriminator_forward.1} parent=1 // pred_check
      _
    $region35: #{conv_discriminator_forward.1} parent=1 // pred_check_branch
      %82 = sbr.rel (0) target = $region37
    $region36: #{conv_discriminator_forward.1} parent=1 // pred_region
      _
    $region37: #{conv_discriminator_forward.1} parent=1 // pred_fallthru
      _
    // Predicated region
    $region38: #{conv_discriminator_forward.1} parent=1 // pred_check
      _
    $region39: #{conv_discriminator_forward.1} parent=1 // pred_check_branch
      %84 = sbr.rel (0) target = $region41
    $region40: #{conv_discriminator_forward.1} parent=1 // pred_region
      %85 = dma.done [#allocation3], 7680
    $region41: #{conv_discriminator_forward.1} parent=1 // pred_fallthru
      _
    // Predicated region
    $region42: #{conv_discriminator_forward.1} parent=1 // pred_check
      _
    $region43: #{conv_discriminator_forward.1} parent=1 // pred_check_branch
      %87 = sbr.rel (0) target = $region45
    $region44: #{conv_discriminator_forward.1} parent=1 // pred_region
      %88 = dma.done [#allocation5], 240
    $region45: #{conv_discriminator_forward.1} parent=1 // pred_fallthru
      _
    // Predicated region
    $region46: #{conv_discriminator_forward.1} parent=1 // pred_check
      _
    $region47: #{conv_discriminator_forward.1} parent=1 // pred_check_branch
      %90 = sbr.rel (0) target = $region49
    $region48: #{conv_discriminator_forward.1} parent=1 // pred_region
      %91 = dma.done [#allocation5], 2048
    $region49: #{conv_discriminator_forward.1} parent=1 // pred_fallthru
      _
    // Predicated region
    $region50: #{conv_discriminator_forward.1} parent=1 // pred_check
      _
    $region51: #{conv_discriminator_forward.1} parent=1 // pred_check_branch
      %93 = sbr.rel (0) target = $region53
    $region52: #{conv_discriminator_forward.1} parent=1 // pred_region
      %94 = dma.done [#allocation8], 6144
    $region53: #{conv_discriminator_forward.1} parent=1 // pred_fallthru
      _
    // Predicated region
    $region54: #{conv_discriminator_forward.1} parent=1 // pred_check
      _
    $region55: #{conv_discriminator_forward.1} parent=1 // pred_check_branch
      %96 = sbr.rel (0) target = $region57
    $region56: #{conv_discriminator_forward.1} parent=1 // pred_region
      %97 = dma.done [#allocation8], 14336
    $region57: #{conv_discriminator_forward.1} parent=1 // pred_fallthru
      _
    %v99 = vld [vmem:[%s0] sm:$0x3]
    %v100 = vld [vmem:[#allocation2] sm:$0xff]
    %v101 = vld [vmem:[#allocation2 + $0x8] sm:$0xff]
    %v102 = vld [vmem:[#allocation2 + $0x10] sm:$0xff]
    %v103 = vld [vmem:[#allocation2 + $0x18] sm:$0xff]
    %v104 = vld [vmem:[#allocation2 + $0x20] sm:$0xff]
    %v105 = vld [vmem:[#allocation2 + $0x28] sm:$0xff]
    %v106 = vld [vmem:[#allocation2 + $0x30] sm:$0xff]
    %v107 = vld [vmem:[#allocation2 + $0x38] sm:$0xf]
    %v108 = vld [vmem:[#allocation2 + $0x3c] sm:$0xff]
    %v109 = vld [vmem:[#allocation2 + $0x44] sm:$0xff]
    %v110 = vld [vmem:[#allocation2 + $0x4c] sm:$0xff]
    %v111 = vld [vmem:[#allocation2 + $0x54] sm:$0xff]
    %v112 = vld [vmem:[#allocation2 + $0x5c] sm:$0xff]
    %v113 = vld [vmem:[#allocation2 + $0x64] sm:$0xff]
    %v114 = vld [vmem:[#allocation2 + $0x6c] sm:$0xff]
    %v115 = vld [vmem:[#allocation2 + $0x74] sm:$0xf]
    %v116 = vld [vmem:[#allocation2 + $0x78] sm:$0xff]
    %v117 = vld [vmem:[#allocation2 + $0x80] sm:$0xff]
    %v118 = vld [vmem:[#allocation2 + $0x88] sm:$0xff]
    %v119 = vld [vmem:[#allocation2 + $0x90] sm:$0xff]
    %v120 = vld [vmem:[#allocation2 + $0x98] sm:$0xff]
    %v121 = vld [vmem:[#allocation2 + $0xa0] sm:$0xff]
    %v122 = vld [vmem:[#allocation2 + $0xa8] sm:$0xff]
    %v123 = vld [vmem:[#allocation2 + $0xb0] sm:$0xf]
    %v124 = vld [vmem:[#allocation2 + $0xb4] sm:$0xff]
    %v125 = vld [vmem:[#allocation2 + $0xbc] sm:$0xff]
    %v126 = vld [vmem:[#allocation2 + $0xc4] sm:$0xff]
    %v127 = vld [vmem:[#allocation2 + $0xcc] sm:$0xff]
    %v128 = vld [vmem:[#allocation2 + $0xd4] sm:$0xff]
    %v129 = vld [vmem:[#allocation2 + $0xdc] sm:$0xff]
    %v130 = vld [vmem:[#allocation2 + $0xe4] sm:$0xff]
    %v131 = vld [vmem:[#allocation2 + $0xec] sm:$0xf]
    %v132 = vld [vmem:[#allocation2 + $0xf0] sm:$0xff]
    %v133 = vld [vmem:[#allocation2 + $0xf8] sm:$0xff]
    %v134 = vld [vmem:[#allocation2 + $0x100] sm:$0xff]
    %v135 = vld [vmem:[#allocation2 + $0x108] sm:$0xff]
    %v136 = vld [vmem:[#allocation2 + $0x110] sm:$0xff]
    %v137 = vld [vmem:[#allocation2 + $0x118] sm:$0xff]
    %v138 = vld [vmem:[#allocation2 + $0x120] sm:$0xff]
    %v139 = vld [vmem:[#allocation2 + $0x128] sm:$0xf]
    %v140 = vld [vmem:[#allocation2 + $0x12c] sm:$0xff]
    %v141 = vld [vmem:[#allocation2 + $0x134] sm:$0xff]
    %v142 = vld [vmem:[#allocation2 + $0x13c] sm:$0xff]
    %v143 = vld [vmem:[#allocation2 + $0x144] sm:$0xff]
    %v144 = vld [vmem:[#allocation2 + $0x14c] sm:$0xff]
    %v145 = vld [vmem:[#allocation2 + $0x154] sm:$0xff]
    %v146 = vld [vmem:[#allocation2 + $0x15c] sm:$0xff]
    %v147 = vld [vmem:[#allocation2 + $0x164] sm:$0xf]
    %v148 = vld [vmem:[#allocation2 + $0x168] sm:$0xff]
    %v149 = vld [vmem:[#allocation2 + $0x170] sm:$0xff]
    %v150 = vld [vmem:[#allocation2 + $0x178] sm:$0xff]
    %v151 = vld [vmem:[#allocation2 + $0x180] sm:$0xff]
    %v152 = vld [vmem:[#allocation2 + $0x188] sm:$0xff]
    %v153 = vld [vmem:[#allocation2 + $0x190] sm:$0xff]
    %v154 = vld [vmem:[#allocation2 + $0x198] sm:$0xff]
    %v155 = vld [vmem:[#allocation2 + $0x1a0] sm:$0xf]
    %v156 = vld [vmem:[#allocation2 + $0x1a4] sm:$0xff]
    %v157 = vld [vmem:[#allocation2 + $0x1ac] sm:$0xff]
    %v158 = vld [vmem:[#allocation2 + $0x1b4] sm:$0xff]
    %v159 = vld [vmem:[#allocation2 + $0x1bc] sm:$0xff]
    %v160 = vld [vmem:[#allocation2 + $0x1c4] sm:$0xff]
    %v161 = vld [vmem:[#allocation2 + $0x1cc] sm:$0xff]
    %v162 = vld [vmem:[#allocation2 + $0x1d4] sm:$0xff]
    %v163 = vld [vmem:[#allocation2 + $0x1dc] sm:$0xf]
    %v164 = vld [vmem:[#allocation4] sm:$0xff]
    %v165 = vld [vmem:[#allocation4 + $0x8] sm:$0xff]
    %v168 = vlaneseq
    %v169 = vshrl.u32 %v168, 7
    %v170 = vsub.s32 0, %v169
    %v171 = vrot.slane %v164, %v170
    %v172 = vlaneseq
    %v173 = vshrl.u32 %v172, 7
    %v174 = vsub.s32 1, %v173
    %v175 = vrot.slane %v164, %v174
    %v176 = vlaneseq
    %v177 = vshrl.u32 %v176, 7
    %v178 = vsub.s32 2, %v177
    %v179 = vrot.slane %v164, %v178
    %v180 = vlaneseq
    %v181 = vshrl.u32 %v180, 7
    %v182 = vsub.s32 3, %v181
    %v183 = vrot.slane %v164, %v182
    %v184 = vlaneseq
    %v185 = vshrl.u32 %v184, 7
    %v186 = vsub.s32 4, %v185
    %v187 = vrot.slane %v164, %v186
    %v188 = vlaneseq
    %v189 = vshrl.u32 %v188, 7
    %v190 = vsub.s32 5, %v189
    %v191 = vrot.slane %v164, %v190
    %v192 = vlaneseq
    %v193 = vshrl.u32 %v192, 7
    %v194 = vsub.s32 6, %v193
    %v195 = vrot.slane %v164, %v194
    %v196 = vlaneseq
    %v197 = vshrl.u32 %v196, 7
    %v198 = vsub.s32 7, %v197
    %v199 = vrot.slane %v164, %v198
    %v200 = vlaneseq
    %v201 = vshrl.u32 %v200, 7
    %v202 = vsub.s32 0, %v201
    %v203 = vrot.slane %v165, %v202
    %v204 = vlaneseq
    %v205 = vshrl.u32 %v204, 7
    %v206 = vsub.s32 1, %v205
    %v207 = vrot.slane %v165, %v206
    %v208 = vlaneseq
    %v209 = vshrl.u32 %v208, 7
    %v210 = vsub.s32 2, %v209
    %v211 = vrot.slane %v165, %v210
    %v212 = vlaneseq
    %v213 = vshrl.u32 %v212, 7
    %v214 = vsub.s32 3, %v213
    %v215 = vrot.slane %v165, %v214
    %v216 = vlaneseq
    %v217 = vshrl.u32 %v216, 7
    %v218 = vsub.s32 4, %v217
    %v219 = vrot.slane %v165, %v218
    %v220 = vlaneseq
    %v221 = vshrl.u32 %v220, 7
    %v222 = vsub.s32 5, %v221
    %v223 = vrot.slane %v165, %v222
    %v224 = vlaneseq
    %v225 = vshrl.u32 %v224, 7
    %v226 = vsub.s32 6, %v225
    %v227 = vrot.slane %v165, %v226
    %v307 = vunpack.c.l.b16 %v100
    %v308 = vunpack.c.h.b16 %v100
    %v309 = vunpack.c.l.b16 %v101
    %v310 = vunpack.c.h.b16 %v101
    %v311 = vunpack.c.l.b16 %v102
    %v312 = vunpack.c.h.b16 %v102
    %v313 = vunpack.c.l.b16 %v103
    %v314 = vunpack.c.h.b16 %v103
    %v315 = vunpack.c.l.b16 %v104
    %v316 = vunpack.c.h.b16 %v104
    %v317 = vunpack.c.l.b16 %v105
    %v318 = vunpack.c.h.b16 %v105
    %v319 = vunpack.c.l.b16 %v106
    %v320 = vunpack.c.h.b16 %v106
    %v321 = vunpack.c.l.b16 %v107
    %v322 = vunpack.c.l.b16 %v108
    %v323 = vunpack.c.h.b16 %v108
    %v324 = vunpack.c.l.b16 %v109
    %v325 = vunpack.c.h.b16 %v109
    %v326 = vunpack.c.l.b16 %v110
    %v327 = vunpack.c.h.b16 %v110
    %v328 = vunpack.c.l.b16 %v111
    %v329 = vunpack.c.h.b16 %v111
    %v330 = vunpack.c.l.b16 %v112
    %v331 = vunpack.c.h.b16 %v112
    %v332 = vunpack.c.l.b16 %v113
    %v333 = vunpack.c.h.b16 %v113
    %v334 = vunpack.c.l.b16 %v114
    %v335 = vunpack.c.h.b16 %v114
    %v336 = vunpack.c.l.b16 %v115
    %v337 = vunpack.c.l.b16 %v116
    %v338 = vunpack.c.h.b16 %v116
    %v339 = vunpack.c.l.b16 %v117
    %v340 = vunpack.c.h.b16 %v117
    %v341 = vunpack.c.l.b16 %v118
    %v342 = vunpack.c.h.b16 %v118
    %v343 = vunpack.c.l.b16 %v119
    %v344 = vunpack.c.h.b16 %v119
    %v345 = vunpack.c.l.b16 %v120
    %v346 = vunpack.c.h.b16 %v120
    %v347 = vunpack.c.l.b16 %v121
    %v348 = vunpack.c.h.b16 %v121
    %v349 = vunpack.c.l.b16 %v122
    %v350 = vunpack.c.h.b16 %v122
    %v351 = vunpack.c.l.b16 %v123
    %v352 = vunpack.c.l.b16 %v124
    %v353 = vunpack.c.h.b16 %v124
    %v354 = vunpack.c.l.b16 %v125
    %v355 = vunpack.c.h.b16 %v125
    %v356 = vunpack.c.l.b16 %v126
    %v357 = vunpack.c.h.b16 %v126
    %v358 = vunpack.c.l.b16 %v127
    %v359 = vunpack.c.h.b16 %v127
    %v360 = vunpack.c.l.b16 %v128
    %v361 = vunpack.c.h.b16 %v128
    %v362 = vunpack.c.l.b16 %v129
    %v363 = vunpack.c.h.b16 %v129
    %v364 = vunpack.c.l.b16 %v130
    %v365 = vunpack.c.h.b16 %v130
    %v366 = vunpack.c.l.b16 %v131
    %v367 = vunpack.c.l.b16 %v132
    %v368 = vunpack.c.h.b16 %v132
    %v369 = vunpack.c.l.b16 %v133
    %v370 = vunpack.c.h.b16 %v133
    %v371 = vunpack.c.l.b16 %v134
    %v372 = vunpack.c.h.b16 %v134
    %v373 = vunpack.c.l.b16 %v135
    %v374 = vunpack.c.h.b16 %v135
    %v375 = vunpack.c.l.b16 %v136
    %v376 = vunpack.c.h.b16 %v136
    %v377 = vunpack.c.l.b16 %v137
    %v378 = vunpack.c.h.b16 %v137
    %v379 = vunpack.c.l.b16 %v138
    %v380 = vunpack.c.h.b16 %v138
    %v381 = vunpack.c.l.b16 %v139
    %v382 = vunpack.c.l.b16 %v140
    %v383 = vunpack.c.h.b16 %v140
    %v384 = vunpack.c.l.b16 %v141
    %v385 = vunpack.c.h.b16 %v141
    %v386 = vunpack.c.l.b16 %v142
    %v387 = vunpack.c.h.b16 %v142
    %v388 = vunpack.c.l.b16 %v143
    %v389 = vunpack.c.h.b16 %v143
    %v390 = vunpack.c.l.b16 %v144
    %v391 = vunpack.c.h.b16 %v144
    %v392 = vunpack.c.l.b16 %v145
    %v393 = vunpack.c.h.b16 %v145
    %v394 = vunpack.c.l.b16 %v146
    %v395 = vunpack.c.h.b16 %v146
    %v396 = vunpack.c.l.b16 %v147
    %v397 = vunpack.c.l.b16 %v148
    %v398 = vunpack.c.h.b16 %v148
    %v399 = vunpack.c.l.b16 %v149
    %v400 = vunpack.c.h.b16 %v149
    %v401 = vunpack.c.l.b16 %v150
    %v402 = vunpack.c.h.b16 %v150
    %v403 = vunpack.c.l.b16 %v151
    %v404 = vunpack.c.h.b16 %v151
    %v405 = vunpack.c.l.b16 %v152
    %v406 = vunpack.c.h.b16 %v152
    %v407 = vunpack.c.l.b16 %v153
    %v408 = vunpack.c.h.b16 %v153
    %v409 = vunpack.c.l.b16 %v154
    %v410 = vunpack.c.h.b16 %v154
    %v411 = vunpack.c.l.b16 %v155
    %v412 = vunpack.c.l.b16 %v156
    %v413 = vunpack.c.h.b16 %v156
    %v414 = vunpack.c.l.b16 %v157
    %v415 = vunpack.c.h.b16 %v157
    %v416 = vunpack.c.l.b16 %v158
    %v417 = vunpack.c.h.b16 %v158
    %v418 = vunpack.c.l.b16 %v159
    %v419 = vunpack.c.h.b16 %v159
    %v420 = vunpack.c.l.b16 %v160
    %v421 = vunpack.c.h.b16 %v160
    %v422 = vunpack.c.l.b16 %v161
    %v423 = vunpack.c.h.b16 %v161
    %v424 = vunpack.c.l.b16 %v162
    %v425 = vunpack.c.h.b16 %v162
    %v426 = vunpack.c.l.b16 %v163
    %v427 = vpack.c.b16 %v322, %v307
    %v428 = vpack.c.b16 %v323, %v308
    %v429 = vpack.c.b16 %v324, %v309
    %v430 = vpack.c.b16 %v325, %v310
    %v431 = vpack.c.b16 %v326, %v311
    %v432 = vpack.c.b16 %v327, %v312
    %v433 = vpack.c.b16 %v328, %v313
    %v434 = vpack.c.b16 %v329, %v314
    %v435 = vpack.c.b16 %v330, %v315
    %v436 = vpack.c.b16 %v331, %v316
    %v437 = vpack.c.b16 %v332, %v317
    %v438 = vpack.c.b16 %v333, %v318
    %v439 = vpack.c.b16 %v334, %v319
    %v440 = vpack.c.b16 %v335, %v320
    %v441 = vpack.c.b16 %v336, %v321
    %v442 = vpack.c.b16 %v352, %v337
    %v443 = vpack.c.b16 %v353, %v338
    %v444 = vpack.c.b16 %v354, %v339
    %v445 = vpack.c.b16 %v355, %v340
    %v446 = vpack.c.b16 %v356, %v341
    %v447 = vpack.c.b16 %v357, %v342
    %v448 = vpack.c.b16 %v358, %v343
    %v449 = vpack.c.b16 %v359, %v344
    %v450 = vpack.c.b16 %v360, %v345
    %v451 = vpack.c.b16 %v361, %v346
    %v452 = vpack.c.b16 %v362, %v347
    %v453 = vpack.c.b16 %v363, %v348
    %v454 = vpack.c.b16 %v364, %v349
    %v455 = vpack.c.b16 %v365, %v350
    %v456 = vpack.c.b16 %v366, %v351
    %v457 = vpack.c.b16 %v382, %v367
    %v458 = vpack.c.b16 %v383, %v368
    %v459 = vpack.c.b16 %v384, %v369
    %v460 = vpack.c.b16 %v385, %v370
    %v461 = vpack.c.b16 %v386, %v371
    %v462 = vpack.c.b16 %v387, %v372
    %v463 = vpack.c.b16 %v388, %v373
    %v464 = vpack.c.b16 %v389, %v374
    %v465 = vpack.c.b16 %v390, %v375
    %v466 = vpack.c.b16 %v391, %v376
    %v467 = vpack.c.b16 %v392, %v377
    %v468 = vpack.c.b16 %v393, %v378
    %v469 = vpack.c.b16 %v394, %v379
    %v470 = vpack.c.b16 %v395, %v380
    %v471 = vpack.c.b16 %v396, %v381
    %v472 = vpack.c.b16 %v412, %v397
    %v473 = vpack.c.b16 %v413, %v398
    %v474 = vpack.c.b16 %v414, %v399
    %v475 = vpack.c.b16 %v415, %v400
    %v476 = vpack.c.b16 %v416, %v401
    %v477 = vpack.c.b16 %v417, %v402
    %v478 = vpack.c.b16 %v418, %v403
    %v479 = vpack.c.b16 %v419, %v404
    %v480 = vpack.c.b16 %v420, %v405
    %v481 = vpack.c.b16 %v421, %v406
    %v482 = vpack.c.b16 %v422, %v407
    %v483 = vpack.c.b16 %v423, %v408
    %v484 = vpack.c.b16 %v424, %v409
    %v485 = vpack.c.b16 %v425, %v410
    %v486 = vpack.c.b16 %v426, %v411
    %vm547 = vcmask 523264
    %v549 = vsel %vm547, %v99, 0
    %551 = vmatprep.subr.bf16.mxu0 %v428
    %552 = vmatpush1.bf16.msra.mxu0 %v427
    %553 = vmatprep.subr.bf16.mxu0 %v443
    %554 = vmatpush1.bf16.msra.mxu0 %v442
    %555 = vmatprep.subr.bf16.mxu0 %v458
    %556 = vmatpush1.bf16.msra.mxu0 %v457
    %557 = vmatprep.subr.bf16.mxu0 %v473
    %558 = vmatpush1.bf16.msra.mxu0 %v472
    %559 = vmatprep.subr.bf16.mxu0 0
    %560 = vmatpush1.bf16.msra.mxu0 0
    %561 = vmatprep.subr.bf16.mxu0 0
    %562 = vmatpush1.bf16.msra.mxu0 0
    %563 = vmatprep.subr.bf16.mxu0 0
    %564 = vmatpush1.bf16.msra.mxu0 0
    %565 = vmatprep.subr.bf16.mxu0 0
    %566 = vmatpush1.bf16.msra.mxu0 0
    %567 = vmatprep.subr.bf16.mxu0 0
    %568 = vmatpush1.bf16.msra.mxu0 0
    %569 = vmatprep.subr.bf16.mxu0 0
    %570 = vmatpush1.bf16.msra.mxu0 0
    %571 = vmatprep.subr.bf16.mxu0 0
    %572 = vmatpush1.bf16.msra.mxu0 0
    %573 = vmatprep.subr.bf16.mxu0 0
    %574 = vmatpush1.bf16.msra.mxu0 0
    %575 = vmatprep.subr.bf16.mxu0 0
    %576 = vmatpush1.bf16.msra.mxu0 0
    %577 = vmatprep.subr.bf16.mxu0 0
    %578 = vmatpush1.bf16.msra.mxu0 0
    %579 = vmatprep.subr.bf16.mxu0 0
    %580 = vmatpush1.bf16.msra.mxu0 0
    %581 = vmatprep.subr.bf16.mxu0 0
    %582 = vmatpush1.bf16.msra.mxu0 0
    %583 = vmatprep.mubr.bf16.mxu0 0
    %584 = vmatmul.mubr.bf16.gmra.mrb[0].mxu0 %v549
    %v585 = vpop.f32.mrb[0].mxu0
    %v586 = vadd.f32 %v171, %v585
    %v587 = vpop.f32.mrb[0].mxu0
    %v588 = vadd.f32 %v175, %v587
    %v589 = vpop.f32.mrb[0].mxu0
    %v590 = vpop.f32.mrb[0].mxu0
    %591 = vdwg.mxu0
    %592 = vmatprep.subr.bf16.mxu0 %v430
    %593 = vmatpush1.bf16.msra.mxu0 %v429
    %594 = vmatprep.subr.bf16.mxu0 %v445
    %595 = vmatpush1.bf16.msra.mxu0 %v444
    %596 = vmatprep.subr.bf16.mxu0 %v460
    %597 = vmatpush1.bf16.msra.mxu0 %v459
    %598 = vmatprep.subr.bf16.mxu0 %v475
    %599 = vmatpush1.bf16.msra.mxu0 %v474
    %600 = vmatprep.subr.bf16.mxu0 0
    %601 = vmatpush1.bf16.msra.mxu0 0
    %602 = vmatprep.subr.bf16.mxu0 0
    %603 = vmatpush1.bf16.msra.mxu0 0
    %604 = vmatprep.subr.bf16.mxu0 0
    %605 = vmatpush1.bf16.msra.mxu0 0
    %606 = vmatprep.subr.bf16.mxu0 0
    %607 = vmatpush1.bf16.msra.mxu0 0
    %608 = vmatprep.subr.bf16.mxu0 0
    %609 = vmatpush1.bf16.msra.mxu0 0
    %610 = vmatprep.subr.bf16.mxu0 0
    %611 = vmatpush1.bf16.msra.mxu0 0
    %612 = vmatprep.subr.bf16.mxu0 0
    %613 = vmatpush1.bf16.msra.mxu0 0
    %614 = vmatprep.subr.bf16.mxu0 0
    %615 = vmatpush1.bf16.msra.mxu0 0
    %616 = vmatprep.subr.bf16.mxu0 0
    %617 = vmatpush1.bf16.msra.mxu0 0
    %618 = vmatprep.subr.bf16.mxu0 0
    %619 = vmatpush1.bf16.msra.mxu0 0
    %620 = vmatprep.subr.bf16.mxu0 0
    %621 = vmatpush1.bf16.msra.mxu0 0
    %622 = vmatprep.subr.bf16.mxu0 0
    %623 = vmatpush1.bf16.msra.mxu0 0
    %624 = vmatprep.mubr.bf16.mxu0 0
    %625 = vmatmul.mubr.bf16.gmra.mrb[0].mxu0 %v549
    %v626 = vpop.f32.mrb[0].mxu0
    %v627 = vadd.f32 %v179, %v626
    %v628 = vpop.f32.mrb[0].mxu0
    %v629 = vadd.f32 %v183, %v628
    %v630 = vpop.f32.mrb[0].mxu0
    %v631 = vpop.f32.mrb[0].mxu0
    %632 = vdwg.mxu0
    %633 = vmatprep.subr.bf16.mxu0 %v432
    %634 = vmatpush1.bf16.msra.mxu0 %v431
    %635 = vmatprep.subr.bf16.mxu0 %v447
    %636 = vmatpush1.bf16.msra.mxu0 %v446
    %637 = vmatprep.subr.bf16.mxu0 %v462
    %638 = vmatpush1.bf16.msra.mxu0 %v461
    %639 = vmatprep.subr.bf16.mxu0 %v477
    %640 = vmatpush1.bf16.msra.mxu0 %v476
    %641 = vmatprep.subr.bf16.mxu0 0
    %642 = vmatpush1.bf16.msra.mxu0 0
    %643 = vmatprep.subr.bf16.mxu0 0
    %644 = vmatpush1.bf16.msra.mxu0 0
    %645 = vmatprep.subr.bf16.mxu0 0
    %646 = vmatpush1.bf16.msra.mxu0 0
    %647 = vmatprep.subr.bf16.mxu0 0
    %648 = vmatpush1.bf16.msra.mxu0 0
    %649 = vmatprep.subr.bf16.mxu0 0
    %650 = vmatpush1.bf16.msra.mxu0 0
    %651 = vmatprep.subr.bf16.mxu0 0
    %652 = vmatpush1.bf16.msra.mxu0 0
    %653 = vmatprep.subr.bf16.mxu0 0
    %654 = vmatpush1.bf16.msra.mxu0 0
    %655 = vmatprep.subr.bf16.mxu0 0
    %656 = vmatpush1.bf16.msra.mxu0 0
    %657 = vmatprep.subr.bf16.mxu0 0
    %658 = vmatpush1.bf16.msra.mxu0 0
    %659 = vmatprep.subr.bf16.mxu0 0
    %660 = vmatpush1.bf16.msra.mxu0 0
    %661 = vmatprep.subr.bf16.mxu0 0
    %662 = vmatpush1.bf16.msra.mxu0 0
    %663 = vmatprep.subr.bf16.mxu0 0
    %664 = vmatpush1.bf16.msra.mxu0 0
    %665 = vmatprep.mubr.bf16.mxu0 0
    %666 = vmatmul.mubr.bf16.gmra.mrb[0].mxu0 %v549
    %v667 = vpop.f32.mrb[0].mxu0
    %v668 = vadd.f32 %v187, %v667
    %v669 = vpop.f32.mrb[0].mxu0
    %v670 = vadd.f32 %v191, %v669
    %v671 = vpop.f32.mrb[0].mxu0
    %v672 = vpop.f32.mrb[0].mxu0
    %673 = vdwg.mxu0
    %674 = vmatprep.subr.bf16.mxu0 %v434
    %675 = vmatpush1.bf16.msra.mxu0 %v433
    %676 = vmatprep.subr.bf16.mxu0 %v449
    %677 = vmatpush1.bf16.msra.mxu0 %v448
    %678 = vmatprep.subr.bf16.mxu0 %v464
    %679 = vmatpush1.bf16.msra.mxu0 %v463
    %680 = vmatprep.subr.bf16.mxu0 %v479
    %681 = vmatpush1.bf16.msra.mxu0 %v478
    %682 = vmatprep.subr.bf16.mxu0 0
    %683 = vmatpush1.bf16.msra.mxu0 0
    %684 = vmatprep.subr.bf16.mxu0 0
    %685 = vmatpush1.bf16.msra.mxu0 0
    %686 = vmatprep.subr.bf16.mxu0 0
    %687 = vmatpush1.bf16.msra.mxu0 0
    %688 = vmatprep.subr.bf16.mxu0 0
    %689 = vmatpush1.bf16.msra.mxu0 0
    %690 = vmatprep.subr.bf16.mxu0 0
    %691 = vmatpush1.bf16.msra.mxu0 0
    %692 = vmatprep.subr.bf16.mxu0 0
    %693 = vmatpush1.bf16.msra.mxu0 0
    %694 = vmatprep.subr.bf16.mxu0 0
    %695 = vmatpush1.bf16.msra.mxu0 0
    %696 = vmatprep.subr.bf16.mxu0 0
    %697 = vmatpush1.bf16.msra.mxu0 0
    %698 = vmatprep.subr.bf16.mxu0 0
    %699 = vmatpush1.bf16.msra.mxu0 0
    %700 = vmatprep.subr.bf16.mxu0 0
    %701 = vmatpush1.bf16.msra.mxu0 0
    %702 = vmatprep.subr.bf16.mxu0 0
    %703 = vmatpush1.bf16.msra.mxu0 0
    %704 = vmatprep.subr.bf16.mxu0 0
    %705 = vmatpush1.bf16.msra.mxu0 0
    %706 = vmatprep.mubr.bf16.mxu0 0
    %707 = vmatmul.mubr.bf16.gmra.mrb[0].mxu0 %v549
    %v708 = vpop.f32.mrb[0].mxu0
    %v709 = vadd.f32 %v195, %v708
    %v710 = vpop.f32.mrb[0].mxu0
    %v711 = vadd.f32 %v199, %v710
    %v712 = vpop.f32.mrb[0].mxu0
    %v713 = vpop.f32.mrb[0].mxu0
    %714 = vdwg.mxu0
    %715 = vmatprep.subr.bf16.mxu0 %v436
    %716 = vmatpush1.bf16.msra.mxu0 %v435
    %717 = vmatprep.subr.bf16.mxu0 %v451
    %718 = vmatpush1.bf16.msra.mxu0 %v450
    %719 = vmatprep.subr.bf16.mxu0 %v466
    %720 = vmatpush1.bf16.msra.mxu0 %v465
    %721 = vmatprep.subr.bf16.mxu0 %v481
    %722 = vmatpush1.bf16.msra.mxu0 %v480
    %723 = vmatprep.subr.bf16.mxu0 0
    %724 = vmatpush1.bf16.msra.mxu0 0
    %725 = vmatprep.subr.bf16.mxu0 0
    %726 = vmatpush1.bf16.msra.mxu0 0
    %727 = vmatprep.subr.bf16.mxu0 0
    %728 = vmatpush1.bf16.msra.mxu0 0
    %729 = vmatprep.subr.bf16.mxu0 0
    %730 = vmatpush1.bf16.msra.mxu0 0
    %731 = vmatprep.subr.bf16.mxu0 0
    %732 = vmatpush1.bf16.msra.mxu0 0
    %733 = vmatprep.subr.bf16.mxu0 0
    %734 = vmatpush1.bf16.msra.mxu0 0
    %735 = vmatprep.subr.bf16.mxu0 0
    %736 = vmatpush1.bf16.msra.mxu0 0
    %737 = vmatprep.subr.bf16.mxu0 0
    %738 = vmatpush1.bf16.msra.mxu0 0
    %739 = vmatprep.subr.bf16.mxu0 0
    %740 = vmatpush1.bf16.msra.mxu0 0
    %741 = vmatprep.subr.bf16.mxu0 0
    %742 = vmatpush1.bf16.msra.mxu0 0
    %743 = vmatprep.subr.bf16.mxu0 0
    %744 = vmatpush1.bf16.msra.mxu0 0
    %745 = vmatprep.subr.bf16.mxu0 0
    %746 = vmatpush1.bf16.msra.mxu0 0
    %747 = vmatprep.mubr.bf16.mxu0 0
    %748 = vmatmul.mubr.bf16.gmra.mrb[0].mxu0 %v549
    %v749 = vpop.f32.mrb[0].mxu0
    %v750 = vadd.f32 %v203, %v749
    %v751 = vpop.f32.mrb[0].mxu0
    %v752 = vadd.f32 %v207, %v751
    %v753 = vpop.f32.mrb[0].mxu0
    %v754 = vpop.f32.mrb[0].mxu0
    %755 = vdwg.mxu0
    %756 = vmatprep.subr.bf16.mxu0 %v438
    %757 = vmatpush1.bf16.msra.mxu0 %v437
    %758 = vmatprep.subr.bf16.mxu0 %v453
    %759 = vmatpush1.bf16.msra.mxu0 %v452
    %760 = vmatprep.subr.bf16.mxu0 %v468
    %761 = vmatpush1.bf16.msra.mxu0 %v467
    %762 = vmatprep.subr.bf16.mxu0 %v483
    %763 = vmatpush1.bf16.msra.mxu0 %v482
    %764 = vmatprep.subr.bf16.mxu0 0
    %765 = vmatpush1.bf16.msra.mxu0 0
    %766 = vmatprep.subr.bf16.mxu0 0
    %767 = vmatpush1.bf16.msra.mxu0 0
    %768 = vmatprep.subr.bf16.mxu0 0
    %769 = vmatpush1.bf16.msra.mxu0 0
    %770 = vmatprep.subr.bf16.mxu0 0
    %771 = vmatpush1.bf16.msra.mxu0 0
    %772 = vmatprep.subr.bf16.mxu0 0
    %773 = vmatpush1.bf16.msra.mxu0 0
    %774 = vmatprep.subr.bf16.mxu0 0
    %775 = vmatpush1.bf16.msra.mxu0 0
    %776 = vmatprep.subr.bf16.mxu0 0
    %777 = vmatpush1.bf16.msra.mxu0 0
    %778 = vmatprep.subr.bf16.mxu0 0
    %779 = vmatpush1.bf16.msra.mxu0 0
    %780 = vmatprep.subr.bf16.mxu0 0
    %781 = vmatpush1.bf16.msra.mxu0 0
    %782 = vmatprep.subr.bf16.mxu0 0
    %783 = vmatpush1.bf16.msra.mxu0 0
    %784 = vmatprep.subr.bf16.mxu0 0
    %785 = vmatpush1.bf16.msra.mxu0 0
    %786 = vmatprep.subr.bf16.mxu0 0
    %787 = vmatpush1.bf16.msra.mxu0 0
    %788 = vmatprep.mubr.bf16.mxu0 0
    %789 = vmatmul.mubr.bf16.gmra.mrb[0].mxu0 %v549
    %v790 = vpop.f32.mrb[0].mxu0
    %v791 = vadd.f32 %v211, %v790
    %v792 = vpop.f32.mrb[0].mxu0
    %v793 = vadd.f32 %v215, %v792
    %v794 = vpop.f32.mrb[0].mxu0
    %v795 = vpop.f32.mrb[0].mxu0
    %796 = vdwg.mxu0
    %797 = vmatprep.subr.bf16.mxu0 %v440
    %798 = vmatpush1.bf16.msra.mxu0 %v439
    %799 = vmatprep.subr.bf16.mxu0 %v455
    %800 = vmatpush1.bf16.msra.mxu0 %v454
    %801 = vmatprep.subr.bf16.mxu0 %v470
    %802 = vmatpush1.bf16.msra.mxu0 %v469
    %803 = vmatprep.subr.bf16.mxu0 %v485
    %804 = vmatpush1.bf16.msra.mxu0 %v484
    %805 = vmatprep.subr.bf16.mxu0 0
    %806 = vmatpush1.bf16.msra.mxu0 0
    %807 = vmatprep.subr.bf16.mxu0 0
    %808 = vmatpush1.bf16.msra.mxu0 0
    %809 = vmatprep.subr.bf16.mxu0 0
    %810 = vmatpush1.bf16.msra.mxu0 0
    %811 = vmatprep.subr.bf16.mxu0 0
    %812 = vmatpush1.bf16.msra.mxu0 0
    %813 = vmatprep.subr.bf16.mxu0 0
    %814 = vmatpush1.bf16.msra.mxu0 0
    %815 = vmatprep.subr.bf16.mxu0 0
    %816 = vmatpush1.bf16.msra.mxu0 0
    %817 = vmatprep.subr.bf16.mxu0 0
    %818 = vmatpush1.bf16.msra.mxu0 0
    %819 = vmatprep.subr.bf16.mxu0 0
    %820 = vmatpush1.bf16.msra.mxu0 0
    %821 = vmatprep.subr.bf16.mxu0 0
    %822 = vmatpush1.bf16.msra.mxu0 0
    %823 = vmatprep.subr.bf16.mxu0 0
    %824 = vmatpush1.bf16.msra.mxu0 0
    %825 = vmatprep.subr.bf16.mxu0 0
    %826 = vmatpush1.bf16.msra.mxu0 0
    %827 = vmatprep.subr.bf16.mxu0 0
    %828 = vmatpush1.bf16.msra.mxu0 0
    %829 = vmatprep.mubr.bf16.mxu0 0
    %830 = vmatmul.mubr.bf16.gmra.mrb[0].mxu0 %v549
    %v831 = vpop.f32.mrb[0].mxu0
    %v832 = vadd.f32 %v219, %v831
    %v833 = vpop.f32.mrb[0].mxu0
    %v834 = vadd.f32 %v223, %v833
    %v835 = vpop.f32.mrb[0].mxu0
    %v836 = vpop.f32.mrb[0].mxu0
    %837 = vdwg.mxu0
    %838 = vmatprep.subr.bf16.mxu0 0
    %839 = vmatpush1.bf16.msra.mxu0 %v441
    %840 = vmatprep.subr.bf16.mxu0 0
    %841 = vmatpush1.bf16.msra.mxu0 %v456
    %842 = vmatprep.subr.bf16.mxu0 0
    %843 = vmatpush1.bf16.msra.mxu0 %v471
    %844 = vmatprep.subr.bf16.mxu0 0
    %845 = vmatpush1.bf16.msra.mxu0 %v486
    %846 = vmatprep.subr.bf16.mxu0 0
    %847 = vmatpush1.bf16.msra.mxu0 0
    %848 = vmatprep.subr.bf16.mxu0 0
    %849 = vmatpush1.bf16.msra.mxu0 0
    %850 = vmatprep.subr.bf16.mxu0 0
    %851 = vmatpush1.bf16.msra.mxu0 0
    %852 = vmatprep.subr.bf16.mxu0 0
    %853 = vmatpush1.bf16.msra.mxu0 0
    %854 = vmatprep.subr.bf16.mxu0 0
    %855 = vmatpush1.bf16.msra.mxu0 0
    %856 = vmatprep.subr.bf16.mxu0 0
    %857 = vmatpush1.bf16.msra.mxu0 0
    %858 = vmatprep.subr.bf16.mxu0 0
    %859 = vmatpush1.bf16.msra.mxu0 0
    %860 = vmatprep.subr.bf16.mxu0 0
    %861 = vmatpush1.bf16.msra.mxu0 0
    %862 = vmatprep.subr.bf16.mxu0 0
    %863 = vmatpush1.bf16.msra.mxu0 0
    %864 = vmatprep.subr.bf16.mxu0 0
    %865 = vmatpush1.bf16.msra.mxu0 0
    %866 = vmatprep.subr.bf16.mxu0 0
    %867 = vmatpush1.bf16.msra.mxu0 0
    %868 = vmatprep.subr.bf16.mxu0 0
    %869 = vmatpush1.bf16.msra.mxu0 0
    %870 = vmatprep.mubr.bf16.mxu0 0
    %871 = vmatmul.mubr.bf16.gmra.mrb[0].mxu0 %v549
    %v872 = vpop.f32.mrb[0].mxu0
    %v873 = vadd.f32 %v227, %v872
    %v874 = vpop.f32.mrb[0].mxu0
    %v875 = vpop.f32.mrb[0].mxu0
    %v876 = vpop.f32.mrb[0].mxu0
    %877 = vdwg.mxu0
    %vm878 = vcmp.ge.f32.partialorder %v586, 0.0
    %vm879 = vcmp.ge.f32.partialorder %v588, 0.0
    %vm880 = vcmp.ge.f32.partialorder %v627, 0.0
    %vm881 = vcmp.ge.f32.partialorder %v629, 0.0
    %vm882 = vcmp.ge.f32.partialorder %v668, 0.0
    %vm883 = vcmp.ge.f32.partialorder %v670, 0.0
    %vm884 = vcmp.ge.f32.partialorder %v709, 0.0
    %vm885 = vcmp.ge.f32.partialorder %v711, 0.0
    %vm886 = vcmp.ge.f32.partialorder %v750, 0.0
    %vm887 = vcmp.ge.f32.partialorder %v752, 0.0
    %vm888 = vcmp.ge.f32.partialorder %v791, 0.0
    %vm889 = vcmp.ge.f32.partialorder %v793, 0.0
    %vm890 = vcmp.ge.f32.partialorder %v832, 0.0
    %vm891 = vcmp.ge.f32.partialorder %v834, 0.0
    %vm892 = vcmp.ge.f32.partialorder %v873, 0.0
    %v893 = vmul.f32 %v586, 0.2
    %v894 = vmul.f32 %v588, 0.2
    %v895 = vmul.f32 %v627, 0.2
    %v896 = vmul.f32 %v629, 0.2
    %v897 = vmul.f32 %v668, 0.2
    %v898 = vmul.f32 %v670, 0.2
    %v899 = vmul.f32 %v709, 0.2
    %v900 = vmul.f32 %v711, 0.2
    %v901 = vmul.f32 %v750, 0.2
    %v902 = vmul.f32 %v752, 0.2
    %v903 = vmul.f32 %v791, 0.2
    %v904 = vmul.f32 %v793, 0.2
    %v905 = vmul.f32 %v832, 0.2
    %v906 = vmul.f32 %v834, 0.2
    %v907 = vmul.f32 %v873, 0.2
    %v908 = vsel %vm878, %v586, %v893
    %v909 = vsel %vm879, %v588, %v894
    %v910 = vsel %vm880, %v627, %v895
    %v911 = vsel %vm881, %v629, %v896
    %v912 = vsel %vm882, %v668, %v897
    %v913 = vsel %vm883, %v670, %v898
    %v914 = vsel %vm884, %v709, %v899
    %v915 = vsel %vm885, %v711, %v900
    %v916 = vsel %vm886, %v750, %v901
    %v917 = vsel %vm887, %v752, %v902
    %v918 = vsel %vm888, %v791, %v903
    %v919 = vsel %vm889, %v793, %v904
    %v920 = vsel %vm890, %v832, %v905
    %v921 = vsel %vm891, %v834, %v906
    %v922 = vsel %vm892, %v873, %v907
    %v923 = vld [vmem:[#allocation6] sm:$0xff]
    %v924 = vld [vmem:[#allocation6 + $0x8] sm:$0xff]
    %v925 = vld [vmem:[#allocation6 + $0x10] sm:$0xff]
    %v926 = vld [vmem:[#allocation6 + $0x18] sm:$0xff]
    %v927 = vld [vmem:[#allocation6 + $0x20] sm:$0xff]
    %v928 = vld [vmem:[#allocation6 + $0x28] sm:$0xff]
    %v929 = vld [vmem:[#allocation6 + $0x30] sm:$0xff]
    %v930 = vld [vmem:[#allocation6 + $0x38] sm:$0xff]
    %v931 = vld [vmem:[#allocation6 + $0x40] sm:$0xff]
    %v932 = vld [vmem:[#allocation6 + $0x48] sm:$0xff]
    %v933 = vld [vmem:[#allocation6 + $0x50] sm:$0xff]
    %v934 = vld [vmem:[#allocation6 + $0x58] sm:$0xff]
    %v935 = vld [vmem:[#allocation6 + $0x60] sm:$0xff]
    %v936 = vld [vmem:[#allocation6 + $0x68] sm:$0xff]
    %v937 = vld [vmem:[#allocation6 + $0x70] sm:$0xff]
    %v938 = vld [vmem:[#allocation6 + $0x78] sm:$0xff]
    %v939 = vld [vmem:[%s4] sm:$0x1]
    %v941 = vlaneseq
    %v942 = vshrl.u32 %v941, 7
    %v943 = vsub.s32 0, %v942
    %v944 = vrot.slane %v939, %v943
    %946 = vmatprep.subr.mxu0 0.0
    %947 = vmatpush1.msra.mxu0 %v923
    %948 = vmatprep.subr.mxu0 0.0
    %949 = vmatpush1.msra.mxu0 %v924
    %950 = vmatprep.subr.mxu0 0.0
    %951 = vmatpush1.msra.mxu0 %v925
    %952 = vmatprep.subr.mxu0 0.0
    %953 = vmatpush1.msra.mxu0 %v926
    %954 = vmatprep.subr.mxu0 0.0
    %955 = vmatpush1.msra.mxu0 %v927
    %956 = vmatprep.subr.mxu0 0.0
    %957 = vmatpush1.msra.mxu0 %v928
    %958 = vmatprep.subr.mxu0 0.0
    %959 = vmatpush1.msra.mxu0 %v929
    %960 = vmatprep.subr.mxu0 0.0
    %961 = vmatpush1.msra.mxu0 %v930
    %962 = vmatprep.subr.mxu0 0.0
    %963 = vmatpush1.msra.mxu0 %v931
    %964 = vmatprep.subr.mxu0 0.0
    %965 = vmatpush1.msra.mxu0 %v932
    %966 = vmatprep.subr.mxu0 0.0
    %967 = vmatpush1.msra.mxu0 %v933
    %968 = vmatprep.subr.mxu0 0.0
    %969 = vmatpush1.msra.mxu0 %v934
    %970 = vmatprep.subr.mxu0 0.0
    %971 = vmatpush1.msra.mxu0 %v935
    %972 = vmatprep.subr.mxu0 0.0
    %973 = vmatpush1.msra.mxu0 %v936
    %974 = vmatprep.subr.mxu0 0.0
    %975 = vmatpush1.msra.mxu0 %v937
    %976 = vmatprep.subr.mxu0 0.0
    %977 = vmatpush1.msra.mxu0 %v938
    %978 = vmatprep.subr.mxu0 0.0
    %979 = vmatpush1.msra.mxu0 0.0
    %980 = vmatprep.subr.mxu0 0.0
    %981 = vmatpush1.msra.mxu0 0.0
    %982 = vmatprep.subr.mxu0 0.0
    %983 = vmatpush1.msra.mxu0 0.0
    %984 = vmatprep.subr.mxu0 0.0
    %985 = vmatpush1.msra.mxu0 0.0
    %986 = vmatprep.subr.mxu0 0.0
    %987 = vmatpush1.msra.mxu0 0.0
    %988 = vmatprep.subr.mxu0 0.0
    %989 = vmatpush1.msra.mxu0 0.0
    %990 = vmatprep.subr.mxu0 0.0
    %991 = vmatpush1.msra.mxu0 0.0
    %992 = vmatprep.subr.mxu0 0.0
    %993 = vmatpush1.msra.mxu0 0.0
    %994 = vmatprep.subr.mxu0 0.0
    %995 = vmatpush1.msra.mxu0 0.0
    %996 = vmatprep.subr.mxu0 0.0
    %997 = vmatpush1.msra.mxu0 0.0
    %998 = vmatprep.subr.mxu0 0.0
    %999 = vmatpush1.msra.mxu0 0.0
    %1000 = vmatprep.subr.mxu0 0.0
    %1001 = vmatpush1.msra.mxu0 0.0
    %1002 = vmatprep.subr.mxu0 0.0
    %1003 = vmatpush1.msra.mxu0 0.0
    %1004 = vmatprep.subr.mxu0 0.0
    %1005 = vmatpush1.msra.mxu0 0.0
    %1006 = vmatprep.subr.mxu0 0.0
    %1007 = vmatpush1.msra.mxu0 0.0
    %1008 = vmatprep.subr.mxu0 0.0
    %1009 = vmatpush1.msra.mxu0 0.0
    %1010 = vmatprep.mubr.f32.mxu0 0.0
    %1011 = vmatmul.mubr.f32.gmra.mrb[0].mxu0 %v908
    %v1012 = vpop.f32.mrb[0].mxu0
    %v1013 = vadd.f32 %v944, %v1012
    %v1014 = vpop.f32.mrb[0].mxu0
    %1015 = vdwg.mxu0
    %vm1016 = vcmp.ge.f32.partialorder %v1013, 0.0
    %v1017 = vmul.f32 %v1013, 0.2
    %v1018 = vsel %vm1016, %v1013, %v1017
    %1019 = vmatprep.subr.mxu0 0.0
    %1020 = vmatpush1.msra.mxu0 %v923
    %1021 = vmatprep.subr.mxu0 0.0
    %1022 = vmatpush1.msra.mxu0 %v924
    %1023 = vmatprep.subr.mxu0 0.0
    %1024 = vmatpush1.msra.mxu0 %v925
    %1025 = vmatprep.subr.mxu0 0.0
    %1026 = vmatpush1.msra.mxu0 %v926
    %1027 = vmatprep.subr.mxu0 0.0
    %1028 = vmatpush1.msra.mxu0 %v927
    %1029 = vmatprep.subr.mxu0 0.0
    %1030 = vmatpush1.msra.mxu0 %v928
    %1031 = vmatprep.subr.mxu0 0.0
    %1032 = vmatpush1.msra.mxu0 %v929
    %1033 = vmatprep.subr.mxu0 0.0
    %1034 = vmatpush1.msra.mxu0 %v930
    %1035 = vmatprep.subr.mxu0 0.0
    %1036 = vmatpush1.msra.mxu0 %v931
    %1037 = vmatprep.subr.mxu0 0.0
    %1038 = vmatpush1.msra.mxu0 %v932
    %1039 = vmatprep.subr.mxu0 0.0
    %1040 = vmatpush1.msra.mxu0 %v933
    %1041 = vmatprep.subr.mxu0 0.0
    %1042 = vmatpush1.msra.mxu0 %v934
    %1043 = vmatprep.subr.mxu0 0.0
    %1044 = vmatpush1.msra.mxu0 %v935
    %1045 = vmatprep.subr.mxu0 0.0
    %1046 = vmatpush1.msra.mxu0 %v936
    %1047 = vmatprep.subr.mxu0 0.0
    %1048 = vmatpush1.msra.mxu0 %v937
    %1049 = vmatprep.subr.mxu0 0.0
    %1050 = vmatpush1.msra.mxu0 %v938
    %1051 = vmatprep.subr.mxu0 0.0
    %1052 = vmatpush1.msra.mxu0 0.0
    %1053 = vmatprep.subr.mxu0 0.0
    %1054 = vmatpush1.msra.mxu0 0.0
    %1055 = vmatprep.subr.mxu0 0.0
    %1056 = vmatpush1.msra.mxu0 0.0
    %1057 = vmatprep.subr.mxu0 0.0
    %1058 = vmatpush1.msra.mxu0 0.0
    %1059 = vmatprep.subr.mxu0 0.0
    %1060 = vmatpush1.msra.mxu0 0.0
    %1061 = vmatprep.subr.mxu0 0.0
    %1062 = vmatpush1.msra.mxu0 0.0
    %1063 = vmatprep.subr.mxu0 0.0
    %1064 = vmatpush1.msra.mxu0 0.0
    %1065 = vmatprep.subr.mxu0 0.0
    %1066 = vmatpush1.msra.mxu0 0.0
    %1067 = vmatprep.subr.mxu0 0.0
    %1068 = vmatpush1.msra.mxu0 0.0
    %1069 = vmatprep.subr.mxu0 0.0
    %1070 = vmatpush1.msra.mxu0 0.0
    %1071 = vmatprep.subr.mxu0 0.0
    %1072 = vmatpush1.msra.mxu0 0.0
    %1073 = vmatprep.subr.mxu0 0.0
    %1074 = vmatpush1.msra.mxu0 0.0
    %1075 = vmatprep.subr.mxu0 0.0
    %1076 = vmatpush1.msra.mxu0 0.0
    %1077 = vmatprep.subr.mxu0 0.0
    %1078 = vmatpush1.msra.mxu0 0.0
    %1079 = vmatprep.subr.mxu0 0.0
    %1080 = vmatpush1.msra.mxu0 0.0
    %1081 = vmatprep.subr.mxu0 0.0
    %1082 = vmatpush1.msra.mxu0 0.0
    %1083 = vmatprep.mubr.f32.mxu0 0.0
    %1084 = vmatmul.mubr.f32.gmra.mrb[0].mxu0 %v909
    %v1085 = vpop.f32.mrb[0].mxu0
    %v1086 = vadd.f32 %v944, %v1085
    %v1087 = vpop.f32.mrb[0].mxu0
    %1088 = vdwg.mxu0
    %vm1089 = vcmp.ge.f32.partialorder %v1086, 0.0
    %v1090 = vmul.f32 %v1086, 0.2
    %v1091 = vsel %vm1089, %v1086, %v1090
    %1092 = vmatprep.subr.mxu0 0.0
    %1093 = vmatpush1.msra.mxu0 %v923
    %1094 = vmatprep.subr.mxu0 0.0
    %1095 = vmatpush1.msra.mxu0 %v924
    %1096 = vmatprep.subr.mxu0 0.0
    %1097 = vmatpush1.msra.mxu0 %v925
    %1098 = vmatprep.subr.mxu0 0.0
    %1099 = vmatpush1.msra.mxu0 %v926
    %1100 = vmatprep.subr.mxu0 0.0
    %1101 = vmatpush1.msra.mxu0 %v927
    %1102 = vmatprep.subr.mxu0 0.0
    %1103 = vmatpush1.msra.mxu0 %v928
    %1104 = vmatprep.subr.mxu0 0.0
    %1105 = vmatpush1.msra.mxu0 %v929
    %1106 = vmatprep.subr.mxu0 0.0
    %1107 = vmatpush1.msra.mxu0 %v930
    %1108 = vmatprep.subr.mxu0 0.0
    %1109 = vmatpush1.msra.mxu0 %v931
    %1110 = vmatprep.subr.mxu0 0.0
    %1111 = vmatpush1.msra.mxu0 %v932
    %1112 = vmatprep.subr.mxu0 0.0
    %1113 = vmatpush1.msra.mxu0 %v933
    %1114 = vmatprep.subr.mxu0 0.0
    %1115 = vmatpush1.msra.mxu0 %v934
    %1116 = vmatprep.subr.mxu0 0.0
    %1117 = vmatpush1.msra.mxu0 %v935
    %1118 = vmatprep.subr.mxu0 0.0
    %1119 = vmatpush1.msra.mxu0 %v936
    %1120 = vmatprep.subr.mxu0 0.0
    %1121 = vmatpush1.msra.mxu0 %v937
    %1122 = vmatprep.subr.mxu0 0.0
    %1123 = vmatpush1.msra.mxu0 %v938
    %1124 = vmatprep.subr.mxu0 0.0
    %1125 = vmatpush1.msra.mxu0 0.0
    %1126 = vmatprep.subr.mxu0 0.0
    %1127 = vmatpush1.msra.mxu0 0.0
    %1128 = vmatprep.subr.mxu0 0.0
    %1129 = vmatpush1.msra.mxu0 0.0
    %1130 = vmatprep.subr.mxu0 0.0
    %1131 = vmatpush1.msra.mxu0 0.0
    %1132 = vmatprep.subr.mxu0 0.0
    %1133 = vmatpush1.msra.mxu0 0.0
    %1134 = vmatprep.subr.mxu0 0.0
    %1135 = vmatpush1.msra.mxu0 0.0
    %1136 = vmatprep.subr.mxu0 0.0
    %1137 = vmatpush1.msra.mxu0 0.0
    %1138 = vmatprep.subr.mxu0 0.0
    %1139 = vmatpush1.msra.mxu0 0.0
    %1140 = vmatprep.subr.mxu0 0.0
    %1141 = vmatpush1.msra.mxu0 0.0
    %1142 = vmatprep.subr.mxu0 0.0
    %1143 = vmatpush1.msra.mxu0 0.0
    %1144 = vmatprep.subr.mxu0 0.0
    %1145 = vmatpush1.msra.mxu0 0.0
    %1146 = vmatprep.subr.mxu0 0.0
    %1147 = vmatpush1.msra.mxu0 0.0
    %1148 = vmatprep.subr.mxu0 0.0
    %1149 = vmatpush1.msra.mxu0 0.0
    %1150 = vmatprep.subr.mxu0 0.0
    %1151 = vmatpush1.msra.mxu0 0.0
    %1152 = vmatprep.subr.mxu0 0.0
    %1153 = vmatpush1.msra.mxu0 0.0
    %1154 = vmatprep.subr.mxu0 0.0
    %1155 = vmatpush1.msra.mxu0 0.0
    %1156 = vmatprep.mubr.f32.mxu0 0.0
    %1157 = vmatmul.mubr.f32.gmra.mrb[0].mxu0 %v910
    %v1158 = vpop.f32.mrb[0].mxu0
    %v1159 = vadd.f32 %v944, %v1158
    %v1160 = vpop.f32.mrb[0].mxu0
    %1161 = vdwg.mxu0
    %vm1162 = vcmp.ge.f32.partialorder %v1159, 0.0
    %v1163 = vmul.f32 %v1159, 0.2
    %v1164 = vsel %vm1162, %v1159, %v1163
    %1165 = vmatprep.subr.mxu0 0.0
    %1166 = vmatpush1.msra.mxu0 %v923
    %1167 = vmatprep.subr.mxu0 0.0
    %1168 = vmatpush1.msra.mxu0 %v924
    %1169 = vmatprep.subr.mxu0 0.0
    %1170 = vmatpush1.msra.mxu0 %v925
    %1171 = vmatprep.subr.mxu0 0.0
    %1172 = vmatpush1.msra.mxu0 %v926
    %1173 = vmatprep.subr.mxu0 0.0
    %1174 = vmatpush1.msra.mxu0 %v927
    %1175 = vmatprep.subr.mxu0 0.0
    %1176 = vmatpush1.msra.mxu0 %v928
    %1177 = vmatprep.subr.mxu0 0.0
    %1178 = vmatpush1.msra.mxu0 %v929
    %1179 = vmatprep.subr.mxu0 0.0
    %1180 = vmatpush1.msra.mxu0 %v930
    %1181 = vmatprep.subr.mxu0 0.0
    %1182 = vmatpush1.msra.mxu0 %v931
    %1183 = vmatprep.subr.mxu0 0.0
    %1184 = vmatpush1.msra.mxu0 %v932
    %1185 = vmatprep.subr.mxu0 0.0
    %1186 = vmatpush1.msra.mxu0 %v933
    %1187 = vmatprep.subr.mxu0 0.0
    %1188 = vmatpush1.msra.mxu0 %v934
    %1189 = vmatprep.subr.mxu0 0.0
    %1190 = vmatpush1.msra.mxu0 %v935
    %1191 = vmatprep.subr.mxu0 0.0
    %1192 = vmatpush1.msra.mxu0 %v936
    %1193 = vmatprep.subr.mxu0 0.0
    %1194 = vmatpush1.msra.mxu0 %v937
    %1195 = vmatprep.subr.mxu0 0.0
    %1196 = vmatpush1.msra.mxu0 %v938
    %1197 = vmatprep.subr.mxu0 0.0
    %1198 = vmatpush1.msra.mxu0 0.0
    %1199 = vmatprep.subr.mxu0 0.0
    %1200 = vmatpush1.msra.mxu0 0.0
    %1201 = vmatprep.subr.mxu0 0.0
    %1202 = vmatpush1.msra.mxu0 0.0
    %1203 = vmatprep.subr.mxu0 0.0
    %1204 = vmatpush1.msra.mxu0 0.0
    %1205 = vmatprep.subr.mxu0 0.0
    %1206 = vmatpush1.msra.mxu0 0.0
    %1207 = vmatprep.subr.mxu0 0.0
    %1208 = vmatpush1.msra.mxu0 0.0
    %1209 = vmatprep.subr.mxu0 0.0
    %1210 = vmatpush1.msra.mxu0 0.0
    %1211 = vmatprep.subr.mxu0 0.0
    %1212 = vmatpush1.msra.mxu0 0.0
    %1213 = vmatprep.subr.mxu0 0.0
    %1214 = vmatpush1.msra.mxu0 0.0
    %1215 = vmatprep.subr.mxu0 0.0
    %1216 = vmatpush1.msra.mxu0 0.0
    %1217 = vmatprep.subr.mxu0 0.0
    %1218 = vmatpush1.msra.mxu0 0.0
    %1219 = vmatprep.subr.mxu0 0.0
    %1220 = vmatpush1.msra.mxu0 0.0
    %1221 = vmatprep.subr.mxu0 0.0
    %1222 = vmatpush1.msra.mxu0 0.0
    %1223 = vmatprep.subr.mxu0 0.0
    %1224 = vmatpush1.msra.mxu0 0.0
    %1225 = vmatprep.subr.mxu0 0.0
    %1226 = vmatpush1.msra.mxu0 0.0
    %1227 = vmatprep.subr.mxu0 0.0
    %1228 = vmatpush1.msra.mxu0 0.0
    %1229 = vmatprep.mubr.f32.mxu0 0.0
    %1230 = vmatmul.mubr.f32.gmra.mrb[0].mxu0 %v911
    %v1231 = vpop.f32.mrb[0].mxu0
    %v1232 = vadd.f32 %v944, %v1231
    %v1233 = vpop.f32.mrb[0].mxu0
    %1234 = vdwg.mxu0
    %vm1235 = vcmp.ge.f32.partialorder %v1232, 0.0
    %v1236 = vmul.f32 %v1232, 0.2
    %v1237 = vsel %vm1235, %v1232, %v1236
    %1238 = vmatprep.subr.mxu0 0.0
    %1239 = vmatpush1.msra.mxu0 %v923
    %1240 = vmatprep.subr.mxu0 0.0
    %1241 = vmatpush1.msra.mxu0 %v924
    %1242 = vmatprep.subr.mxu0 0.0
    %1243 = vmatpush1.msra.mxu0 %v925
    %1244 = vmatprep.subr.mxu0 0.0
    %1245 = vmatpush1.msra.mxu0 %v926
    %1246 = vmatprep.subr.mxu0 0.0
    %1247 = vmatpush1.msra.mxu0 %v927
    %1248 = vmatprep.subr.mxu0 0.0
    %1249 = vmatpush1.msra.mxu0 %v928
    %1250 = vmatprep.subr.mxu0 0.0
    %1251 = vmatpush1.msra.mxu0 %v929
    %1252 = vmatprep.subr.mxu0 0.0
    %1253 = vmatpush1.msra.mxu0 %v930
    %1254 = vmatprep.subr.mxu0 0.0
    %1255 = vmatpush1.msra.mxu0 %v931
    %1256 = vmatprep.subr.mxu0 0.0
    %1257 = vmatpush1.msra.mxu0 %v932
    %1258 = vmatprep.subr.mxu0 0.0
    %1259 = vmatpush1.msra.mxu0 %v933
    %1260 = vmatprep.subr.mxu0 0.0
    %1261 = vmatpush1.msra.mxu0 %v934
    %1262 = vmatprep.subr.mxu0 0.0
    %1263 = vmatpush1.msra.mxu0 %v935
    %1264 = vmatprep.subr.mxu0 0.0
    %1265 = vmatpush1.msra.mxu0 %v936
    %1266 = vmatprep.subr.mxu0 0.0
    %1267 = vmatpush1.msra.mxu0 %v937
    %1268 = vmatprep.subr.mxu0 0.0
    %1269 = vmatpush1.msra.mxu0 %v938
    %1270 = vmatprep.subr.mxu0 0.0
    %1271 = vmatpush1.msra.mxu0 0.0
    %1272 = vmatprep.subr.mxu0 0.0
    %1273 = vmatpush1.msra.mxu0 0.0
    %1274 = vmatprep.subr.mxu0 0.0
    %1275 = vmatpush1.msra.mxu0 0.0
    %1276 = vmatprep.subr.mxu0 0.0
    %1277 = vmatpush1.msra.mxu0 0.0
    %1278 = vmatprep.subr.mxu0 0.0
    %1279 = vmatpush1.msra.mxu0 0.0
    %1280 = vmatprep.subr.mxu0 0.0
    %1281 = vmatpush1.msra.mxu0 0.0
    %1282 = vmatprep.subr.mxu0 0.0
    %1283 = vmatpush1.msra.mxu0 0.0
    %1284 = vmatprep.subr.mxu0 0.0
    %1285 = vmatpush1.msra.mxu0 0.0
    %1286 = vmatprep.subr.mxu0 0.0
    %1287 = vmatpush1.msra.mxu0 0.0
    %1288 = vmatprep.subr.mxu0 0.0
    %1289 = vmatpush1.msra.mxu0 0.0
    %1290 = vmatprep.subr.mxu0 0.0
    %1291 = vmatpush1.msra.mxu0 0.0
    %1292 = vmatprep.subr.mxu0 0.0
    %1293 = vmatpush1.msra.mxu0 0.0
    %1294 = vmatprep.subr.mxu0 0.0
    %1295 = vmatpush1.msra.mxu0 0.0
    %1296 = vmatprep.subr.mxu0 0.0
    %1297 = vmatpush1.msra.mxu0 0.0
    %1298 = vmatprep.subr.mxu0 0.0
    %1299 = vmatpush1.msra.mxu0 0.0
    %1300 = vmatprep.subr.mxu0 0.0
    %1301 = vmatpush1.msra.mxu0 0.0
    %1302 = vmatprep.mubr.f32.mxu0 0.0
    %1303 = vmatmul.mubr.f32.gmra.mrb[0].mxu0 %v912
    %v1304 = vpop.f32.mrb[0].mxu0
    %v1305 = vadd.f32 %v944, %v1304
    %v1306 = vpop.f32.mrb[0].mxu0
    %1307 = vdwg.mxu0
    %vm1308 = vcmp.ge.f32.partialorder %v1305, 0.0
    %v1309 = vmul.f32 %v1305, 0.2
    %v1310 = vsel %vm1308, %v1305, %v1309
    %1311 = vmatprep.subr.mxu0 0.0
    %1312 = vmatpush1.msra.mxu0 %v923
    %1313 = vmatprep.subr.mxu0 0.0
    %1314 = vmatpush1.msra.mxu0 %v924
    %1315 = vmatprep.subr.mxu0 0.0
    %1316 = vmatpush1.msra.mxu0 %v925
    %1317 = vmatprep.subr.mxu0 0.0
    %1318 = vmatpush1.msra.mxu0 %v926
    %1319 = vmatprep.subr.mxu0 0.0
    %1320 = vmatpush1.msra.mxu0 %v927
    %1321 = vmatprep.subr.mxu0 0.0
    %1322 = vmatpush1.msra.mxu0 %v928
    %1323 = vmatprep.subr.mxu0 0.0
    %1324 = vmatpush1.msra.mxu0 %v929
    %1325 = vmatprep.subr.mxu0 0.0
    %1326 = vmatpush1.msra.mxu0 %v930
    %1327 = vmatprep.subr.mxu0 0.0
    %1328 = vmatpush1.msra.mxu0 %v931
    %1329 = vmatprep.subr.mxu0 0.0
    %1330 = vmatpush1.msra.mxu0 %v932
    %1331 = vmatprep.subr.mxu0 0.0
    %1332 = vmatpush1.msra.mxu0 %v933
    %1333 = vmatprep.subr.mxu0 0.0
    %1334 = vmatpush1.msra.mxu0 %v934
    %1335 = vmatprep.subr.mxu0 0.0
    %1336 = vmatpush1.msra.mxu0 %v935
    %1337 = vmatprep.subr.mxu0 0.0
    %1338 = vmatpush1.msra.mxu0 %v936
    %1339 = vmatprep.subr.mxu0 0.0
    %1340 = vmatpush1.msra.mxu0 %v937
    %1341 = vmatprep.subr.mxu0 0.0
    %1342 = vmatpush1.msra.mxu0 %v938
    %1343 = vmatprep.subr.mxu0 0.0
    %1344 = vmatpush1.msra.mxu0 0.0
    %1345 = vmatprep.subr.mxu0 0.0
    %1346 = vmatpush1.msra.mxu0 0.0
    %1347 = vmatprep.subr.mxu0 0.0
    %1348 = vmatpush1.msra.mxu0 0.0
    %1349 = vmatprep.subr.mxu0 0.0
    %1350 = vmatpush1.msra.mxu0 0.0
    %1351 = vmatprep.subr.mxu0 0.0
    %1352 = vmatpush1.msra.mxu0 0.0
    %1353 = vmatprep.subr.mxu0 0.0
    %1354 = vmatpush1.msra.mxu0 0.0
    %1355 = vmatprep.subr.mxu0 0.0
    %1356 = vmatpush1.msra.mxu0 0.0
    %1357 = vmatprep.subr.mxu0 0.0
    %1358 = vmatpush1.msra.mxu0 0.0
    %1359 = vmatprep.subr.mxu0 0.0
    %1360 = vmatpush1.msra.mxu0 0.0
    %1361 = vmatprep.subr.mxu0 0.0
    %1362 = vmatpush1.msra.mxu0 0.0
    %1363 = vmatprep.subr.mxu0 0.0
    %1364 = vmatpush1.msra.mxu0 0.0
    %1365 = vmatprep.subr.mxu0 0.0
    %1366 = vmatpush1.msra.mxu0 0.0
    %1367 = vmatprep.subr.mxu0 0.0
    %1368 = vmatpush1.msra.mxu0 0.0
    %1369 = vmatprep.subr.mxu0 0.0
    %1370 = vmatpush1.msra.mxu0 0.0
    %1371 = vmatprep.subr.mxu0 0.0
    %1372 = vmatpush1.msra.mxu0 0.0
    %1373 = vmatprep.subr.mxu0 0.0
    %1374 = vmatpush1.msra.mxu0 0.0
    %1375 = vmatprep.mubr.f32.mxu0 0.0
    %1376 = vmatmul.mubr.f32.gmra.mrb[0].mxu0 %v913
    %v1377 = vpop.f32.mrb[0].mxu0
    %v1378 = vadd.f32 %v944, %v1377
    %v1379 = vpop.f32.mrb[0].mxu0
    %1380 = vdwg.mxu0
    %vm1381 = vcmp.ge.f32.partialorder %v1378, 0.0
    %v1382 = vmul.f32 %v1378, 0.2
    %v1383 = vsel %vm1381, %v1378, %v1382
    %1384 = vmatprep.subr.mxu0 0.0
    %1385 = vmatpush1.msra.mxu0 %v923
    %1386 = vmatprep.subr.mxu0 0.0
    %1387 = vmatpush1.msra.mxu0 %v924
    %1388 = vmatprep.subr.mxu0 0.0
    %1389 = vmatpush1.msra.mxu0 %v925
    %1390 = vmatprep.subr.mxu0 0.0
    %1391 = vmatpush1.msra.mxu0 %v926
    %1392 = vmatprep.subr.mxu0 0.0
    %1393 = vmatpush1.msra.mxu0 %v927
    %1394 = vmatprep.subr.mxu0 0.0
    %1395 = vmatpush1.msra.mxu0 %v928
    %1396 = vmatprep.subr.mxu0 0.0
    %1397 = vmatpush1.msra.mxu0 %v929
    %1398 = vmatprep.subr.mxu0 0.0
    %1399 = vmatpush1.msra.mxu0 %v930
    %1400 = vmatprep.subr.mxu0 0.0
    %1401 = vmatpush1.msra.mxu0 %v931
    %1402 = vmatprep.subr.mxu0 0.0
    %1403 = vmatpush1.msra.mxu0 %v932
    %1404 = vmatprep.subr.mxu0 0.0
    %1405 = vmatpush1.msra.mxu0 %v933
    %1406 = vmatprep.subr.mxu0 0.0
    %1407 = vmatpush1.msra.mxu0 %v934
    %1408 = vmatprep.subr.mxu0 0.0
    %1409 = vmatpush1.msra.mxu0 %v935
    %1410 = vmatprep.subr.mxu0 0.0
    %1411 = vmatpush1.msra.mxu0 %v936
    %1412 = vmatprep.subr.mxu0 0.0
    %1413 = vmatpush1.msra.mxu0 %v937
    %1414 = vmatprep.subr.mxu0 0.0
    %1415 = vmatpush1.msra.mxu0 %v938
    %1416 = vmatprep.subr.mxu0 0.0
    %1417 = vmatpush1.msra.mxu0 0.0
    %1418 = vmatprep.subr.mxu0 0.0
    %1419 = vmatpush1.msra.mxu0 0.0
    %1420 = vmatprep.subr.mxu0 0.0
    %1421 = vmatpush1.msra.mxu0 0.0
    %1422 = vmatprep.subr.mxu0 0.0
    %1423 = vmatpush1.msra.mxu0 0.0
    %1424 = vmatprep.subr.mxu0 0.0
    %1425 = vmatpush1.msra.mxu0 0.0
    %1426 = vmatprep.subr.mxu0 0.0
    %1427 = vmatpush1.msra.mxu0 0.0
    %1428 = vmatprep.subr.mxu0 0.0
    %1429 = vmatpush1.msra.mxu0 0.0
    %1430 = vmatprep.subr.mxu0 0.0
    %1431 = vmatpush1.msra.mxu0 0.0
    %1432 = vmatprep.subr.mxu0 0.0
    %1433 = vmatpush1.msra.mxu0 0.0
    %1434 = vmatprep.subr.mxu0 0.0
    %1435 = vmatpush1.msra.mxu0 0.0
    %1436 = vmatprep.subr.mxu0 0.0
    %1437 = vmatpush1.msra.mxu0 0.0
    %1438 = vmatprep.subr.mxu0 0.0
    %1439 = vmatpush1.msra.mxu0 0.0
    %1440 = vmatprep.subr.mxu0 0.0
    %1441 = vmatpush1.msra.mxu0 0.0
    %1442 = vmatprep.subr.mxu0 0.0
    %1443 = vmatpush1.msra.mxu0 0.0
    %1444 = vmatprep.subr.mxu0 0.0
    %1445 = vmatpush1.msra.mxu0 0.0
    %1446 = vmatprep.subr.mxu0 0.0
    %1447 = vmatpush1.msra.mxu0 0.0
    %1448 = vmatprep.mubr.f32.mxu0 0.0
    %1449 = vmatmul.mubr.f32.gmra.mrb[0].mxu0 %v914
    %v1450 = vpop.f32.mrb[0].mxu0
    %v1451 = vadd.f32 %v944, %v1450
    %v1452 = vpop.f32.mrb[0].mxu0
    %1453 = vdwg.mxu0
    %vm1454 = vcmp.ge.f32.partialorder %v1451, 0.0
    %v1455 = vmul.f32 %v1451, 0.2
    %v1456 = vsel %vm1454, %v1451, %v1455
    %1457 = vmatprep.subr.mxu0 0.0
    %1458 = vmatpush1.msra.mxu0 %v923
    %1459 = vmatprep.subr.mxu0 0.0
    %1460 = vmatpush1.msra.mxu0 %v924
    %1461 = vmatprep.subr.mxu0 0.0
    %1462 = vmatpush1.msra.mxu0 %v925
    %1463 = vmatprep.subr.mxu0 0.0
    %1464 = vmatpush1.msra.mxu0 %v926
    %1465 = vmatprep.subr.mxu0 0.0
    %1466 = vmatpush1.msra.mxu0 %v927
    %1467 = vmatprep.subr.mxu0 0.0
    %1468 = vmatpush1.msra.mxu0 %v928
    %1469 = vmatprep.subr.mxu0 0.0
    %1470 = vmatpush1.msra.mxu0 %v929
    %1471 = vmatprep.subr.mxu0 0.0
    %1472 = vmatpush1.msra.mxu0 %v930
    %1473 = vmatprep.subr.mxu0 0.0
    %1474 = vmatpush1.msra.mxu0 %v931
    %1475 = vmatprep.subr.mxu0 0.0
    %1476 = vmatpush1.msra.mxu0 %v932
    %1477 = vmatprep.subr.mxu0 0.0
    %1478 = vmatpush1.msra.mxu0 %v933
    %1479 = vmatprep.subr.mxu0 0.0
    %1480 = vmatpush1.msra.mxu0 %v934
    %1481 = vmatprep.subr.mxu0 0.0
    %1482 = vmatpush1.msra.mxu0 %v935
    %1483 = vmatprep.subr.mxu0 0.0
    %1484 = vmatpush1.msra.mxu0 %v936
    %1485 = vmatprep.subr.mxu0 0.0
    %1486 = vmatpush1.msra.mxu0 %v937
    %1487 = vmatprep.subr.mxu0 0.0
    %1488 = vmatpush1.msra.mxu0 %v938
    %1489 = vmatprep.subr.mxu0 0.0
    %1490 = vmatpush1.msra.mxu0 0.0
    %1491 = vmatprep.subr.mxu0 0.0
    %1492 = vmatpush1.msra.mxu0 0.0
    %1493 = vmatprep.subr.mxu0 0.0
    %1494 = vmatpush1.msra.mxu0 0.0
    %1495 = vmatprep.subr.mxu0 0.0
    %1496 = vmatpush1.msra.mxu0 0.0
    %1497 = vmatprep.subr.mxu0 0.0
    %1498 = vmatpush1.msra.mxu0 0.0
    %1499 = vmatprep.subr.mxu0 0.0
    %1500 = vmatpush1.msra.mxu0 0.0
    %1501 = vmatprep.subr.mxu0 0.0
    %1502 = vmatpush1.msra.mxu0 0.0
    %1503 = vmatprep.subr.mxu0 0.0
    %1504 = vmatpush1.msra.mxu0 0.0
    %1505 = vmatprep.subr.mxu0 0.0
    %1506 = vmatpush1.msra.mxu0 0.0
    %1507 = vmatprep.subr.mxu0 0.0
    %1508 = vmatpush1.msra.mxu0 0.0
    %1509 = vmatprep.subr.mxu0 0.0
    %1510 = vmatpush1.msra.mxu0 0.0
    %1511 = vmatprep.subr.mxu0 0.0
    %1512 = vmatpush1.msra.mxu0 0.0
    %1513 = vmatprep.subr.mxu0 0.0
    %1514 = vmatpush1.msra.mxu0 0.0
    %1515 = vmatprep.subr.mxu0 0.0
    %1516 = vmatpush1.msra.mxu0 0.0
    %1517 = vmatprep.subr.mxu0 0.0
    %1518 = vmatpush1.msra.mxu0 0.0
    %1519 = vmatprep.subr.mxu0 0.0
    %1520 = vmatpush1.msra.mxu0 0.0
    %1521 = vmatprep.mubr.f32.mxu0 0.0
    %1522 = vmatmul.mubr.f32.gmra.mrb[0].mxu0 %v915
    %v1523 = vpop.f32.mrb[0].mxu0
    %v1524 = vadd.f32 %v944, %v1523
    %v1525 = vpop.f32.mrb[0].mxu0
    %1526 = vdwg.mxu0
    %vm1527 = vcmp.ge.f32.partialorder %v1524, 0.0
    %v1528 = vmul.f32 %v1524, 0.2
    %v1529 = vsel %vm1527, %v1524, %v1528
    %1530 = vmatprep.subr.mxu0 0.0
    %1531 = vmatpush1.msra.mxu0 %v923
    %1532 = vmatprep.subr.mxu0 0.0
    %1533 = vmatpush1.msra.mxu0 %v924
    %1534 = vmatprep.subr.mxu0 0.0
    %1535 = vmatpush1.msra.mxu0 %v925
    %1536 = vmatprep.subr.mxu0 0.0
    %1537 = vmatpush1.msra.mxu0 %v926
    %1538 = vmatprep.subr.mxu0 0.0
    %1539 = vmatpush1.msra.mxu0 %v927
    %1540 = vmatprep.subr.mxu0 0.0
    %1541 = vmatpush1.msra.mxu0 %v928
    %1542 = vmatprep.subr.mxu0 0.0
    %1543 = vmatpush1.msra.mxu0 %v929
    %1544 = vmatprep.subr.mxu0 0.0
    %1545 = vmatpush1.msra.mxu0 %v930
    %1546 = vmatprep.subr.mxu0 0.0
    %1547 = vmatpush1.msra.mxu0 %v931
    %1548 = vmatprep.subr.mxu0 0.0
    %1549 = vmatpush1.msra.mxu0 %v932
    %1550 = vmatprep.subr.mxu0 0.0
    %1551 = vmatpush1.msra.mxu0 %v933
    %1552 = vmatprep.subr.mxu0 0.0
    %1553 = vmatpush1.msra.mxu0 %v934
    %1554 = vmatprep.subr.mxu0 0.0
    %1555 = vmatpush1.msra.mxu0 %v935
    %1556 = vmatprep.subr.mxu0 0.0
    %1557 = vmatpush1.msra.mxu0 %v936
    %1558 = vmatprep.subr.mxu0 0.0
    %1559 = vmatpush1.msra.mxu0 %v937
    %1560 = vmatprep.subr.mxu0 0.0
    %1561 = vmatpush1.msra.mxu0 %v938
    %1562 = vmatprep.subr.mxu0 0.0
    %1563 = vmatpush1.msra.mxu0 0.0
    %1564 = vmatprep.subr.mxu0 0.0
    %1565 = vmatpush1.msra.mxu0 0.0
    %1566 = vmatprep.subr.mxu0 0.0
    %1567 = vmatpush1.msra.mxu0 0.0
    %1568 = vmatprep.subr.mxu0 0.0
    %1569 = vmatpush1.msra.mxu0 0.0
    %1570 = vmatprep.subr.mxu0 0.0
    %1571 = vmatpush1.msra.mxu0 0.0
    %1572 = vmatprep.subr.mxu0 0.0
    %1573 = vmatpush1.msra.mxu0 0.0
    %1574 = vmatprep.subr.mxu0 0.0
    %1575 = vmatpush1.msra.mxu0 0.0
    %1576 = vmatprep.subr.mxu0 0.0
    %1577 = vmatpush1.msra.mxu0 0.0
    %1578 = vmatprep.subr.mxu0 0.0
    %1579 = vmatpush1.msra.mxu0 0.0
    %1580 = vmatprep.subr.mxu0 0.0
    %1581 = vmatpush1.msra.mxu0 0.0
    %1582 = vmatprep.subr.mxu0 0.0
    %1583 = vmatpush1.msra.mxu0 0.0
    %1584 = vmatprep.subr.mxu0 0.0
    %1585 = vmatpush1.msra.mxu0 0.0
    %1586 = vmatprep.subr.mxu0 0.0
    %1587 = vmatpush1.msra.mxu0 0.0
    %1588 = vmatprep.subr.mxu0 0.0
    %1589 = vmatpush1.msra.mxu0 0.0
    %1590 = vmatprep.subr.mxu0 0.0
    %1591 = vmatpush1.msra.mxu0 0.0
    %1592 = vmatprep.subr.mxu0 0.0
    %1593 = vmatpush1.msra.mxu0 0.0
    %1594 = vmatprep.mubr.f32.mxu0 0.0
    %1595 = vmatmul.mubr.f32.gmra.mrb[0].mxu0 %v916
    %v1596 = vpop.f32.mrb[0].mxu0
    %v1597 = vadd.f32 %v944, %v1596
    %v1598 = vpop.f32.mrb[0].mxu0
    %1599 = vdwg.mxu0
    %vm1600 = vcmp.ge.f32.partialorder %v1597, 0.0
    %v1601 = vmul.f32 %v1597, 0.2
    %v1602 = vsel %vm1600, %v1597, %v1601
    %1603 = vmatprep.subr.mxu0 0.0
    %1604 = vmatpush1.msra.mxu0 %v923
    %1605 = vmatprep.subr.mxu0 0.0
    %1606 = vmatpush1.msra.mxu0 %v924
    %1607 = vmatprep.subr.mxu0 0.0
    %1608 = vmatpush1.msra.mxu0 %v925
    %1609 = vmatprep.subr.mxu0 0.0
    %1610 = vmatpush1.msra.mxu0 %v926
    %1611 = vmatprep.subr.mxu0 0.0
    %1612 = vmatpush1.msra.mxu0 %v927
    %1613 = vmatprep.subr.mxu0 0.0
    %1614 = vmatpush1.msra.mxu0 %v928
    %1615 = vmatprep.subr.mxu0 0.0
    %1616 = vmatpush1.msra.mxu0 %v929
    %1617 = vmatprep.subr.mxu0 0.0
    %1618 = vmatpush1.msra.mxu0 %v930
    %1619 = vmatprep.subr.mxu0 0.0
    %1620 = vmatpush1.msra.mxu0 %v931
    %1621 = vmatprep.subr.mxu0 0.0
    %1622 = vmatpush1.msra.mxu0 %v932
    %1623 = vmatprep.subr.mxu0 0.0
    %1624 = vmatpush1.msra.mxu0 %v933
    %1625 = vmatprep.subr.mxu0 0.0
    %1626 = vmatpush1.msra.mxu0 %v934
    %1627 = vmatprep.subr.mxu0 0.0
    %1628 = vmatpush1.msra.mxu0 %v935
    %1629 = vmatprep.subr.mxu0 0.0
    %1630 = vmatpush1.msra.mxu0 %v936
    %1631 = vmatprep.subr.mxu0 0.0
    %1632 = vmatpush1.msra.mxu0 %v937
    %1633 = vmatprep.subr.mxu0 0.0
    %1634 = vmatpush1.msra.mxu0 %v938
    %1635 = vmatprep.subr.mxu0 0.0
    %1636 = vmatpush1.msra.mxu0 0.0
    %1637 = vmatprep.subr.mxu0 0.0
    %1638 = vmatpush1.msra.mxu0 0.0
    %1639 = vmatprep.subr.mxu0 0.0
    %1640 = vmatpush1.msra.mxu0 0.0
    %1641 = vmatprep.subr.mxu0 0.0
    %1642 = vmatpush1.msra.mxu0 0.0
    %1643 = vmatprep.subr.mxu0 0.0
    %1644 = vmatpush1.msra.mxu0 0.0
    %1645 = vmatprep.subr.mxu0 0.0
    %1646 = vmatpush1.msra.mxu0 0.0
    %1647 = vmatprep.subr.mxu0 0.0
    %1648 = vmatpush1.msra.mxu0 0.0
    %1649 = vmatprep.subr.mxu0 0.0
    %1650 = vmatpush1.msra.mxu0 0.0
    %1651 = vmatprep.subr.mxu0 0.0
    %1652 = vmatpush1.msra.mxu0 0.0
    %1653 = vmatprep.subr.mxu0 0.0
    %1654 = vmatpush1.msra.mxu0 0.0
    %1655 = vmatprep.subr.mxu0 0.0
    %1656 = vmatpush1.msra.mxu0 0.0
    %1657 = vmatprep.subr.mxu0 0.0
    %1658 = vmatpush1.msra.mxu0 0.0
    %1659 = vmatprep.subr.mxu0 0.0
    %1660 = vmatpush1.msra.mxu0 0.0
    %1661 = vmatprep.subr.mxu0 0.0
    %1662 = vmatpush1.msra.mxu0 0.0
    %1663 = vmatprep.subr.mxu0 0.0
    %1664 = vmatpush1.msra.mxu0 0.0
    %1665 = vmatprep.subr.mxu0 0.0
    %1666 = vmatpush1.msra.mxu0 0.0
    %1667 = vmatprep.mubr.f32.mxu0 0.0
    %1668 = vmatmul.mubr.f32.gmra.mrb[0].mxu0 %v917
    %v1669 = vpop.f32.mrb[0].mxu0
    %v1670 = vadd.f32 %v944, %v1669
    %v1671 = vpop.f32.mrb[0].mxu0
    %1672 = vdwg.mxu0
    %vm1673 = vcmp.ge.f32.partialorder %v1670, 0.0
    %v1674 = vmul.f32 %v1670, 0.2
    %v1675 = vsel %vm1673, %v1670, %v1674
    %1676 = vmatprep.subr.mxu0 0.0
    %1677 = vmatpush1.msra.mxu0 %v923
    %1678 = vmatprep.subr.mxu0 0.0
    %1679 = vmatpush1.msra.mxu0 %v924
    %1680 = vmatprep.subr.mxu0 0.0
    %1681 = vmatpush1.msra.mxu0 %v925
    %1682 = vmatprep.subr.mxu0 0.0
    %1683 = vmatpush1.msra.mxu0 %v926
    %1684 = vmatprep.subr.mxu0 0.0
    %1685 = vmatpush1.msra.mxu0 %v927
    %1686 = vmatprep.subr.mxu0 0.0
    %1687 = vmatpush1.msra.mxu0 %v928
    %1688 = vmatprep.subr.mxu0 0.0
    %1689 = vmatpush1.msra.mxu0 %v929
    %1690 = vmatprep.subr.mxu0 0.0
    %1691 = vmatpush1.msra.mxu0 %v930
    %1692 = vmatprep.subr.mxu0 0.0
    %1693 = vmatpush1.msra.mxu0 %v931
    %1694 = vmatprep.subr.mxu0 0.0
    %1695 = vmatpush1.msra.mxu0 %v932
    %1696 = vmatprep.subr.mxu0 0.0
    %1697 = vmatpush1.msra.mxu0 %v933
    %1698 = vmatprep.subr.mxu0 0.0
    %1699 = vmatpush1.msra.mxu0 %v934
    %1700 = vmatprep.subr.mxu0 0.0
    %1701 = vmatpush1.msra.mxu0 %v935
    %1702 = vmatprep.subr.mxu0 0.0
    %1703 = vmatpush1.msra.mxu0 %v936
    %1704 = vmatprep.subr.mxu0 0.0
    %1705 = vmatpush1.msra.mxu0 %v937
    %1706 = vmatprep.subr.mxu0 0.0
    %1707 = vmatpush1.msra.mxu0 %v938
    %1708 = vmatprep.subr.mxu0 0.0
    %1709 = vmatpush1.msra.mxu0 0.0
    %1710 = vmatprep.subr.mxu0 0.0
    %1711 = vmatpush1.msra.mxu0 0.0
    %1712 = vmatprep.subr.mxu0 0.0
    %1713 = vmatpush1.msra.mxu0 0.0
    %1714 = vmatprep.subr.mxu0 0.0
    %1715 = vmatpush1.msra.mxu0 0.0
    %1716 = vmatprep.subr.mxu0 0.0
    %1717 = vmatpush1.msra.mxu0 0.0
    %1718 = vmatprep.subr.mxu0 0.0
    %1719 = vmatpush1.msra.mxu0 0.0
    %1720 = vmatprep.subr.mxu0 0.0
    %1721 = vmatpush1.msra.mxu0 0.0
    %1722 = vmatprep.subr.mxu0 0.0
    %1723 = vmatpush1.msra.mxu0 0.0
    %1724 = vmatprep.subr.mxu0 0.0
    %1725 = vmatpush1.msra.mxu0 0.0
    %1726 = vmatprep.subr.mxu0 0.0
    %1727 = vmatpush1.msra.mxu0 0.0
    %1728 = vmatprep.subr.mxu0 0.0
    %1729 = vmatpush1.msra.mxu0 0.0
    %1730 = vmatprep.subr.mxu0 0.0
    %1731 = vmatpush1.msra.mxu0 0.0
    %1732 = vmatprep.subr.mxu0 0.0
    %1733 = vmatpush1.msra.mxu0 0.0
    %1734 = vmatprep.subr.mxu0 0.0
    %1735 = vmatpush1.msra.mxu0 0.0
    %1736 = vmatprep.subr.mxu0 0.0
    %1737 = vmatpush1.msra.mxu0 0.0
    %1738 = vmatprep.subr.mxu0 0.0
    %1739 = vmatpush1.msra.mxu0 0.0
    %1740 = vmatprep.mubr.f32.mxu0 0.0
    %1741 = vmatmul.mubr.f32.gmra.mrb[0].mxu0 %v918
    %v1742 = vpop.f32.mrb[0].mxu0
    %v1743 = vadd.f32 %v944, %v1742
    %v1744 = vpop.f32.mrb[0].mxu0
    %1745 = vdwg.mxu0
    %vm1746 = vcmp.ge.f32.partialorder %v1743, 0.0
    %v1747 = vmul.f32 %v1743, 0.2
    %v1748 = vsel %vm1746, %v1743, %v1747
    %1749 = vmatprep.subr.mxu0 0.0
    %1750 = vmatpush1.msra.mxu0 %v923
    %1751 = vmatprep.subr.mxu0 0.0
    %1752 = vmatpush1.msra.mxu0 %v924
    %1753 = vmatprep.subr.mxu0 0.0
    %1754 = vmatpush1.msra.mxu0 %v925
    %1755 = vmatprep.subr.mxu0 0.0
    %1756 = vmatpush1.msra.mxu0 %v926
    %1757 = vmatprep.subr.mxu0 0.0
    %1758 = vmatpush1.msra.mxu0 %v927
    %1759 = vmatprep.subr.mxu0 0.0
    %1760 = vmatpush1.msra.mxu0 %v928
    %1761 = vmatprep.subr.mxu0 0.0
    %1762 = vmatpush1.msra.mxu0 %v929
    %1763 = vmatprep.subr.mxu0 0.0
    %1764 = vmatpush1.msra.mxu0 %v930
    %1765 = vmatprep.subr.mxu0 0.0
    %1766 = vmatpush1.msra.mxu0 %v931
    %1767 = vmatprep.subr.mxu0 0.0
    %1768 = vmatpush1.msra.mxu0 %v932
    %1769 = vmatprep.subr.mxu0 0.0
    %1770 = vmatpush1.msra.mxu0 %v933
    %1771 = vmatprep.subr.mxu0 0.0
    %1772 = vmatpush1.msra.mxu0 %v934
    %1773 = vmatprep.subr.mxu0 0.0
    %1774 = vmatpush1.msra.mxu0 %v935
    %1775 = vmatprep.subr.mxu0 0.0
    %1776 = vmatpush1.msra.mxu0 %v936
    %1777 = vmatprep.subr.mxu0 0.0
    %1778 = vmatpush1.msra.mxu0 %v937
    %1779 = vmatprep.subr.mxu0 0.0
    %1780 = vmatpush1.msra.mxu0 %v938
    %1781 = vmatprep.subr.mxu0 0.0
    %1782 = vmatpush1.msra.mxu0 0.0
    %1783 = vmatprep.subr.mxu0 0.0
    %1784 = vmatpush1.msra.mxu0 0.0
    %1785 = vmatprep.subr.mxu0 0.0
    %1786 = vmatpush1.msra.mxu0 0.0
    %1787 = vmatprep.subr.mxu0 0.0
    %1788 = vmatpush1.msra.mxu0 0.0
    %1789 = vmatprep.subr.mxu0 0.0
    %1790 = vmatpush1.msra.mxu0 0.0
    %1791 = vmatprep.subr.mxu0 0.0
    %1792 = vmatpush1.msra.mxu0 0.0
    %1793 = vmatprep.subr.mxu0 0.0
    %1794 = vmatpush1.msra.mxu0 0.0
    %1795 = vmatprep.subr.mxu0 0.0
    %1796 = vmatpush1.msra.mxu0 0.0
    %1797 = vmatprep.subr.mxu0 0.0
    %1798 = vmatpush1.msra.mxu0 0.0
    %1799 = vmatprep.subr.mxu0 0.0
    %1800 = vmatpush1.msra.mxu0 0.0
    %1801 = vmatprep.subr.mxu0 0.0
    %1802 = vmatpush1.msra.mxu0 0.0
    %1803 = vmatprep.subr.mxu0 0.0
    %1804 = vmatpush1.msra.mxu0 0.0
    %1805 = vmatprep.subr.mxu0 0.0
    %1806 = vmatpush1.msra.mxu0 0.0
    %1807 = vmatprep.subr.mxu0 0.0
    %1808 = vmatpush1.msra.mxu0 0.0
    %1809 = vmatprep.subr.mxu0 0.0
    %1810 = vmatpush1.msra.mxu0 0.0
    %1811 = vmatprep.subr.mxu0 0.0
    %1812 = vmatpush1.msra.mxu0 0.0
    %1813 = vmatprep.mubr.f32.mxu0 0.0
    %1814 = vmatmul.mubr.f32.gmra.mrb[0].mxu0 %v919
    %v1815 = vpop.f32.mrb[0].mxu0
    %v1816 = vadd.f32 %v944, %v1815
    %v1817 = vpop.f32.mrb[0].mxu0
    %1818 = vdwg.mxu0
    %vm1819 = vcmp.ge.f32.partialorder %v1816, 0.0
    %v1820 = vmul.f32 %v1816, 0.2
    %v1821 = vsel %vm1819, %v1816, %v1820
    %1822 = vmatprep.subr.mxu0 0.0
    %1823 = vmatpush1.msra.mxu0 %v923
    %1824 = vmatprep.subr.mxu0 0.0
    %1825 = vmatpush1.msra.mxu0 %v924
    %1826 = vmatprep.subr.mxu0 0.0
    %1827 = vmatpush1.msra.mxu0 %v925
    %1828 = vmatprep.subr.mxu0 0.0
    %1829 = vmatpush1.msra.mxu0 %v926
    %1830 = vmatprep.subr.mxu0 0.0
    %1831 = vmatpush1.msra.mxu0 %v927
    %1832 = vmatprep.subr.mxu0 0.0
    %1833 = vmatpush1.msra.mxu0 %v928
    %1834 = vmatprep.subr.mxu0 0.0
    %1835 = vmatpush1.msra.mxu0 %v929
    %1836 = vmatprep.subr.mxu0 0.0
    %1837 = vmatpush1.msra.mxu0 %v930
    %1838 = vmatprep.subr.mxu0 0.0
    %1839 = vmatpush1.msra.mxu0 %v931
    %1840 = vmatprep.subr.mxu0 0.0
    %1841 = vmatpush1.msra.mxu0 %v932
    %1842 = vmatprep.subr.mxu0 0.0
    %1843 = vmatpush1.msra.mxu0 %v933
    %1844 = vmatprep.subr.mxu0 0.0
    %1845 = vmatpush1.msra.mxu0 %v934
    %1846 = vmatprep.subr.mxu0 0.0
    %1847 = vmatpush1.msra.mxu0 %v935
    %1848 = vmatprep.subr.mxu0 0.0
    %1849 = vmatpush1.msra.mxu0 %v936
    %1850 = vmatprep.subr.mxu0 0.0
    %1851 = vmatpush1.msra.mxu0 %v937
    %1852 = vmatprep.subr.mxu0 0.0
    %1853 = vmatpush1.msra.mxu0 %v938
    %1854 = vmatprep.subr.mxu0 0.0
    %1855 = vmatpush1.msra.mxu0 0.0
    %1856 = vmatprep.subr.mxu0 0.0
    %1857 = vmatpush1.msra.mxu0 0.0
    %1858 = vmatprep.subr.mxu0 0.0
    %1859 = vmatpush1.msra.mxu0 0.0
    %1860 = vmatprep.subr.mxu0 0.0
    %1861 = vmatpush1.msra.mxu0 0.0
    %1862 = vmatprep.subr.mxu0 0.0
    %1863 = vmatpush1.msra.mxu0 0.0
    %1864 = vmatprep.subr.mxu0 0.0
    %1865 = vmatpush1.msra.mxu0 0.0
    %1866 = vmatprep.subr.mxu0 0.0
    %1867 = vmatpush1.msra.mxu0 0.0
    %1868 = vmatprep.subr.mxu0 0.0
    %1869 = vmatpush1.msra.mxu0 0.0
    %1870 = vmatprep.subr.mxu0 0.0
    %1871 = vmatpush1.msra.mxu0 0.0
    %1872 = vmatprep.subr.mxu0 0.0
    %1873 = vmatpush1.msra.mxu0 0.0
    %1874 = vmatprep.subr.mxu0 0.0
    %1875 = vmatpush1.msra.mxu0 0.0
    %1876 = vmatprep.subr.mxu0 0.0
    %1877 = vmatpush1.msra.mxu0 0.0
    %1878 = vmatprep.subr.mxu0 0.0
    %1879 = vmatpush1.msra.mxu0 0.0
    %1880 = vmatprep.subr.mxu0 0.0
    %1881 = vmatpush1.msra.mxu0 0.0
    %1882 = vmatprep.subr.mxu0 0.0
    %1883 = vmatpush1.msra.mxu0 0.0
    %1884 = vmatprep.subr.mxu0 0.0
    %1885 = vmatpush1.msra.mxu0 0.0
    %1886 = vmatprep.mubr.f32.mxu0 0.0
    %1887 = vmatmul.mubr.f32.gmra.mrb[0].mxu0 %v920
    %v1888 = vpop.f32.mrb[0].mxu0
    %v1889 = vadd.f32 %v944, %v1888
    %v1890 = vpop.f32.mrb[0].mxu0
    %1891 = vdwg.mxu0
    %vm1892 = vcmp.ge.f32.partialorder %v1889, 0.0
    %v1893 = vmul.f32 %v1889, 0.2
    %v1894 = vsel %vm1892, %v1889, %v1893
    %1895 = vmatprep.subr.mxu0 0.0
    %1896 = vmatpush1.msra.mxu0 %v923
    %1897 = vmatprep.subr.mxu0 0.0
    %1898 = vmatpush1.msra.mxu0 %v924
    %1899 = vmatprep.subr.mxu0 0.0
    %1900 = vmatpush1.msra.mxu0 %v925
    %1901 = vmatprep.subr.mxu0 0.0
    %1902 = vmatpush1.msra.mxu0 %v926
    %1903 = vmatprep.subr.mxu0 0.0
    %1904 = vmatpush1.msra.mxu0 %v927
    %1905 = vmatprep.subr.mxu0 0.0
    %1906 = vmatpush1.msra.mxu0 %v928
    %1907 = vmatprep.subr.mxu0 0.0
    %1908 = vmatpush1.msra.mxu0 %v929
    %1909 = vmatprep.subr.mxu0 0.0
    %1910 = vmatpush1.msra.mxu0 %v930
    %1911 = vmatprep.subr.mxu0 0.0
    %1912 = vmatpush1.msra.mxu0 %v931
    %1913 = vmatprep.subr.mxu0 0.0
    %1914 = vmatpush1.msra.mxu0 %v932
    %1915 = vmatprep.subr.mxu0 0.0
    %1916 = vmatpush1.msra.mxu0 %v933
    %1917 = vmatprep.subr.mxu0 0.0
    %1918 = vmatpush1.msra.mxu0 %v934
    %1919 = vmatprep.subr.mxu0 0.0
    %1920 = vmatpush1.msra.mxu0 %v935
    %1921 = vmatprep.subr.mxu0 0.0
    %1922 = vmatpush1.msra.mxu0 %v936
    %1923 = vmatprep.subr.mxu0 0.0
    %1924 = vmatpush1.msra.mxu0 %v937
    %1925 = vmatprep.subr.mxu0 0.0
    %1926 = vmatpush1.msra.mxu0 %v938
    %1927 = vmatprep.subr.mxu0 0.0
    %1928 = vmatpush1.msra.mxu0 0.0
    %1929 = vmatprep.subr.mxu0 0.0
    %1930 = vmatpush1.msra.mxu0 0.0
    %1931 = vmatprep.subr.mxu0 0.0
    %1932 = vmatpush1.msra.mxu0 0.0
    %1933 = vmatprep.subr.mxu0 0.0
    %1934 = vmatpush1.msra.mxu0 0.0
    %1935 = vmatprep.subr.mxu0 0.0
    %1936 = vmatpush1.msra.mxu0 0.0
    %1937 = vmatprep.subr.mxu0 0.0
    %1938 = vmatpush1.msra.mxu0 0.0
    %1939 = vmatprep.subr.mxu0 0.0
    %1940 = vmatpush1.msra.mxu0 0.0
    %1941 = vmatprep.subr.mxu0 0.0
    %1942 = vmatpush1.msra.mxu0 0.0
    %1943 = vmatprep.subr.mxu0 0.0
    %1944 = vmatpush1.msra.mxu0 0.0
    %1945 = vmatprep.subr.mxu0 0.0
    %1946 = vmatpush1.msra.mxu0 0.0
    %1947 = vmatprep.subr.mxu0 0.0
    %1948 = vmatpush1.msra.mxu0 0.0
    %1949 = vmatprep.subr.mxu0 0.0
    %1950 = vmatpush1.msra.mxu0 0.0
    %1951 = vmatprep.subr.mxu0 0.0
    %1952 = vmatpush1.msra.mxu0 0.0
    %1953 = vmatprep.subr.mxu0 0.0
    %1954 = vmatpush1.msra.mxu0 0.0
    %1955 = vmatprep.subr.mxu0 0.0
    %1956 = vmatpush1.msra.mxu0 0.0
    %1957 = vmatprep.subr.mxu0 0.0
    %1958 = vmatpush1.msra.mxu0 0.0
    %1959 = vmatprep.mubr.f32.mxu0 0.0
    %1960 = vmatmul.mubr.f32.gmra.mrb[0].mxu0 %v921
    %v1961 = vpop.f32.mrb[0].mxu0
    %v1962 = vadd.f32 %v944, %v1961
    %v1963 = vpop.f32.mrb[0].mxu0
    %1964 = vdwg.mxu0
    %vm1965 = vcmp.ge.f32.partialorder %v1962, 0.0
    %v1966 = vmul.f32 %v1962, 0.2
    %v1967 = vsel %vm1965, %v1962, %v1966
    %1968 = vmatprep.subr.mxu0 0.0
    %1969 = vmatpush1.msra.mxu0 %v923
    %1970 = vmatprep.subr.mxu0 0.0
    %1971 = vmatpush1.msra.mxu0 %v924
    %1972 = vmatprep.subr.mxu0 0.0
    %1973 = vmatpush1.msra.mxu0 %v925
    %1974 = vmatprep.subr.mxu0 0.0
    %1975 = vmatpush1.msra.mxu0 %v926
    %1976 = vmatprep.subr.mxu0 0.0
    %1977 = vmatpush1.msra.mxu0 %v927
    %1978 = vmatprep.subr.mxu0 0.0
    %1979 = vmatpush1.msra.mxu0 %v928
    %1980 = vmatprep.subr.mxu0 0.0
    %1981 = vmatpush1.msra.mxu0 %v929
    %1982 = vmatprep.subr.mxu0 0.0
    %1983 = vmatpush1.msra.mxu0 %v930
    %1984 = vmatprep.subr.mxu0 0.0
    %1985 = vmatpush1.msra.mxu0 %v931
    %1986 = vmatprep.subr.mxu0 0.0
    %1987 = vmatpush1.msra.mxu0 %v932
    %1988 = vmatprep.subr.mxu0 0.0
    %1989 = vmatpush1.msra.mxu0 %v933
    %1990 = vmatprep.subr.mxu0 0.0
    %1991 = vmatpush1.msra.mxu0 %v934
    %1992 = vmatprep.subr.mxu0 0.0
    %1993 = vmatpush1.msra.mxu0 %v935
    %1994 = vmatprep.subr.mxu0 0.0
    %1995 = vmatpush1.msra.mxu0 %v936
    %1996 = vmatprep.subr.mxu0 0.0
    %1997 = vmatpush1.msra.mxu0 %v937
    %1998 = vmatprep.subr.mxu0 0.0
    %1999 = vmatpush1.msra.mxu0 %v938
    %2000 = vmatprep.subr.mxu0 0.0
    %2001 = vmatpush1.msra.mxu0 0.0
    %2002 = vmatprep.subr.mxu0 0.0
    %2003 = vmatpush1.msra.mxu0 0.0
    %2004 = vmatprep.subr.mxu0 0.0
    %2005 = vmatpush1.msra.mxu0 0.0
    %2006 = vmatprep.subr.mxu0 0.0
    %2007 = vmatpush1.msra.mxu0 0.0
    %2008 = vmatprep.subr.mxu0 0.0
    %2009 = vmatpush1.msra.mxu0 0.0
    %2010 = vmatprep.subr.mxu0 0.0
    %2011 = vmatpush1.msra.mxu0 0.0
    %2012 = vmatprep.subr.mxu0 0.0
    %2013 = vmatpush1.msra.mxu0 0.0
    %2014 = vmatprep.subr.mxu0 0.0
    %2015 = vmatpush1.msra.mxu0 0.0
    %2016 = vmatprep.subr.mxu0 0.0
    %2017 = vmatpush1.msra.mxu0 0.0
    %2018 = vmatprep.subr.mxu0 0.0
    %2019 = vmatpush1.msra.mxu0 0.0
    %2020 = vmatprep.subr.mxu0 0.0
    %2021 = vmatpush1.msra.mxu0 0.0
    %2022 = vmatprep.subr.mxu0 0.0
    %2023 = vmatpush1.msra.mxu0 0.0
    %2024 = vmatprep.subr.mxu0 0.0
    %2025 = vmatpush1.msra.mxu0 0.0
    %2026 = vmatprep.subr.mxu0 0.0
    %2027 = vmatpush1.msra.mxu0 0.0
    %2028 = vmatprep.subr.mxu0 0.0
    %2029 = vmatpush1.msra.mxu0 0.0
    %2030 = vmatprep.subr.mxu0 0.0
    %2031 = vmatpush1.msra.mxu0 0.0
    %2032 = vmatprep.mubr.f32.mxu0 0.0
    %2033 = vmatmul.mubr.f32.gmra.mrb[0].mxu0 %v922
    %v2034 = vpop.f32.mrb[0].mxu0
    %v2035 = vadd.f32 %v944, %v2034
    %v2036 = vpop.f32.mrb[0].mxu0
    %2037 = vdwg.mxu0
    %vm2038 = vcmp.ge.f32.partialorder %v2035, 0.0
    %v2039 = vmul.f32 %v2035, 0.2
    %v2040 = vsel %vm2038, %v2035, %v2039
    %v2041 = vld [vmem:[%s6] sm:$0x1]
    %v2042 = vld [vmem:[#allocation7] sm:$0xff]
    %v2043 = vld [vmem:[#allocation7 + $0x8] sm:$0xff]
    %v2044 = vld [vmem:[#allocation7 + $0x10] sm:$0xff]
    %v2045 = vld [vmem:[#allocation7 + $0x18] sm:$0xff]
    %v2046 = vld [vmem:[#allocation7 + $0x20] sm:$0xff]
    %v2047 = vld [vmem:[#allocation7 + $0x28] sm:$0xff]
    %v2048 = vld [vmem:[#allocation7 + $0x30] sm:$0xff]
    %v2049 = vld [vmem:[#allocation7 + $0x38] sm:$0xff]
    %v2050 = vld [vmem:[#allocation7 + $0x40] sm:$0xff]
    %v2051 = vld [vmem:[#allocation7 + $0x48] sm:$0xff]
    %v2052 = vld [vmem:[#allocation7 + $0x50] sm:$0xff]
    %v2053 = vld [vmem:[#allocation7 + $0x58] sm:$0xff]
    %v2054 = vld [vmem:[#allocation7 + $0x60] sm:$0xff]
    %v2055 = vld [vmem:[#allocation7 + $0x68] sm:$0xff]
    %v2056 = vld [vmem:[#allocation7 + $0x70] sm:$0xff]
    %v2057 = vld [vmem:[#allocation7 + $0x78] sm:$0xff]
    %s2058 = scalar_lea.vmem [#allocation7], 128
    %v2059 = vld [vmem:[%s2058] sm:$0xff]
    %v2060 = vld [vmem:[%s2058 + $0x8] sm:$0xff]
    %v2061 = vld [vmem:[%s2058 + $0x10] sm:$0xff]
    %v2062 = vld [vmem:[%s2058 + $0x18] sm:$0xff]
    %v2063 = vld [vmem:[%s2058 + $0x20] sm:$0xff]
    %v2064 = vld [vmem:[%s2058 + $0x28] sm:$0xff]
    %v2065 = vld [vmem:[%s2058 + $0x30] sm:$0xff]
    %v2066 = vld [vmem:[%s2058 + $0x38] sm:$0xff]
    %v2067 = vld [vmem:[%s2058 + $0x40] sm:$0xff]
    %v2068 = vld [vmem:[%s2058 + $0x48] sm:$0xff]
    %v2069 = vld [vmem:[%s2058 + $0x50] sm:$0xff]
    %v2070 = vld [vmem:[%s2058 + $0x58] sm:$0xff]
    %v2071 = vld [vmem:[%s2058 + $0x60] sm:$0xff]
    %v2072 = vld [vmem:[%s2058 + $0x68] sm:$0xff]
    %v2073 = vld [vmem:[%s2058 + $0x70] sm:$0xff]
    %v2074 = vld [vmem:[%s2058 + $0x78] sm:$0xff]
    %2075 = vmatprep.subr.mxu0 0.0
    %2076 = vmatpush1.msra.mxu0 %v2059
    %2077 = vmatprep.subr.mxu0 0.0
    %2078 = vmatpush1.msra.mxu0 %v2060
    %2079 = vmatprep.subr.mxu0 0.0
    %2080 = vmatpush1.msra.mxu0 %v2061
    %2081 = vmatprep.subr.mxu0 0.0
    %2082 = vmatpush1.msra.mxu0 %v2062
    %2083 = vmatprep.subr.mxu0 0.0
    %2084 = vmatpush1.msra.mxu0 %v2063
    %2085 = vmatprep.subr.mxu0 0.0
    %2086 = vmatpush1.msra.mxu0 %v2064
    %2087 = vmatprep.subr.mxu0 0.0
    %2088 = vmatpush1.msra.mxu0 %v2065
    %2089 = vmatprep.subr.mxu0 0.0
    %2090 = vmatpush1.msra.mxu0 %v2066
    %2091 = vmatprep.subr.mxu0 0.0
    %2092 = vmatpush1.msra.mxu0 %v2067
    %2093 = vmatprep.subr.mxu0 0.0
    %2094 = vmatpush1.msra.mxu0 %v2068
    %2095 = vmatprep.subr.mxu0 0.0
    %2096 = vmatpush1.msra.mxu0 %v2069
    %2097 = vmatprep.subr.mxu0 0.0
    %2098 = vmatpush1.msra.mxu0 %v2070
    %2099 = vmatprep.subr.mxu0 0.0
    %2100 = vmatpush1.msra.mxu0 %v2071
    %2101 = vmatprep.subr.mxu0 0.0
    %2102 = vmatpush1.msra.mxu0 %v2072
    %2103 = vmatprep.subr.mxu0 0.0
    %2104 = vmatpush1.msra.mxu0 %v2073
    %2105 = vmatprep.subr.mxu0 0.0
    %2106 = vmatpush1.msra.mxu0 %v2074
    %2107 = vmatprep.subr.mxu0 0.0
    %2108 = vmatpush1.msra.mxu0 0.0
    %2109 = vmatprep.subr.mxu0 0.0
    %2110 = vmatpush1.msra.mxu0 0.0
    %2111 = vmatprep.subr.mxu0 0.0
    %2112 = vmatpush1.msra.mxu0 0.0
    %2113 = vmatprep.subr.mxu0 0.0
    %2114 = vmatpush1.msra.mxu0 0.0
    %2115 = vmatprep.subr.mxu0 0.0
    %2116 = vmatpush1.msra.mxu0 0.0
    %2117 = vmatprep.subr.mxu0 0.0
    %2118 = vmatpush1.msra.mxu0 0.0
    %2119 = vmatprep.subr.mxu0 0.0
    %2120 = vmatpush1.msra.mxu0 0.0
    %2121 = vmatprep.subr.mxu0 0.0
    %2122 = vmatpush1.msra.mxu0 0.0
    %2123 = vmatprep.subr.mxu0 0.0
    %2124 = vmatpush1.msra.mxu0 0.0
    %2125 = vmatprep.subr.mxu0 0.0
    %2126 = vmatpush1.msra.mxu0 0.0
    %2127 = vmatprep.subr.mxu0 0.0
    %2128 = vmatpush1.msra.mxu0 0.0
    %2129 = vmatprep.subr.mxu0 0.0
    %2130 = vmatpush1.msra.mxu0 0.0
    %2131 = vmatprep.subr.mxu0 0.0
    %2132 = vmatpush1.msra.mxu0 0.0
    %2133 = vmatprep.subr.mxu0 0.0
    %2134 = vmatpush1.msra.mxu0 0.0
    %2135 = vmatprep.subr.mxu0 0.0
    %2136 = vmatpush1.msra.mxu0 0.0
    %2137 = vmatprep.subr.mxu0 0.0
    %2138 = vmatpush1.msra.mxu0 0.0
    %2139 = vmatprep.mubr.f32.mxu0 0.0
    %2140 = vmatmul.mubr.f32.gmra.mrb[0].mxu0 %v1091
    %v2141 = vpop.f32.mrb[0].mxu0
    %v2142 = vadd.f32 0.0, %v2141
    %v2143 = vpop.f32.mrb[0].mxu0
    %2144 = vdwg.mxu0
    %2145 = vmatprep.subr.mxu0 0.0
    %2146 = vmatpush1.msra.mxu0 %v2042
    %2147 = vmatprep.subr.mxu0 0.0
    %2148 = vmatpush1.msra.mxu0 %v2043
    %2149 = vmatprep.subr.mxu0 0.0
    %2150 = vmatpush1.msra.mxu0 %v2044
    %2151 = vmatprep.subr.mxu0 0.0
    %2152 = vmatpush1.msra.mxu0 %v2045
    %2153 = vmatprep.subr.mxu0 0.0
    %2154 = vmatpush1.msra.mxu0 %v2046
    %2155 = vmatprep.subr.mxu0 0.0
    %2156 = vmatpush1.msra.mxu0 %v2047
    %2157 = vmatprep.subr.mxu0 0.0
    %2158 = vmatpush1.msra.mxu0 %v2048
    %2159 = vmatprep.subr.mxu0 0.0
    %2160 = vmatpush1.msra.mxu0 %v2049
    %2161 = vmatprep.subr.mxu0 0.0
    %2162 = vmatpush1.msra.mxu0 %v2050
    %2163 = vmatprep.subr.mxu0 0.0
    %2164 = vmatpush1.msra.mxu0 %v2051
    %2165 = vmatprep.subr.mxu0 0.0
    %2166 = vmatpush1.msra.mxu0 %v2052
    %2167 = vmatprep.subr.mxu0 0.0
    %2168 = vmatpush1.msra.mxu0 %v2053
    %2169 = vmatprep.subr.mxu0 0.0
    %2170 = vmatpush1.msra.mxu0 %v2054
    %2171 = vmatprep.subr.mxu0 0.0
    %2172 = vmatpush1.msra.mxu0 %v2055
    %2173 = vmatprep.subr.mxu0 0.0
    %2174 = vmatpush1.msra.mxu0 %v2056
    %2175 = vmatprep.subr.mxu0 0.0
    %2176 = vmatpush1.msra.mxu0 %v2057
    %2177 = vmatprep.subr.mxu0 0.0
    %2178 = vmatpush1.msra.mxu0 0.0
    %2179 = vmatprep.subr.mxu0 0.0
    %2180 = vmatpush1.msra.mxu0 0.0
    %2181 = vmatprep.subr.mxu0 0.0
    %2182 = vmatpush1.msra.mxu0 0.0
    %2183 = vmatprep.subr.mxu0 0.0
    %2184 = vmatpush1.msra.mxu0 0.0
    %2185 = vmatprep.subr.mxu0 0.0
    %2186 = vmatpush1.msra.mxu0 0.0
    %2187 = vmatprep.subr.mxu0 0.0
    %2188 = vmatpush1.msra.mxu0 0.0
    %2189 = vmatprep.subr.mxu0 0.0
    %2190 = vmatpush1.msra.mxu0 0.0
    %2191 = vmatprep.subr.mxu0 0.0
    %2192 = vmatpush1.msra.mxu0 0.0
    %2193 = vmatprep.subr.mxu0 0.0
    %2194 = vmatpush1.msra.mxu0 0.0
    %2195 = vmatprep.subr.mxu0 0.0
    %2196 = vmatpush1.msra.mxu0 0.0
    %2197 = vmatprep.subr.mxu0 0.0
    %2198 = vmatpush1.msra.mxu0 0.0
    %2199 = vmatprep.subr.mxu0 0.0
    %2200 = vmatpush1.msra.mxu0 0.0
    %2201 = vmatprep.subr.mxu0 0.0
    %2202 = vmatpush1.msra.mxu0 0.0
    %2203 = vmatprep.subr.mxu0 0.0
    %2204 = vmatpush1.msra.mxu0 0.0
    %2205 = vmatprep.subr.mxu0 0.0
    %2206 = vmatpush1.msra.mxu0 0.0
    %2207 = vmatprep.subr.mxu0 0.0
    %2208 = vmatpush1.msra.mxu0 0.0
    %2209 = vmatprep.mubr.f32.mxu0 0.0
    %2210 = vmatmul.mubr.f32.gmra.mrb[0].mxu0 %v1018
    %v2211 = vpop.f32.mrb[0].mxu0
    %v2212 = vadd.f32 %v2142, %v2211
    %v2213 = vpop.f32.mrb[0].mxu0
    %2214 = vdwg.mxu0
    %s2215 = scalar_lea.vmem [#allocation7], 256
    %v2216 = vld [vmem:[%s2215] sm:$0xff]
    %v2217 = vld [vmem:[%s2215 + $0x8] sm:$0xff]
    %v2218 = vld [vmem:[%s2215 + $0x10] sm:$0xff]
    %v2219 = vld [vmem:[%s2215 + $0x18] sm:$0xff]
    %v2220 = vld [vmem:[%s2215 + $0x20] sm:$0xff]
    %v2221 = vld [vmem:[%s2215 + $0x28] sm:$0xff]
    %v2222 = vld [vmem:[%s2215 + $0x30] sm:$0xff]
    %v2223 = vld [vmem:[%s2215 + $0x38] sm:$0xff]
    %v2224 = vld [vmem:[%s2215 + $0x40] sm:$0xff]
    %v2225 = vld [vmem:[%s2215 + $0x48] sm:$0xff]
    %v2226 = vld [vmem:[%s2215 + $0x50] sm:$0xff]
    %v2227 = vld [vmem:[%s2215 + $0x58] sm:$0xff]
    %v2228 = vld [vmem:[%s2215 + $0x60] sm:$0xff]
    %v2229 = vld [vmem:[%s2215 + $0x68] sm:$0xff]
    %v2230 = vld [vmem:[%s2215 + $0x70] sm:$0xff]
    %v2231 = vld [vmem:[%s2215 + $0x78] sm:$0xff]
    %2232 = vmatprep.subr.mxu0 0.0
    %2233 = vmatpush1.msra.mxu0 %v2216
    %2234 = vmatprep.subr.mxu0 0.0
    %2235 = vmatpush1.msra.mxu0 %v2217
    %2236 = vmatprep.subr.mxu0 0.0
    %2237 = vmatpush1.msra.mxu0 %v2218
    %2238 = vmatprep.subr.mxu0 0.0
    %2239 = vmatpush1.msra.mxu0 %v2219
    %2240 = vmatprep.subr.mxu0 0.0
    %2241 = vmatpush1.msra.mxu0 %v2220
    %2242 = vmatprep.subr.mxu0 0.0
    %2243 = vmatpush1.msra.mxu0 %v2221
    %2244 = vmatprep.subr.mxu0 0.0
    %2245 = vmatpush1.msra.mxu0 %v2222
    %2246 = vmatprep.subr.mxu0 0.0
    %2247 = vmatpush1.msra.mxu0 %v2223
    %2248 = vmatprep.subr.mxu0 0.0
    %2249 = vmatpush1.msra.mxu0 %v2224
    %2250 = vmatprep.subr.mxu0 0.0
    %2251 = vmatpush1.msra.mxu0 %v2225
    %2252 = vmatprep.subr.mxu0 0.0
    %2253 = vmatpush1.msra.mxu0 %v2226
    %2254 = vmatprep.subr.mxu0 0.0
    %2255 = vmatpush1.msra.mxu0 %v2227
    %2256 = vmatprep.subr.mxu0 0.0
    %2257 = vmatpush1.msra.mxu0 %v2228
    %2258 = vmatprep.subr.mxu0 0.0
    %2259 = vmatpush1.msra.mxu0 %v2229
    %2260 = vmatprep.subr.mxu0 0.0
    %2261 = vmatpush1.msra.mxu0 %v2230
    %2262 = vmatprep.subr.mxu0 0.0
    %2263 = vmatpush1.msra.mxu0 %v2231
    %2264 = vmatprep.subr.mxu0 0.0
    %2265 = vmatpush1.msra.mxu0 0.0
    %2266 = vmatprep.subr.mxu0 0.0
    %2267 = vmatpush1.msra.mxu0 0.0
    %2268 = vmatprep.subr.mxu0 0.0
    %2269 = vmatpush1.msra.mxu0 0.0
    %2270 = vmatprep.subr.mxu0 0.0
    %2271 = vmatpush1.msra.mxu0 0.0
    %2272 = vmatprep.subr.mxu0 0.0
    %2273 = vmatpush1.msra.mxu0 0.0
    %2274 = vmatprep.subr.mxu0 0.0
    %2275 = vmatpush1.msra.mxu0 0.0
    %2276 = vmatprep.subr.mxu0 0.0
    %2277 = vmatpush1.msra.mxu0 0.0
    %2278 = vmatprep.subr.mxu0 0.0
    %2279 = vmatpush1.msra.mxu0 0.0
    %2280 = vmatprep.subr.mxu0 0.0
    %2281 = vmatpush1.msra.mxu0 0.0
    %2282 = vmatprep.subr.mxu0 0.0
    %2283 = vmatpush1.msra.mxu0 0.0
    %2284 = vmatprep.subr.mxu0 0.0
    %2285 = vmatpush1.msra.mxu0 0.0
    %2286 = vmatprep.subr.mxu0 0.0
    %2287 = vmatpush1.msra.mxu0 0.0
    %2288 = vmatprep.subr.mxu0 0.0
    %2289 = vmatpush1.msra.mxu0 0.0
    %2290 = vmatprep.subr.mxu0 0.0
    %2291 = vmatpush1.msra.mxu0 0.0
    %2292 = vmatprep.subr.mxu0 0.0
    %2293 = vmatpush1.msra.mxu0 0.0
    %2294 = vmatprep.subr.mxu0 0.0
    %2295 = vmatpush1.msra.mxu0 0.0
    %2296 = vmatprep.mubr.f32.mxu0 0.0
    %2297 = vmatmul.mubr.f32.gmra.mrb[0].mxu0 %v1164
    %v2298 = vpop.f32.mrb[0].mxu0
    %v2299 = vadd.f32 0.0, %v2298
    %v2300 = vpop.f32.mrb[0].mxu0
    %2301 = vdwg.mxu0
    %v2302 = vadd.f32 %v2212, %v2299
    %v2304 = vlaneseq
    %v2305 = vshrl.u32 %v2304, 7
    %v2306 = vsub.s32 0, %v2305
    %v2307 = vrot.slane %v2041, %v2306
    %v2309 = vadd.f32 %v2302, %v2307
    %vm2310 = vcmp.ge.f32.partialorder %v2309, 0.0
    %v2311 = vmul.f32 %v2309, 0.2
    %v2312 = vsel %vm2310, %v2309, %v2311
    %v2313 = vld [vmem:[#allocation9] sm:$0xff]
    %v2314 = vld [vmem:[#allocation9 + $0x8] sm:$0xff]
    %v2315 = vld [vmem:[#allocation9 + $0x10] sm:$0xff]
    %v2316 = vld [vmem:[#allocation9 + $0x18] sm:$0xff]
    %v2317 = vld [vmem:[#allocation9 + $0x20] sm:$0xff]
    %v2318 = vld [vmem:[#allocation9 + $0x28] sm:$0xff]
    %v2319 = vld [vmem:[#allocation9 + $0x30] sm:$0xff]
    %v2320 = vld [vmem:[#allocation9 + $0x38] sm:$0xff]
    %v2321 = vld [vmem:[#allocation9 + $0x40] sm:$0xff]
    %v2322 = vld [vmem:[#allocation9 + $0x48] sm:$0xff]
    %v2323 = vld [vmem:[#allocation9 + $0x50] sm:$0xff]
    %v2324 = vld [vmem:[#allocation9 + $0x58] sm:$0xff]
    %v2325 = vld [vmem:[#allocation9 + $0x60] sm:$0xff]
    %v2326 = vld [vmem:[#allocation9 + $0x68] sm:$0xff]
    %v2327 = vld [vmem:[#allocation9 + $0x70] sm:$0xff]
    %v2328 = vld [vmem:[#allocation9 + $0x78] sm:$0xff]
    %2329 = vmatprep.subr.mxu0 0.0
    %2330 = vmatpush1.msra.mxu0 %v2059
    %2331 = vmatprep.subr.mxu0 0.0
    %2332 = vmatpush1.msra.mxu0 %v2060
    %2333 = vmatprep.subr.mxu0 0.0
    %2334 = vmatpush1.msra.mxu0 %v2061
    %2335 = vmatprep.subr.mxu0 0.0
    %2336 = vmatpush1.msra.mxu0 %v2062
    %2337 = vmatprep.subr.mxu0 0.0
    %2338 = vmatpush1.msra.mxu0 %v2063
    %2339 = vmatprep.subr.mxu0 0.0
    %2340 = vmatpush1.msra.mxu0 %v2064
    %2341 = vmatprep.subr.mxu0 0.0
    %2342 = vmatpush1.msra.mxu0 %v2065
    %2343 = vmatprep.subr.mxu0 0.0
    %2344 = vmatpush1.msra.mxu0 %v2066
    %2345 = vmatprep.subr.mxu0 0.0
    %2346 = vmatpush1.msra.mxu0 %v2067
    %2347 = vmatprep.subr.mxu0 0.0
    %2348 = vmatpush1.msra.mxu0 %v2068
    %2349 = vmatprep.subr.mxu0 0.0
    %2350 = vmatpush1.msra.mxu0 %v2069
    %2351 = vmatprep.subr.mxu0 0.0
    %2352 = vmatpush1.msra.mxu0 %v2070
    %2353 = vmatprep.subr.mxu0 0.0
    %2354 = vmatpush1.msra.mxu0 %v2071
    %2355 = vmatprep.subr.mxu0 0.0
    %2356 = vmatpush1.msra.mxu0 %v2072
    %2357 = vmatprep.subr.mxu0 0.0
    %2358 = vmatpush1.msra.mxu0 %v2073
    %2359 = vmatprep.subr.mxu0 0.0
    %2360 = vmatpush1.msra.mxu0 %v2074
    %2361 = vmatprep.subr.mxu0 0.0
    %2362 = vmatpush1.msra.mxu0 0.0
    %2363 = vmatprep.subr.mxu0 0.0
    %2364 = vmatpush1.msra.mxu0 0.0
    %2365 = vmatprep.subr.mxu0 0.0
    %2366 = vmatpush1.msra.mxu0 0.0
    %2367 = vmatprep.subr.mxu0 0.0
    %2368 = vmatpush1.msra.mxu0 0.0
    %2369 = vmatprep.subr.mxu0 0.0
    %2370 = vmatpush1.msra.mxu0 0.0
    %2371 = vmatprep.subr.mxu0 0.0
    %2372 = vmatpush1.msra.mxu0 0.0
    %2373 = vmatprep.subr.mxu0 0.0
    %2374 = vmatpush1.msra.mxu0 0.0
    %2375 = vmatprep.subr.mxu0 0.0
    %2376 = vmatpush1.msra.mxu0 0.0
    %2377 = vmatprep.subr.mxu0 0.0
    %2378 = vmatpush1.msra.mxu0 0.0
    %2379 = vmatprep.subr.mxu0 0.0
    %2380 = vmatpush1.msra.mxu0 0.0
    %2381 = vmatprep.subr.mxu0 0.0
    %2382 = vmatpush1.msra.mxu0 0.0
    %2383 = vmatprep.subr.mxu0 0.0
    %2384 = vmatpush1.msra.mxu0 0.0
    %2385 = vmatprep.subr.mxu0 0.0
    %2386 = vmatpush1.msra.mxu0 0.0
    %2387 = vmatprep.subr.mxu0 0.0
    %2388 = vmatpush1.msra.mxu0 0.0
    %2389 = vmatprep.subr.mxu0 0.0
    %2390 = vmatpush1.msra.mxu0 0.0
    %2391 = vmatprep.subr.mxu0 0.0
    %2392 = vmatpush1.msra.mxu0 0.0
    %2393 = vmatprep.mubr.f32.mxu0 0.0
    %2394 = vmatmul.mubr.f32.gmra.mrb[0].mxu0 %v1237
    %v2395 = vpop.f32.mrb[0].mxu0
    %v2396 = vadd.f32 0.0, %v2395
    %v2397 = vpop.f32.mrb[0].mxu0
    %2398 = vdwg.mxu0
    %2399 = vmatprep.subr.mxu0 0.0
    %2400 = vmatpush1.msra.mxu0 %v2042
    %2401 = vmatprep.subr.mxu0 0.0
    %2402 = vmatpush1.msra.mxu0 %v2043
    %2403 = vmatprep.subr.mxu0 0.0
    %2404 = vmatpush1.msra.mxu0 %v2044
    %2405 = vmatprep.subr.mxu0 0.0
    %2406 = vmatpush1.msra.mxu0 %v2045
    %2407 = vmatprep.subr.mxu0 0.0
    %2408 = vmatpush1.msra.mxu0 %v2046
    %2409 = vmatprep.subr.mxu0 0.0
    %2410 = vmatpush1.msra.mxu0 %v2047
    %2411 = vmatprep.subr.mxu0 0.0
    %2412 = vmatpush1.msra.mxu0 %v2048
    %2413 = vmatprep.subr.mxu0 0.0
    %2414 = vmatpush1.msra.mxu0 %v2049
    %2415 = vmatprep.subr.mxu0 0.0
    %2416 = vmatpush1.msra.mxu0 %v2050
    %2417 = vmatprep.subr.mxu0 0.0
    %2418 = vmatpush1.msra.mxu0 %v2051
    %2419 = vmatprep.subr.mxu0 0.0
    %2420 = vmatpush1.msra.mxu0 %v2052
    %2421 = vmatprep.subr.mxu0 0.0
    %2422 = vmatpush1.msra.mxu0 %v2053
    %2423 = vmatprep.subr.mxu0 0.0
    %2424 = vmatpush1.msra.mxu0 %v2054
    %2425 = vmatprep.subr.mxu0 0.0
    %2426 = vmatpush1.msra.mxu0 %v2055
    %2427 = vmatprep.subr.mxu0 0.0
    %2428 = vmatpush1.msra.mxu0 %v2056
    %2429 = vmatprep.subr.mxu0 0.0
    %2430 = vmatpush1.msra.mxu0 %v2057
    %2431 = vmatprep.subr.mxu0 0.0
    %2432 = vmatpush1.msra.mxu0 0.0
    %2433 = vmatprep.subr.mxu0 0.0
    %2434 = vmatpush1.msra.mxu0 0.0
    %2435 = vmatprep.subr.mxu0 0.0
    %2436 = vmatpush1.msra.mxu0 0.0
    %2437 = vmatprep.subr.mxu0 0.0
    %2438 = vmatpush1.msra.mxu0 0.0
    %2439 = vmatprep.subr.mxu0 0.0
    %2440 = vmatpush1.msra.mxu0 0.0
    %2441 = vmatprep.subr.mxu0 0.0
    %2442 = vmatpush1.msra.mxu0 0.0
    %2443 = vmatprep.subr.mxu0 0.0
    %2444 = vmatpush1.msra.mxu0 0.0
    %2445 = vmatprep.subr.mxu0 0.0
    %2446 = vmatpush1.msra.mxu0 0.0
    %2447 = vmatprep.subr.mxu0 0.0
    %2448 = vmatpush1.msra.mxu0 0.0
    %2449 = vmatprep.subr.mxu0 0.0
    %2450 = vmatpush1.msra.mxu0 0.0
    %2451 = vmatprep.subr.mxu0 0.0
    %2452 = vmatpush1.msra.mxu0 0.0
    %2453 = vmatprep.subr.mxu0 0.0
    %2454 = vmatpush1.msra.mxu0 0.0
    %2455 = vmatprep.subr.mxu0 0.0
    %2456 = vmatpush1.msra.mxu0 0.0
    %2457 = vmatprep.subr.mxu0 0.0
    %2458 = vmatpush1.msra.mxu0 0.0
    %2459 = vmatprep.subr.mxu0 0.0
    %2460 = vmatpush1.msra.mxu0 0.0
    %2461 = vmatprep.subr.mxu0 0.0
    %2462 = vmatpush1.msra.mxu0 0.0
    %2463 = vmatprep.mubr.f32.mxu0 0.0
    %2464 = vmatmul.mubr.f32.gmra.mrb[0].mxu0 %v1164
    %v2465 = vpop.f32.mrb[0].mxu0
    %v2466 = vadd.f32 %v2396, %v2465
    %v2467 = vpop.f32.mrb[0].mxu0
    %2468 = vdwg.mxu0
    %2469 = vmatprep.subr.mxu0 0.0
    %2470 = vmatpush1.msra.mxu0 %v2216
    %2471 = vmatprep.subr.mxu0 0.0
    %2472 = vmatpush1.msra.mxu0 %v2217
    %2473 = vmatprep.subr.mxu0 0.0
    %2474 = vmatpush1.msra.mxu0 %v2218
    %2475 = vmatprep.subr.mxu0 0.0
    %2476 = vmatpush1.msra.mxu0 %v2219
    %2477 = vmatprep.subr.mxu0 0.0
    %2478 = vmatpush1.msra.mxu0 %v2220
    %2479 = vmatprep.subr.mxu0 0.0
    %2480 = vmatpush1.msra.mxu0 %v2221
    %2481 = vmatprep.subr.mxu0 0.0
    %2482 = vmatpush1.msra.mxu0 %v2222
    %2483 = vmatprep.subr.mxu0 0.0
    %2484 = vmatpush1.msra.mxu0 %v2223
    %2485 = vmatprep.subr.mxu0 0.0
    %2486 = vmatpush1.msra.mxu0 %v2224
    %2487 = vmatprep.subr.mxu0 0.0
    %2488 = vmatpush1.msra.mxu0 %v2225
    %2489 = vmatprep.subr.mxu0 0.0
    %2490 = vmatpush1.msra.mxu0 %v2226
    %2491 = vmatprep.subr.mxu0 0.0
    %2492 = vmatpush1.msra.mxu0 %v2227
    %2493 = vmatprep.subr.mxu0 0.0
    %2494 = vmatpush1.msra.mxu0 %v2228
    %2495 = vmatprep.subr.mxu0 0.0
    %2496 = vmatpush1.msra.mxu0 %v2229
    %2497 = vmatprep.subr.mxu0 0.0
    %2498 = vmatpush1.msra.mxu0 %v2230
    %2499 = vmatprep.subr.mxu0 0.0
    %2500 = vmatpush1.msra.mxu0 %v2231
    %2501 = vmatprep.subr.mxu0 0.0
    %2502 = vmatpush1.msra.mxu0 0.0
    %2503 = vmatprep.subr.mxu0 0.0
    %2504 = vmatpush1.msra.mxu0 0.0
    %2505 = vmatprep.subr.mxu0 0.0
    %2506 = vmatpush1.msra.mxu0 0.0
    %2507 = vmatprep.subr.mxu0 0.0
    %2508 = vmatpush1.msra.mxu0 0.0
    %2509 = vmatprep.subr.mxu0 0.0
    %2510 = vmatpush1.msra.mxu0 0.0
    %2511 = vmatprep.subr.mxu0 0.0
    %2512 = vmatpush1.msra.mxu0 0.0
    %2513 = vmatprep.subr.mxu0 0.0
    %2514 = vmatpush1.msra.mxu0 0.0
    %2515 = vmatprep.subr.mxu0 0.0
    %2516 = vmatpush1.msra.mxu0 0.0
    %2517 = vmatprep.subr.mxu0 0.0
    %2518 = vmatpush1.msra.mxu0 0.0
    %2519 = vmatprep.subr.mxu0 0.0
    %2520 = vmatpush1.msra.mxu0 0.0
    %2521 = vmatprep.subr.mxu0 0.0
    %2522 = vmatpush1.msra.mxu0 0.0
    %2523 = vmatprep.subr.mxu0 0.0
    %2524 = vmatpush1.msra.mxu0 0.0
    %2525 = vmatprep.subr.mxu0 0.0
    %2526 = vmatpush1.msra.mxu0 0.0
    %2527 = vmatprep.subr.mxu0 0.0
    %2528 = vmatpush1.msra.mxu0 0.0
    %2529 = vmatprep.subr.mxu0 0.0
    %2530 = vmatpush1.msra.mxu0 0.0
    %2531 = vmatprep.subr.mxu0 0.0
    %2532 = vmatpush1.msra.mxu0 0.0
    %2533 = vmatprep.mubr.f32.mxu0 0.0
    %2534 = vmatmul.mubr.f32.gmra.mrb[0].mxu0 %v1310
    %v2535 = vpop.f32.mrb[0].mxu0
    %v2536 = vadd.f32 0.0, %v2535
    %v2537 = vpop.f32.mrb[0].mxu0
    %2538 = vdwg.mxu0
    %v2539 = vadd.f32 %v2466, %v2536
    %v2540 = vadd.f32 %v2539, %v2307
    %vm2541 = vcmp.ge.f32.partialorder %v2540, 0.0
    %v2542 = vmul.f32 %v2540, 0.2
    %v2543 = vsel %vm2541, %v2540, %v2542
    %s2544 = scalar_lea.vmem [#allocation9], 128
    %v2545 = vld [vmem:[%s2544] sm:$0xff]
    %v2546 = vld [vmem:[%s2544 + $0x8] sm:$0xff]
    %v2547 = vld [vmem:[%s2544 + $0x10] sm:$0xff]
    %v2548 = vld [vmem:[%s2544 + $0x18] sm:$0xff]
    %v2549 = vld [vmem:[%s2544 + $0x20] sm:$0xff]
    %v2550 = vld [vmem:[%s2544 + $0x28] sm:$0xff]
    %v2551 = vld [vmem:[%s2544 + $0x30] sm:$0xff]
    %v2552 = vld [vmem:[%s2544 + $0x38] sm:$0xff]
    %v2553 = vld [vmem:[%s2544 + $0x40] sm:$0xff]
    %v2554 = vld [vmem:[%s2544 + $0x48] sm:$0xff]
    %v2555 = vld [vmem:[%s2544 + $0x50] sm:$0xff]
    %v2556 = vld [vmem:[%s2544 + $0x58] sm:$0xff]
    %v2557 = vld [vmem:[%s2544 + $0x60] sm:$0xff]
    %v2558 = vld [vmem:[%s2544 + $0x68] sm:$0xff]
    %v2559 = vld [vmem:[%s2544 + $0x70] sm:$0xff]
    %v2560 = vld [vmem:[%s2544 + $0x78] sm:$0xff]
    %2561 = vmatprep.subr.mxu0 0.0
    %2562 = vmatpush1.msra.mxu0 %v2545
    %2563 = vmatprep.subr.mxu0 0.0
    %2564 = vmatpush1.msra.mxu0 %v2546
    %2565 = vmatprep.subr.mxu0 0.0
    %2566 = vmatpush1.msra.mxu0 %v2547
    %2567 = vmatprep.subr.mxu0 0.0
    %2568 = vmatpush1.msra.mxu0 %v2548
    %2569 = vmatprep.subr.mxu0 0.0
    %2570 = vmatpush1.msra.mxu0 %v2549
    %2571 = vmatprep.subr.mxu0 0.0
    %2572 = vmatpush1.msra.mxu0 %v2550
    %2573 = vmatprep.subr.mxu0 0.0
    %2574 = vmatpush1.msra.mxu0 %v2551
    %2575 = vmatprep.subr.mxu0 0.0
    %2576 = vmatpush1.msra.mxu0 %v2552
    %2577 = vmatprep.subr.mxu0 0.0
    %2578 = vmatpush1.msra.mxu0 %v2553
    %2579 = vmatprep.subr.mxu0 0.0
    %2580 = vmatpush1.msra.mxu0 %v2554
    %2581 = vmatprep.subr.mxu0 0.0
    %2582 = vmatpush1.msra.mxu0 %v2555
    %2583 = vmatprep.subr.mxu0 0.0
    %2584 = vmatpush1.msra.mxu0 %v2556
    %2585 = vmatprep.subr.mxu0 0.0
    %2586 = vmatpush1.msra.mxu0 %v2557
    %2587 = vmatprep.subr.mxu0 0.0
    %2588 = vmatpush1.msra.mxu0 %v2558
    %2589 = vmatprep.subr.mxu0 0.0
    %2590 = vmatpush1.msra.mxu0 %v2559
    %2591 = vmatprep.subr.mxu0 0.0
    %2592 = vmatpush1.msra.mxu0 %v2560
    %2593 = vmatprep.subr.mxu0 0.0
    %2594 = vmatpush1.msra.mxu0 0.0
    %2595 = vmatprep.subr.mxu0 0.0
    %2596 = vmatpush1.msra.mxu0 0.0
    %2597 = vmatprep.subr.mxu0 0.0
    %2598 = vmatpush1.msra.mxu0 0.0
    %2599 = vmatprep.subr.mxu0 0.0
    %2600 = vmatpush1.msra.mxu0 0.0
    %2601 = vmatprep.subr.mxu0 0.0
    %2602 = vmatpush1.msra.mxu0 0.0
    %2603 = vmatprep.subr.mxu0 0.0
    %2604 = vmatpush1.msra.mxu0 0.0
    %2605 = vmatprep.subr.mxu0 0.0
    %2606 = vmatpush1.msra.mxu0 0.0
    %2607 = vmatprep.subr.mxu0 0.0
    %2608 = vmatpush1.msra.mxu0 0.0
    %2609 = vmatprep.subr.mxu0 0.0
    %2610 = vmatpush1.msra.mxu0 0.0
    %2611 = vmatprep.subr.mxu0 0.0
    %2612 = vmatpush1.msra.mxu0 0.0
    %2613 = vmatprep.subr.mxu0 0.0
    %2614 = vmatpush1.msra.mxu0 0.0
    %2615 = vmatprep.subr.mxu0 0.0
    %2616 = vmatpush1.msra.mxu0 0.0
    %2617 = vmatprep.subr.mxu0 0.0
    %2618 = vmatpush1.msra.mxu0 0.0
    %2619 = vmatprep.subr.mxu0 0.0
    %2620 = vmatpush1.msra.mxu0 0.0
    %2621 = vmatprep.subr.mxu0 0.0
    %2622 = vmatpush1.msra.mxu0 0.0
    %2623 = vmatprep.subr.mxu0 0.0
    %2624 = vmatpush1.msra.mxu0 0.0
    %2625 = vmatprep.mubr.f32.mxu0 0.0
    %2626 = vmatmul.mubr.f32.gmra.mrb[0].mxu0 %v2543
    %v2627 = vpop.f32.mrb[0].mxu0
    %v2628 = vadd.f32 0.0, %v2627
    %v2629 = vpop.f32.mrb[0].mxu0
    %2630 = vdwg.mxu0
    %2631 = vmatprep.subr.mxu0 0.0
    %2632 = vmatpush1.msra.mxu0 %v2313
    %2633 = vmatprep.subr.mxu0 0.0
    %2634 = vmatpush1.msra.mxu0 %v2314
    %2635 = vmatprep.subr.mxu0 0.0
    %2636 = vmatpush1.msra.mxu0 %v2315
    %2637 = vmatprep.subr.mxu0 0.0
    %2638 = vmatpush1.msra.mxu0 %v2316
    %2639 = vmatprep.subr.mxu0 0.0
    %2640 = vmatpush1.msra.mxu0 %v2317
    %2641 = vmatprep.subr.mxu0 0.0
    %2642 = vmatpush1.msra.mxu0 %v2318
    %2643 = vmatprep.subr.mxu0 0.0
    %2644 = vmatpush1.msra.mxu0 %v2319
    %2645 = vmatprep.subr.mxu0 0.0
    %2646 = vmatpush1.msra.mxu0 %v2320
    %2647 = vmatprep.subr.mxu0 0.0
    %2648 = vmatpush1.msra.mxu0 %v2321
    %2649 = vmatprep.subr.mxu0 0.0
    %2650 = vmatpush1.msra.mxu0 %v2322
    %2651 = vmatprep.subr.mxu0 0.0
    %2652 = vmatpush1.msra.mxu0 %v2323
    %2653 = vmatprep.subr.mxu0 0.0
    %2654 = vmatpush1.msra.mxu0 %v2324
    %2655 = vmatprep.subr.mxu0 0.0
    %2656 = vmatpush1.msra.mxu0 %v2325
    %2657 = vmatprep.subr.mxu0 0.0
    %2658 = vmatpush1.msra.mxu0 %v2326
    %2659 = vmatprep.subr.mxu0 0.0
    %2660 = vmatpush1.msra.mxu0 %v2327
    %2661 = vmatprep.subr.mxu0 0.0
    %2662 = vmatpush1.msra.mxu0 %v2328
    %2663 = vmatprep.subr.mxu0 0.0
    %2664 = vmatpush1.msra.mxu0 0.0
    %2665 = vmatprep.subr.mxu0 0.0
    %2666 = vmatpush1.msra.mxu0 0.0
    %2667 = vmatprep.subr.mxu0 0.0
    %2668 = vmatpush1.msra.mxu0 0.0
    %2669 = vmatprep.subr.mxu0 0.0
    %2670 = vmatpush1.msra.mxu0 0.0
    %2671 = vmatprep.subr.mxu0 0.0
    %2672 = vmatpush1.msra.mxu0 0.0
    %2673 = vmatprep.subr.mxu0 0.0
    %2674 = vmatpush1.msra.mxu0 0.0
    %2675 = vmatprep.subr.mxu0 0.0
    %2676 = vmatpush1.msra.mxu0 0.0
    %2677 = vmatprep.subr.mxu0 0.0
    %2678 = vmatpush1.msra.mxu0 0.0
    %2679 = vmatprep.subr.mxu0 0.0
    %2680 = vmatpush1.msra.mxu0 0.0
    %2681 = vmatprep.subr.mxu0 0.0
    %2682 = vmatpush1.msra.mxu0 0.0
    %2683 = vmatprep.subr.mxu0 0.0
    %2684 = vmatpush1.msra.mxu0 0.0
    %2685 = vmatprep.subr.mxu0 0.0
    %2686 = vmatpush1.msra.mxu0 0.0
    %2687 = vmatprep.subr.mxu0 0.0
    %2688 = vmatpush1.msra.mxu0 0.0
    %2689 = vmatprep.subr.mxu0 0.0
    %2690 = vmatpush1.msra.mxu0 0.0
    %2691 = vmatprep.subr.mxu0 0.0
    %2692 = vmatpush1.msra.mxu0 0.0
    %2693 = vmatprep.subr.mxu0 0.0
    %2694 = vmatpush1.msra.mxu0 0.0
    %2695 = vmatprep.mubr.f32.mxu0 0.0
    %2696 = vmatmul.mubr.f32.gmra.mrb[0].mxu0 %v2312
    %v2697 = vpop.f32.mrb[0].mxu0
    %v2698 = vadd.f32 %v2628, %v2697
    %v2699 = vpop.f32.mrb[0].mxu0
    %2700 = vdwg.mxu0
    %2701 = vmatprep.subr.mxu0 0.0
    %2702 = vmatpush1.msra.mxu0 %v2059
    %2703 = vmatprep.subr.mxu0 0.0
    %2704 = vmatpush1.msra.mxu0 %v2060
    %2705 = vmatprep.subr.mxu0 0.0
    %2706 = vmatpush1.msra.mxu0 %v2061
    %2707 = vmatprep.subr.mxu0 0.0
    %2708 = vmatpush1.msra.mxu0 %v2062
    %2709 = vmatprep.subr.mxu0 0.0
    %2710 = vmatpush1.msra.mxu0 %v2063
    %2711 = vmatprep.subr.mxu0 0.0
    %2712 = vmatpush1.msra.mxu0 %v2064
    %2713 = vmatprep.subr.mxu0 0.0
    %2714 = vmatpush1.msra.mxu0 %v2065
    %2715 = vmatprep.subr.mxu0 0.0
    %2716 = vmatpush1.msra.mxu0 %v2066
    %2717 = vmatprep.subr.mxu0 0.0
    %2718 = vmatpush1.msra.mxu0 %v2067
    %2719 = vmatprep.subr.mxu0 0.0
    %2720 = vmatpush1.msra.mxu0 %v2068
    %2721 = vmatprep.subr.mxu0 0.0
    %2722 = vmatpush1.msra.mxu0 %v2069
    %2723 = vmatprep.subr.mxu0 0.0
    %2724 = vmatpush1.msra.mxu0 %v2070
    %2725 = vmatprep.subr.mxu0 0.0
    %2726 = vmatpush1.msra.mxu0 %v2071
    %2727 = vmatprep.subr.mxu0 0.0
    %2728 = vmatpush1.msra.mxu0 %v2072
    %2729 = vmatprep.subr.mxu0 0.0
    %2730 = vmatpush1.msra.mxu0 %v2073
    %2731 = vmatprep.subr.mxu0 0.0
    %2732 = vmatpush1.msra.mxu0 %v2074
    %2733 = vmatprep.subr.mxu0 0.0
    %2734 = vmatpush1.msra.mxu0 0.0
    %2735 = vmatprep.subr.mxu0 0.0
    %2736 = vmatpush1.msra.mxu0 0.0
    %2737 = vmatprep.subr.mxu0 0.0
    %2738 = vmatpush1.msra.mxu0 0.0
    %2739 = vmatprep.subr.mxu0 0.0
    %2740 = vmatpush1.msra.mxu0 0.0
    %2741 = vmatprep.subr.mxu0 0.0
    %2742 = vmatpush1.msra.mxu0 0.0
    %2743 = vmatprep.subr.mxu0 0.0
    %2744 = vmatpush1.msra.mxu0 0.0
    %2745 = vmatprep.subr.mxu0 0.0
    %2746 = vmatpush1.msra.mxu0 0.0
    %2747 = vmatprep.subr.mxu0 0.0
    %2748 = vmatpush1.msra.mxu0 0.0
    %2749 = vmatprep.subr.mxu0 0.0
    %2750 = vmatpush1.msra.mxu0 0.0
    %2751 = vmatprep.subr.mxu0 0.0
    %2752 = vmatpush1.msra.mxu0 0.0
    %2753 = vmatprep.subr.mxu0 0.0
    %2754 = vmatpush1.msra.mxu0 0.0
    %2755 = vmatprep.subr.mxu0 0.0
    %2756 = vmatpush1.msra.mxu0 0.0
    %2757 = vmatprep.subr.mxu0 0.0
    %2758 = vmatpush1.msra.mxu0 0.0
    %2759 = vmatprep.subr.mxu0 0.0
    %2760 = vmatpush1.msra.mxu0 0.0
    %2761 = vmatprep.subr.mxu0 0.0
    %2762 = vmatpush1.msra.mxu0 0.0
    %2763 = vmatprep.subr.mxu0 0.0
    %2764 = vmatpush1.msra.mxu0 0.0
    %2765 = vmatprep.mubr.f32.mxu0 0.0
    %2766 = vmatmul.mubr.f32.gmra.mrb[0].mxu0 %v1383
    %v2767 = vpop.f32.mrb[0].mxu0
    %v2768 = vadd.f32 0.0, %v2767
    %v2769 = vpop.f32.mrb[0].mxu0
    %2770 = vdwg.mxu0
    %2771 = vmatprep.subr.mxu0 0.0
    %2772 = vmatpush1.msra.mxu0 %v2042
    %2773 = vmatprep.subr.mxu0 0.0
    %2774 = vmatpush1.msra.mxu0 %v2043
    %2775 = vmatprep.subr.mxu0 0.0
    %2776 = vmatpush1.msra.mxu0 %v2044
    %2777 = vmatprep.subr.mxu0 0.0
    %2778 = vmatpush1.msra.mxu0 %v2045
    %2779 = vmatprep.subr.mxu0 0.0
    %2780 = vmatpush1.msra.mxu0 %v2046
    %2781 = vmatprep.subr.mxu0 0.0
    %2782 = vmatpush1.msra.mxu0 %v2047
    %2783 = vmatprep.subr.mxu0 0.0
    %2784 = vmatpush1.msra.mxu0 %v2048
    %2785 = vmatprep.subr.mxu0 0.0
    %2786 = vmatpush1.msra.mxu0 %v2049
    %2787 = vmatprep.subr.mxu0 0.0
    %2788 = vmatpush1.msra.mxu0 %v2050
    %2789 = vmatprep.subr.mxu0 0.0
    %2790 = vmatpush1.msra.mxu0 %v2051
    %2791 = vmatprep.subr.mxu0 0.0
    %2792 = vmatpush1.msra.mxu0 %v2052
    %2793 = vmatprep.subr.mxu0 0.0
    %2794 = vmatpush1.msra.mxu0 %v2053
    %2795 = vmatprep.subr.mxu0 0.0
    %2796 = vmatpush1.msra.mxu0 %v2054
    %2797 = vmatprep.subr.mxu0 0.0
    %2798 = vmatpush1.msra.mxu0 %v2055
    %2799 = vmatprep.subr.mxu0 0.0
    %2800 = vmatpush1.msra.mxu0 %v2056
    %2801 = vmatprep.subr.mxu0 0.0
    %2802 = vmatpush1.msra.mxu0 %v2057
    %2803 = vmatprep.subr.mxu0 0.0
    %2804 = vmatpush1.msra.mxu0 0.0
    %2805 = vmatprep.subr.mxu0 0.0
    %2806 = vmatpush1.msra.mxu0 0.0
    %2807 = vmatprep.subr.mxu0 0.0
    %2808 = vmatpush1.msra.mxu0 0.0
    %2809 = vmatprep.subr.mxu0 0.0
    %2810 = vmatpush1.msra.mxu0 0.0
    %2811 = vmatprep.subr.mxu0 0.0
    %2812 = vmatpush1.msra.mxu0 0.0
    %2813 = vmatprep.subr.mxu0 0.0
    %2814 = vmatpush1.msra.mxu0 0.0
    %2815 = vmatprep.subr.mxu0 0.0
    %2816 = vmatpush1.msra.mxu0 0.0
    %2817 = vmatprep.subr.mxu0 0.0
    %2818 = vmatpush1.msra.mxu0 0.0
    %2819 = vmatprep.subr.mxu0 0.0
    %2820 = vmatpush1.msra.mxu0 0.0
    %2821 = vmatprep.subr.mxu0 0.0
    %2822 = vmatpush1.msra.mxu0 0.0
    %2823 = vmatprep.subr.mxu0 0.0
    %2824 = vmatpush1.msra.mxu0 0.0
    %2825 = vmatprep.subr.mxu0 0.0
    %2826 = vmatpush1.msra.mxu0 0.0
    %2827 = vmatprep.subr.mxu0 0.0
    %2828 = vmatpush1.msra.mxu0 0.0
    %2829 = vmatprep.subr.mxu0 0.0
    %2830 = vmatpush1.msra.mxu0 0.0
    %2831 = vmatprep.subr.mxu0 0.0
    %2832 = vmatpush1.msra.mxu0 0.0
    %2833 = vmatprep.subr.mxu0 0.0
    %2834 = vmatpush1.msra.mxu0 0.0
    %2835 = vmatprep.mubr.f32.mxu0 0.0
    %2836 = vmatmul.mubr.f32.gmra.mrb[0].mxu0 %v1310
    %v2837 = vpop.f32.mrb[0].mxu0
    %v2838 = vadd.f32 %v2768, %v2837
    %v2839 = vpop.f32.mrb[0].mxu0
    %2840 = vdwg.mxu0
    %2841 = vmatprep.subr.mxu0 0.0
    %2842 = vmatpush1.msra.mxu0 %v2216
    %2843 = vmatprep.subr.mxu0 0.0
    %2844 = vmatpush1.msra.mxu0 %v2217
    %2845 = vmatprep.subr.mxu0 0.0
    %2846 = vmatpush1.msra.mxu0 %v2218
    %2847 = vmatprep.subr.mxu0 0.0
    %2848 = vmatpush1.msra.mxu0 %v2219
    %2849 = vmatprep.subr.mxu0 0.0
    %2850 = vmatpush1.msra.mxu0 %v2220
    %2851 = vmatprep.subr.mxu0 0.0
    %2852 = vmatpush1.msra.mxu0 %v2221
    %2853 = vmatprep.subr.mxu0 0.0
    %2854 = vmatpush1.msra.mxu0 %v2222
    %2855 = vmatprep.subr.mxu0 0.0
    %2856 = vmatpush1.msra.mxu0 %v2223
    %2857 = vmatprep.subr.mxu0 0.0
    %2858 = vmatpush1.msra.mxu0 %v2224
    %2859 = vmatprep.subr.mxu0 0.0
    %2860 = vmatpush1.msra.mxu0 %v2225
    %2861 = vmatprep.subr.mxu0 0.0
    %2862 = vmatpush1.msra.mxu0 %v2226
    %2863 = vmatprep.subr.mxu0 0.0
    %2864 = vmatpush1.msra.mxu0 %v2227
    %2865 = vmatprep.subr.mxu0 0.0
    %2866 = vmatpush1.msra.mxu0 %v2228
    %2867 = vmatprep.subr.mxu0 0.0
    %2868 = vmatpush1.msra.mxu0 %v2229
    %2869 = vmatprep.subr.mxu0 0.0
    %2870 = vmatpush1.msra.mxu0 %v2230
    %2871 = vmatprep.subr.mxu0 0.0
    %2872 = vmatpush1.msra.mxu0 %v2231
    %2873 = vmatprep.subr.mxu0 0.0
    %2874 = vmatpush1.msra.mxu0 0.0
    %2875 = vmatprep.subr.mxu0 0.0
    %2876 = vmatpush1.msra.mxu0 0.0
    %2877 = vmatprep.subr.mxu0 0.0
    %2878 = vmatpush1.msra.mxu0 0.0
    %2879 = vmatprep.subr.mxu0 0.0
    %2880 = vmatpush1.msra.mxu0 0.0
    %2881 = vmatprep.subr.mxu0 0.0
    %2882 = vmatpush1.msra.mxu0 0.0
    %2883 = vmatprep.subr.mxu0 0.0
    %2884 = vmatpush1.msra.mxu0 0.0
    %2885 = vmatprep.subr.mxu0 0.0
    %2886 = vmatpush1.msra.mxu0 0.0
    %2887 = vmatprep.subr.mxu0 0.0
    %2888 = vmatpush1.msra.mxu0 0.0
    %2889 = vmatprep.subr.mxu0 0.0
    %2890 = vmatpush1.msra.mxu0 0.0
    %2891 = vmatprep.subr.mxu0 0.0
    %2892 = vmatpush1.msra.mxu0 0.0
    %2893 = vmatprep.subr.mxu0 0.0
    %2894 = vmatpush1.msra.mxu0 0.0
    %2895 = vmatprep.subr.mxu0 0.0
    %2896 = vmatpush1.msra.mxu0 0.0
    %2897 = vmatprep.subr.mxu0 0.0
    %2898 = vmatpush1.msra.mxu0 0.0
    %2899 = vmatprep.subr.mxu0 0.0
    %2900 = vmatpush1.msra.mxu0 0.0
    %2901 = vmatprep.subr.mxu0 0.0
    %2902 = vmatpush1.msra.mxu0 0.0
    %2903 = vmatprep.subr.mxu0 0.0
    %2904 = vmatpush1.msra.mxu0 0.0
    %2905 = vmatprep.mubr.f32.mxu0 0.0
    %2906 = vmatmul.mubr.f32.gmra.mrb[0].mxu0 %v1456
    %v2907 = vpop.f32.mrb[0].mxu0
    %v2908 = vadd.f32 0.0, %v2907
    %v2909 = vpop.f32.mrb[0].mxu0
    %2910 = vdwg.mxu0
    %v2911 = vadd.f32 %v2838, %v2908
    %v2912 = vadd.f32 %v2911, %v2307
    %vm2913 = vcmp.ge.f32.partialorder %v2912, 0.0
    %v2914 = vmul.f32 %v2912, 0.2
    %v2915 = vsel %vm2913, %v2912, %v2914
    %s2916 = scalar_lea.vmem [#allocation9], 256
    %v2917 = vld [vmem:[%s2916] sm:$0xff]
    %v2918 = vld [vmem:[%s2916 + $0x8] sm:$0xff]
    %v2919 = vld [vmem:[%s2916 + $0x10] sm:$0xff]
    %v2920 = vld [vmem:[%s2916 + $0x18] sm:$0xff]
    %v2921 = vld [vmem:[%s2916 + $0x20] sm:$0xff]
    %v2922 = vld [vmem:[%s2916 + $0x28] sm:$0xff]
    %v2923 = vld [vmem:[%s2916 + $0x30] sm:$0xff]
    %v2924 = vld [vmem:[%s2916 + $0x38] sm:$0xff]
    %v2925 = vld [vmem:[%s2916 + $0x40] sm:$0xff]
    %v2926 = vld [vmem:[%s2916 + $0x48] sm:$0xff]
    %v2927 = vld [vmem:[%s2916 + $0x50] sm:$0xff]
    %v2928 = vld [vmem:[%s2916 + $0x58] sm:$0xff]
    %v2929 = vld [vmem:[%s2916 + $0x60] sm:$0xff]
    %v2930 = vld [vmem:[%s2916 + $0x68] sm:$0xff]
    %v2931 = vld [vmem:[%s2916 + $0x70] sm:$0xff]
    %v2932 = vld [vmem:[%s2916 + $0x78] sm:$0xff]
    %2933 = vmatprep.subr.mxu0 0.0
    %2934 = vmatpush1.msra.mxu0 %v2917
    %2935 = vmatprep.subr.mxu0 0.0
    %2936 = vmatpush1.msra.mxu0 %v2918
    %2937 = vmatprep.subr.mxu0 0.0
    %2938 = vmatpush1.msra.mxu0 %v2919
    %2939 = vmatprep.subr.mxu0 0.0
    %2940 = vmatpush1.msra.mxu0 %v2920
    %2941 = vmatprep.subr.mxu0 0.0
    %2942 = vmatpush1.msra.mxu0 %v2921
    %2943 = vmatprep.subr.mxu0 0.0
    %2944 = vmatpush1.msra.mxu0 %v2922
    %2945 = vmatprep.subr.mxu0 0.0
    %2946 = vmatpush1.msra.mxu0 %v2923
    %2947 = vmatprep.subr.mxu0 0.0
    %2948 = vmatpush1.msra.mxu0 %v2924
    %2949 = vmatprep.subr.mxu0 0.0
    %2950 = vmatpush1.msra.mxu0 %v2925
    %2951 = vmatprep.subr.mxu0 0.0
    %2952 = vmatpush1.msra.mxu0 %v2926
    %2953 = vmatprep.subr.mxu0 0.0
    %2954 = vmatpush1.msra.mxu0 %v2927
    %2955 = vmatprep.subr.mxu0 0.0
    %2956 = vmatpush1.msra.mxu0 %v2928
    %2957 = vmatprep.subr.mxu0 0.0
    %2958 = vmatpush1.msra.mxu0 %v2929
    %2959 = vmatprep.subr.mxu0 0.0
    %2960 = vmatpush1.msra.mxu0 %v2930
    %2961 = vmatprep.subr.mxu0 0.0
    %2962 = vmatpush1.msra.mxu0 %v2931
    %2963 = vmatprep.subr.mxu0 0.0
    %2964 = vmatpush1.msra.mxu0 %v2932
    %2965 = vmatprep.subr.mxu0 0.0
    %2966 = vmatpush1.msra.mxu0 0.0
    %2967 = vmatprep.subr.mxu0 0.0
    %2968 = vmatpush1.msra.mxu0 0.0
    %2969 = vmatprep.subr.mxu0 0.0
    %2970 = vmatpush1.msra.mxu0 0.0
    %2971 = vmatprep.subr.mxu0 0.0
    %2972 = vmatpush1.msra.mxu0 0.0
    %2973 = vmatprep.subr.mxu0 0.0
    %2974 = vmatpush1.msra.mxu0 0.0
    %2975 = vmatprep.subr.mxu0 0.0
    %2976 = vmatpush1.msra.mxu0 0.0
    %2977 = vmatprep.subr.mxu0 0.0
    %2978 = vmatpush1.msra.mxu0 0.0
    %2979 = vmatprep.subr.mxu0 0.0
    %2980 = vmatpush1.msra.mxu0 0.0
    %2981 = vmatprep.subr.mxu0 0.0
    %2982 = vmatpush1.msra.mxu0 0.0
    %2983 = vmatprep.subr.mxu0 0.0
    %2984 = vmatpush1.msra.mxu0 0.0
    %2985 = vmatprep.subr.mxu0 0.0
    %2986 = vmatpush1.msra.mxu0 0.0
    %2987 = vmatprep.subr.mxu0 0.0
    %2988 = vmatpush1.msra.mxu0 0.0
    %2989 = vmatprep.subr.mxu0 0.0
    %2990 = vmatpush1.msra.mxu0 0.0
    %2991 = vmatprep.subr.mxu0 0.0
    %2992 = vmatpush1.msra.mxu0 0.0
    %2993 = vmatprep.subr.mxu0 0.0
    %2994 = vmatpush1.msra.mxu0 0.0
    %2995 = vmatprep.subr.mxu0 0.0
    %2996 = vmatpush1.msra.mxu0 0.0
    %2997 = vmatprep.mubr.f32.mxu0 0.0
    %2998 = vmatmul.mubr.f32.gmra.mrb[0].mxu0 %v2915
    %v2999 = vpop.f32.mrb[0].mxu0
    %v3000 = vadd.f32 0.0, %v2999
    %v3001 = vpop.f32.mrb[0].mxu0
    %3002 = vdwg.mxu0
    %v3003 = vadd.f32 %v2698, %v3000
    %3004 = vmatprep.subr.mxu0 0.0
    %3005 = vmatpush1.msra.mxu0 %v2059
    %3006 = vmatprep.subr.mxu0 0.0
    %3007 = vmatpush1.msra.mxu0 %v2060
    %3008 = vmatprep.subr.mxu0 0.0
    %3009 = vmatpush1.msra.mxu0 %v2061
    %3010 = vmatprep.subr.mxu0 0.0
    %3011 = vmatpush1.msra.mxu0 %v2062
    %3012 = vmatprep.subr.mxu0 0.0
    %3013 = vmatpush1.msra.mxu0 %v2063
    %3014 = vmatprep.subr.mxu0 0.0
    %3015 = vmatpush1.msra.mxu0 %v2064
    %3016 = vmatprep.subr.mxu0 0.0
    %3017 = vmatpush1.msra.mxu0 %v2065
    %3018 = vmatprep.subr.mxu0 0.0
    %3019 = vmatpush1.msra.mxu0 %v2066
    %3020 = vmatprep.subr.mxu0 0.0
    %3021 = vmatpush1.msra.mxu0 %v2067
    %3022 = vmatprep.subr.mxu0 0.0
    %3023 = vmatpush1.msra.mxu0 %v2068
    %3024 = vmatprep.subr.mxu0 0.0
    %3025 = vmatpush1.msra.mxu0 %v2069
    %3026 = vmatprep.subr.mxu0 0.0
    %3027 = vmatpush1.msra.mxu0 %v2070
    %3028 = vmatprep.subr.mxu0 0.0
    %3029 = vmatpush1.msra.mxu0 %v2071
    %3030 = vmatprep.subr.mxu0 0.0
    %3031 = vmatpush1.msra.mxu0 %v2072
    %3032 = vmatprep.subr.mxu0 0.0
    %3033 = vmatpush1.msra.mxu0 %v2073
    %3034 = vmatprep.subr.mxu0 0.0
    %3035 = vmatpush1.msra.mxu0 %v2074
    %3036 = vmatprep.subr.mxu0 0.0
    %3037 = vmatpush1.msra.mxu0 0.0
    %3038 = vmatprep.subr.mxu0 0.0
    %3039 = vmatpush1.msra.mxu0 0.0
    %3040 = vmatprep.subr.mxu0 0.0
    %3041 = vmatpush1.msra.mxu0 0.0
    %3042 = vmatprep.subr.mxu0 0.0
    %3043 = vmatpush1.msra.mxu0 0.0
    %3044 = vmatprep.subr.mxu0 0.0
    %3045 = vmatpush1.msra.mxu0 0.0
    %3046 = vmatprep.subr.mxu0 0.0
    %3047 = vmatpush1.msra.mxu0 0.0
    %3048 = vmatprep.subr.mxu0 0.0
    %3049 = vmatpush1.msra.mxu0 0.0
    %3050 = vmatprep.subr.mxu0 0.0
    %3051 = vmatpush1.msra.mxu0 0.0
    %3052 = vmatprep.subr.mxu0 0.0
    %3053 = vmatpush1.msra.mxu0 0.0
    %3054 = vmatprep.subr.mxu0 0.0
    %3055 = vmatpush1.msra.mxu0 0.0
    %3056 = vmatprep.subr.mxu0 0.0
    %3057 = vmatpush1.msra.mxu0 0.0
    %3058 = vmatprep.subr.mxu0 0.0
    %3059 = vmatpush1.msra.mxu0 0.0
    %3060 = vmatprep.subr.mxu0 0.0
    %3061 = vmatpush1.msra.mxu0 0.0
    %3062 = vmatprep.subr.mxu0 0.0
    %3063 = vmatpush1.msra.mxu0 0.0
    %3064 = vmatprep.subr.mxu0 0.0
    %3065 = vmatpush1.msra.mxu0 0.0
    %3066 = vmatprep.subr.mxu0 0.0
    %3067 = vmatpush1.msra.mxu0 0.0
    %3068 = vmatprep.mubr.f32.mxu0 0.0
    %3069 = vmatmul.mubr.f32.gmra.mrb[0].mxu0 %v1529
    %v3070 = vpop.f32.mrb[0].mxu0
    %v3071 = vadd.f32 0.0, %v3070
    %v3072 = vpop.f32.mrb[0].mxu0
    %3073 = vdwg.mxu0
    %3074 = vmatprep.subr.mxu0 0.0
    %3075 = vmatpush1.msra.mxu0 %v2042
    %3076 = vmatprep.subr.mxu0 0.0
    %3077 = vmatpush1.msra.mxu0 %v2043
    %3078 = vmatprep.subr.mxu0 0.0
    %3079 = vmatpush1.msra.mxu0 %v2044
    %3080 = vmatprep.subr.mxu0 0.0
    %3081 = vmatpush1.msra.mxu0 %v2045
    %3082 = vmatprep.subr.mxu0 0.0
    %3083 = vmatpush1.msra.mxu0 %v2046
    %3084 = vmatprep.subr.mxu0 0.0
    %3085 = vmatpush1.msra.mxu0 %v2047
    %3086 = vmatprep.subr.mxu0 0.0
    %3087 = vmatpush1.msra.mxu0 %v2048
    %3088 = vmatprep.subr.mxu0 0.0
    %3089 = vmatpush1.msra.mxu0 %v2049
    %3090 = vmatprep.subr.mxu0 0.0
    %3091 = vmatpush1.msra.mxu0 %v2050
    %3092 = vmatprep.subr.mxu0 0.0
    %3093 = vmatpush1.msra.mxu0 %v2051
    %3094 = vmatprep.subr.mxu0 0.0
    %3095 = vmatpush1.msra.mxu0 %v2052
    %3096 = vmatprep.subr.mxu0 0.0
    %3097 = vmatpush1.msra.mxu0 %v2053
    %3098 = vmatprep.subr.mxu0 0.0
    %3099 = vmatpush1.msra.mxu0 %v2054
    %3100 = vmatprep.subr.mxu0 0.0
    %3101 = vmatpush1.msra.mxu0 %v2055
    %3102 = vmatprep.subr.mxu0 0.0
    %3103 = vmatpush1.msra.mxu0 %v2056
    %3104 = vmatprep.subr.mxu0 0.0
    %3105 = vmatpush1.msra.mxu0 %v2057
    %3106 = vmatprep.subr.mxu0 0.0
    %3107 = vmatpush1.msra.mxu0 0.0
    %3108 = vmatprep.subr.mxu0 0.0
    %3109 = vmatpush1.msra.mxu0 0.0
    %3110 = vmatprep.subr.mxu0 0.0
    %3111 = vmatpush1.msra.mxu0 0.0
    %3112 = vmatprep.subr.mxu0 0.0
    %3113 = vmatpush1.msra.mxu0 0.0
    %3114 = vmatprep.subr.mxu0 0.0
    %3115 = vmatpush1.msra.mxu0 0.0
    %3116 = vmatprep.subr.mxu0 0.0
    %3117 = vmatpush1.msra.mxu0 0.0
    %3118 = vmatprep.subr.mxu0 0.0
    %3119 = vmatpush1.msra.mxu0 0.0
    %3120 = vmatprep.subr.mxu0 0.0
    %3121 = vmatpush1.msra.mxu0 0.0
    %3122 = vmatprep.subr.mxu0 0.0
    %3123 = vmatpush1.msra.mxu0 0.0
    %3124 = vmatprep.subr.mxu0 0.0
    %3125 = vmatpush1.msra.mxu0 0.0
    %3126 = vmatprep.subr.mxu0 0.0
    %3127 = vmatpush1.msra.mxu0 0.0
    %3128 = vmatprep.subr.mxu0 0.0
    %3129 = vmatpush1.msra.mxu0 0.0
    %3130 = vmatprep.subr.mxu0 0.0
    %3131 = vmatpush1.msra.mxu0 0.0
    %3132 = vmatprep.subr.mxu0 0.0
    %3133 = vmatpush1.msra.mxu0 0.0
    %3134 = vmatprep.subr.mxu0 0.0
    %3135 = vmatpush1.msra.mxu0 0.0
    %3136 = vmatprep.subr.mxu0 0.0
    %3137 = vmatpush1.msra.mxu0 0.0
    %3138 = vmatprep.mubr.f32.mxu0 0.0
    %3139 = vmatmul.mubr.f32.gmra.mrb[0].mxu0 %v1456
    %v3140 = vpop.f32.mrb[0].mxu0
    %v3141 = vadd.f32 %v3071, %v3140
    %v3142 = vpop.f32.mrb[0].mxu0
    %3143 = vdwg.mxu0
    %3144 = vmatprep.subr.mxu0 0.0
    %3145 = vmatpush1.msra.mxu0 %v2216
    %3146 = vmatprep.subr.mxu0 0.0
    %3147 = vmatpush1.msra.mxu0 %v2217
    %3148 = vmatprep.subr.mxu0 0.0
    %3149 = vmatpush1.msra.mxu0 %v2218
    %3150 = vmatprep.subr.mxu0 0.0
    %3151 = vmatpush1.msra.mxu0 %v2219
    %3152 = vmatprep.subr.mxu0 0.0
    %3153 = vmatpush1.msra.mxu0 %v2220
    %3154 = vmatprep.subr.mxu0 0.0
    %3155 = vmatpush1.msra.mxu0 %v2221
    %3156 = vmatprep.subr.mxu0 0.0
    %3157 = vmatpush1.msra.mxu0 %v2222
    %3158 = vmatprep.subr.mxu0 0.0
    %3159 = vmatpush1.msra.mxu0 %v2223
    %3160 = vmatprep.subr.mxu0 0.0
    %3161 = vmatpush1.msra.mxu0 %v2224
    %3162 = vmatprep.subr.mxu0 0.0
    %3163 = vmatpush1.msra.mxu0 %v2225
    %3164 = vmatprep.subr.mxu0 0.0
    %3165 = vmatpush1.msra.mxu0 %v2226
    %3166 = vmatprep.subr.mxu0 0.0
    %3167 = vmatpush1.msra.mxu0 %v2227
    %3168 = vmatprep.subr.mxu0 0.0
    %3169 = vmatpush1.msra.mxu0 %v2228
    %3170 = vmatprep.subr.mxu0 0.0
    %3171 = vmatpush1.msra.mxu0 %v2229
    %3172 = vmatprep.subr.mxu0 0.0
    %3173 = vmatpush1.msra.mxu0 %v2230
    %3174 = vmatprep.subr.mxu0 0.0
    %3175 = vmatpush1.msra.mxu0 %v2231
    %3176 = vmatprep.subr.mxu0 0.0
    %3177 = vmatpush1.msra.mxu0 0.0
    %3178 = vmatprep.subr.mxu0 0.0
    %3179 = vmatpush1.msra.mxu0 0.0
    %3180 = vmatprep.subr.mxu0 0.0
    %3181 = vmatpush1.msra.mxu0 0.0
    %3182 = vmatprep.subr.mxu0 0.0
    %3183 = vmatpush1.msra.mxu0 0.0
    %3184 = vmatprep.subr.mxu0 0.0
    %3185 = vmatpush1.msra.mxu0 0.0
    %3186 = vmatprep.subr.mxu0 0.0
    %3187 = vmatpush1.msra.mxu0 0.0
    %3188 = vmatprep.subr.mxu0 0.0
    %3189 = vmatpush1.msra.mxu0 0.0
    %3190 = vmatprep.subr.mxu0 0.0
    %3191 = vmatpush1.msra.mxu0 0.0
    %3192 = vmatprep.subr.mxu0 0.0
    %3193 = vmatpush1.msra.mxu0 0.0
    %3194 = vmatprep.subr.mxu0 0.0
    %3195 = vmatpush1.msra.mxu0 0.0
    %3196 = vmatprep.subr.mxu0 0.0
    %3197 = vmatpush1.msra.mxu0 0.0
    %3198 = vmatprep.subr.mxu0 0.0
    %3199 = vmatpush1.msra.mxu0 0.0
    %3200 = vmatprep.subr.mxu0 0.0
    %3201 = vmatpush1.msra.mxu0 0.0
    %3202 = vmatprep.subr.mxu0 0.0
    %3203 = vmatpush1.msra.mxu0 0.0
    %3204 = vmatprep.subr.mxu0 0.0
    %3205 = vmatpush1.msra.mxu0 0.0
    %3206 = vmatprep.subr.mxu0 0.0
    %3207 = vmatpush1.msra.mxu0 0.0
    %3208 = vmatprep.mubr.f32.mxu0 0.0
    %3209 = vmatmul.mubr.f32.gmra.mrb[0].mxu0 %v1602
    %v3210 = vpop.f32.mrb[0].mxu0
    %v3211 = vadd.f32 0.0, %v3210
    %v3212 = vpop.f32.mrb[0].mxu0
    %3213 = vdwg.mxu0
    %v3214 = vadd.f32 %v3141, %v3211
    %v3215 = vadd.f32 %v3214, %v2307
    %vm3216 = vcmp.ge.f32.partialorder %v3215, 0.0
    %v3217 = vmul.f32 %v3215, 0.2
    %v3218 = vsel %vm3216, %v3215, %v3217
    %s3219 = scalar_lea.vmem [#allocation9], 384
    %v3220 = vld [vmem:[%s3219] sm:$0xff]
    %v3221 = vld [vmem:[%s3219 + $0x8] sm:$0xff]
    %v3222 = vld [vmem:[%s3219 + $0x10] sm:$0xff]
    %v3223 = vld [vmem:[%s3219 + $0x18] sm:$0xff]
    %v3224 = vld [vmem:[%s3219 + $0x20] sm:$0xff]
    %v3225 = vld [vmem:[%s3219 + $0x28] sm:$0xff]
    %v3226 = vld [vmem:[%s3219 + $0x30] sm:$0xff]
    %v3227 = vld [vmem:[%s3219 + $0x38] sm:$0xff]
    %v3228 = vld [vmem:[%s3219 + $0x40] sm:$0xff]
    %v3229 = vld [vmem:[%s3219 + $0x48] sm:$0xff]
    %v3230 = vld [vmem:[%s3219 + $0x50] sm:$0xff]
    %v3231 = vld [vmem:[%s3219 + $0x58] sm:$0xff]
    %v3232 = vld [vmem:[%s3219 + $0x60] sm:$0xff]
    %v3233 = vld [vmem:[%s3219 + $0x68] sm:$0xff]
    %v3234 = vld [vmem:[%s3219 + $0x70] sm:$0xff]
    %v3235 = vld [vmem:[%s3219 + $0x78] sm:$0xff]
    %3236 = vmatprep.subr.mxu0 0.0
    %3237 = vmatpush1.msra.mxu0 %v3220
    %3238 = vmatprep.subr.mxu0 0.0
    %3239 = vmatpush1.msra.mxu0 %v3221
    %3240 = vmatprep.subr.mxu0 0.0
    %3241 = vmatpush1.msra.mxu0 %v3222
    %3242 = vmatprep.subr.mxu0 0.0
    %3243 = vmatpush1.msra.mxu0 %v3223
    %3244 = vmatprep.subr.mxu0 0.0
    %3245 = vmatpush1.msra.mxu0 %v3224
    %3246 = vmatprep.subr.mxu0 0.0
    %3247 = vmatpush1.msra.mxu0 %v3225
    %3248 = vmatprep.subr.mxu0 0.0
    %3249 = vmatpush1.msra.mxu0 %v3226
    %3250 = vmatprep.subr.mxu0 0.0
    %3251 = vmatpush1.msra.mxu0 %v3227
    %3252 = vmatprep.subr.mxu0 0.0
    %3253 = vmatpush1.msra.mxu0 %v3228
    %3254 = vmatprep.subr.mxu0 0.0
    %3255 = vmatpush1.msra.mxu0 %v3229
    %3256 = vmatprep.subr.mxu0 0.0
    %3257 = vmatpush1.msra.mxu0 %v3230
    %3258 = vmatprep.subr.mxu0 0.0
    %3259 = vmatpush1.msra.mxu0 %v3231
    %3260 = vmatprep.subr.mxu0 0.0
    %3261 = vmatpush1.msra.mxu0 %v3232
    %3262 = vmatprep.subr.mxu0 0.0
    %3263 = vmatpush1.msra.mxu0 %v3233
    %3264 = vmatprep.subr.mxu0 0.0
    %3265 = vmatpush1.msra.mxu0 %v3234
    %3266 = vmatprep.subr.mxu0 0.0
    %3267 = vmatpush1.msra.mxu0 %v3235
    %3268 = vmatprep.subr.mxu0 0.0
    %3269 = vmatpush1.msra.mxu0 0.0
    %3270 = vmatprep.subr.mxu0 0.0
    %3271 = vmatpush1.msra.mxu0 0.0
    %3272 = vmatprep.subr.mxu0 0.0
    %3273 = vmatpush1.msra.mxu0 0.0
    %3274 = vmatprep.subr.mxu0 0.0
    %3275 = vmatpush1.msra.mxu0 0.0
    %3276 = vmatprep.subr.mxu0 0.0
    %3277 = vmatpush1.msra.mxu0 0.0
    %3278 = vmatprep.subr.mxu0 0.0
    %3279 = vmatpush1.msra.mxu0 0.0
    %3280 = vmatprep.subr.mxu0 0.0
    %3281 = vmatpush1.msra.mxu0 0.0
    %3282 = vmatprep.subr.mxu0 0.0
    %3283 = vmatpush1.msra.mxu0 0.0
    %3284 = vmatprep.subr.mxu0 0.0
    %3285 = vmatpush1.msra.mxu0 0.0
    %3286 = vmatprep.subr.mxu0 0.0
    %3287 = vmatpush1.msra.mxu0 0.0
    %3288 = vmatprep.subr.mxu0 0.0
    %3289 = vmatpush1.msra.mxu0 0.0
    %3290 = vmatprep.subr.mxu0 0.0
    %3291 = vmatpush1.msra.mxu0 0.0
    %3292 = vmatprep.subr.mxu0 0.0
    %3293 = vmatpush1.msra.mxu0 0.0
    %3294 = vmatprep.subr.mxu0 0.0
    %3295 = vmatpush1.msra.mxu0 0.0
    %3296 = vmatprep.subr.mxu0 0.0
    %3297 = vmatpush1.msra.mxu0 0.0
    %3298 = vmatprep.subr.mxu0 0.0
    %3299 = vmatpush1.msra.mxu0 0.0
    %3300 = vmatprep.mubr.f32.mxu0 0.0
    %3301 = vmatmul.mubr.f32.gmra.mrb[0].mxu0 %v3218
    %v3302 = vpop.f32.mrb[0].mxu0
    %v3303 = vadd.f32 0.0, %v3302
    %v3304 = vpop.f32.mrb[0].mxu0
    %3305 = vdwg.mxu0
    %v3306 = vadd.f32 %v3003, %v3303
    %3307 = vmatprep.subr.mxu0 0.0
    %3308 = vmatpush1.msra.mxu0 %v2059
    %3309 = vmatprep.subr.mxu0 0.0
    %3310 = vmatpush1.msra.mxu0 %v2060
    %3311 = vmatprep.subr.mxu0 0.0
    %3312 = vmatpush1.msra.mxu0 %v2061
    %3313 = vmatprep.subr.mxu0 0.0
    %3314 = vmatpush1.msra.mxu0 %v2062
    %3315 = vmatprep.subr.mxu0 0.0
    %3316 = vmatpush1.msra.mxu0 %v2063
    %3317 = vmatprep.subr.mxu0 0.0
    %3318 = vmatpush1.msra.mxu0 %v2064
    %3319 = vmatprep.subr.mxu0 0.0
    %3320 = vmatpush1.msra.mxu0 %v2065
    %3321 = vmatprep.subr.mxu0 0.0
    %3322 = vmatpush1.msra.mxu0 %v2066
    %3323 = vmatprep.subr.mxu0 0.0
    %3324 = vmatpush1.msra.mxu0 %v2067
    %3325 = vmatprep.subr.mxu0 0.0
    %3326 = vmatpush1.msra.mxu0 %v2068
    %3327 = vmatprep.subr.mxu0 0.0
    %3328 = vmatpush1.msra.mxu0 %v2069
    %3329 = vmatprep.subr.mxu0 0.0
    %3330 = vmatpush1.msra.mxu0 %v2070
    %3331 = vmatprep.subr.mxu0 0.0
    %3332 = vmatpush1.msra.mxu0 %v2071
    %3333 = vmatprep.subr.mxu0 0.0
    %3334 = vmatpush1.msra.mxu0 %v2072
    %3335 = vmatprep.subr.mxu0 0.0
    %3336 = vmatpush1.msra.mxu0 %v2073
    %3337 = vmatprep.subr.mxu0 0.0
    %3338 = vmatpush1.msra.mxu0 %v2074
    %3339 = vmatprep.subr.mxu0 0.0
    %3340 = vmatpush1.msra.mxu0 0.0
    %3341 = vmatprep.subr.mxu0 0.0
    %3342 = vmatpush1.msra.mxu0 0.0
    %3343 = vmatprep.subr.mxu0 0.0
    %3344 = vmatpush1.msra.mxu0 0.0
    %3345 = vmatprep.subr.mxu0 0.0
    %3346 = vmatpush1.msra.mxu0 0.0
    %3347 = vmatprep.subr.mxu0 0.0
    %3348 = vmatpush1.msra.mxu0 0.0
    %3349 = vmatprep.subr.mxu0 0.0
    %3350 = vmatpush1.msra.mxu0 0.0
    %3351 = vmatprep.subr.mxu0 0.0
    %3352 = vmatpush1.msra.mxu0 0.0
    %3353 = vmatprep.subr.mxu0 0.0
    %3354 = vmatpush1.msra.mxu0 0.0
    %3355 = vmatprep.subr.mxu0 0.0
    %3356 = vmatpush1.msra.mxu0 0.0
    %3357 = vmatprep.subr.mxu0 0.0
    %3358 = vmatpush1.msra.mxu0 0.0
    %3359 = vmatprep.subr.mxu0 0.0
    %3360 = vmatpush1.msra.mxu0 0.0
    %3361 = vmatprep.subr.mxu0 0.0
    %3362 = vmatpush1.msra.mxu0 0.0
    %3363 = vmatprep.subr.mxu0 0.0
    %3364 = vmatpush1.msra.mxu0 0.0
    %3365 = vmatprep.subr.mxu0 0.0
    %3366 = vmatpush1.msra.mxu0 0.0
    %3367 = vmatprep.subr.mxu0 0.0
    %3368 = vmatpush1.msra.mxu0 0.0
    %3369 = vmatprep.subr.mxu0 0.0
    %3370 = vmatpush1.msra.mxu0 0.0
    %3371 = vmatprep.mubr.f32.mxu0 0.0
    %3372 = vmatmul.mubr.f32.gmra.mrb[0].mxu0 %v1675
    %v3373 = vpop.f32.mrb[0].mxu0
    %v3374 = vadd.f32 0.0, %v3373
    %v3375 = vpop.f32.mrb[0].mxu0
    %3376 = vdwg.mxu0
    %3377 = vmatprep.subr.mxu0 0.0
    %3378 = vmatpush1.msra.mxu0 %v2042
    %3379 = vmatprep.subr.mxu0 0.0
    %3380 = vmatpush1.msra.mxu0 %v2043
    %3381 = vmatprep.subr.mxu0 0.0
    %3382 = vmatpush1.msra.mxu0 %v2044
    %3383 = vmatprep.subr.mxu0 0.0
    %3384 = vmatpush1.msra.mxu0 %v2045
    %3385 = vmatprep.subr.mxu0 0.0
    %3386 = vmatpush1.msra.mxu0 %v2046
    %3387 = vmatprep.subr.mxu0 0.0
    %3388 = vmatpush1.msra.mxu0 %v2047
    %3389 = vmatprep.subr.mxu0 0.0
    %3390 = vmatpush1.msra.mxu0 %v2048
    %3391 = vmatprep.subr.mxu0 0.0
    %3392 = vmatpush1.msra.mxu0 %v2049
    %3393 = vmatprep.subr.mxu0 0.0
    %3394 = vmatpush1.msra.mxu0 %v2050
    %3395 = vmatprep.subr.mxu0 0.0
    %3396 = vmatpush1.msra.mxu0 %v2051
    %3397 = vmatprep.subr.mxu0 0.0
    %3398 = vmatpush1.msra.mxu0 %v2052
    %3399 = vmatprep.subr.mxu0 0.0
    %3400 = vmatpush1.msra.mxu0 %v2053
    %3401 = vmatprep.subr.mxu0 0.0
    %3402 = vmatpush1.msra.mxu0 %v2054
    %3403 = vmatprep.subr.mxu0 0.0
    %3404 = vmatpush1.msra.mxu0 %v2055
    %3405 = vmatprep.subr.mxu0 0.0
    %3406 = vmatpush1.msra.mxu0 %v2056
    %3407 = vmatprep.subr.mxu0 0.0
    %3408 = vmatpush1.msra.mxu0 %v2057
    %3409 = vmatprep.subr.mxu0 0.0
    %3410 = vmatpush1.msra.mxu0 0.0
    %3411 = vmatprep.subr.mxu0 0.0
    %3412 = vmatpush1.msra.mxu0 0.0
    %3413 = vmatprep.subr.mxu0 0.0
    %3414 = vmatpush1.msra.mxu0 0.0
    %3415 = vmatprep.subr.mxu0 0.0
    %3416 = vmatpush1.msra.mxu0 0.0
    %3417 = vmatprep.subr.mxu0 0.0
    %3418 = vmatpush1.msra.mxu0 0.0
    %3419 = vmatprep.subr.mxu0 0.0
    %3420 = vmatpush1.msra.mxu0 0.0
    %3421 = vmatprep.subr.mxu0 0.0
    %3422 = vmatpush1.msra.mxu0 0.0
    %3423 = vmatprep.subr.mxu0 0.0
    %3424 = vmatpush1.msra.mxu0 0.0
    %3425 = vmatprep.subr.mxu0 0.0
    %3426 = vmatpush1.msra.mxu0 0.0
    %3427 = vmatprep.subr.mxu0 0.0
    %3428 = vmatpush1.msra.mxu0 0.0
    %3429 = vmatprep.subr.mxu0 0.0
    %3430 = vmatpush1.msra.mxu0 0.0
    %3431 = vmatprep.subr.mxu0 0.0
    %3432 = vmatpush1.msra.mxu0 0.0
    %3433 = vmatprep.subr.mxu0 0.0
    %3434 = vmatpush1.msra.mxu0 0.0
    %3435 = vmatprep.subr.mxu0 0.0
    %3436 = vmatpush1.msra.mxu0 0.0
    %3437 = vmatprep.subr.mxu0 0.0
    %3438 = vmatpush1.msra.mxu0 0.0
    %3439 = vmatprep.subr.mxu0 0.0
    %3440 = vmatpush1.msra.mxu0 0.0
    %3441 = vmatprep.mubr.f32.mxu0 0.0
    %3442 = vmatmul.mubr.f32.gmra.mrb[0].mxu0 %v1602
    %v3443 = vpop.f32.mrb[0].mxu0
    %v3444 = vadd.f32 %v3374, %v3443
    %v3445 = vpop.f32.mrb[0].mxu0
    %3446 = vdwg.mxu0
    %3447 = vmatprep.subr.mxu0 0.0
    %3448 = vmatpush1.msra.mxu0 %v2216
    %3449 = vmatprep.subr.mxu0 0.0
    %3450 = vmatpush1.msra.mxu0 %v2217
    %3451 = vmatprep.subr.mxu0 0.0
    %3452 = vmatpush1.msra.mxu0 %v2218
    %3453 = vmatprep.subr.mxu0 0.0
    %3454 = vmatpush1.msra.mxu0 %v2219
    %3455 = vmatprep.subr.mxu0 0.0
    %3456 = vmatpush1.msra.mxu0 %v2220
    %3457 = vmatprep.subr.mxu0 0.0
    %3458 = vmatpush1.msra.mxu0 %v2221
    %3459 = vmatprep.subr.mxu0 0.0
    %3460 = vmatpush1.msra.mxu0 %v2222
    %3461 = vmatprep.subr.mxu0 0.0
    %3462 = vmatpush1.msra.mxu0 %v2223
    %3463 = vmatprep.subr.mxu0 0.0
    %3464 = vmatpush1.msra.mxu0 %v2224
    %3465 = vmatprep.subr.mxu0 0.0
    %3466 = vmatpush1.msra.mxu0 %v2225
    %3467 = vmatprep.subr.mxu0 0.0
    %3468 = vmatpush1.msra.mxu0 %v2226
    %3469 = vmatprep.subr.mxu0 0.0
    %3470 = vmatpush1.msra.mxu0 %v2227
    %3471 = vmatprep.subr.mxu0 0.0
    %3472 = vmatpush1.msra.mxu0 %v2228
    %3473 = vmatprep.subr.mxu0 0.0
    %3474 = vmatpush1.msra.mxu0 %v2229
    %3475 = vmatprep.subr.mxu0 0.0
    %3476 = vmatpush1.msra.mxu0 %v2230
    %3477 = vmatprep.subr.mxu0 0.0
    %3478 = vmatpush1.msra.mxu0 %v2231
    %3479 = vmatprep.subr.mxu0 0.0
    %3480 = vmatpush1.msra.mxu0 0.0
    %3481 = vmatprep.subr.mxu0 0.0
    %3482 = vmatpush1.msra.mxu0 0.0
    %3483 = vmatprep.subr.mxu0 0.0
    %3484 = vmatpush1.msra.mxu0 0.0
    %3485 = vmatprep.subr.mxu0 0.0
    %3486 = vmatpush1.msra.mxu0 0.0
    %3487 = vmatprep.subr.mxu0 0.0
    %3488 = vmatpush1.msra.mxu0 0.0
    %3489 = vmatprep.subr.mxu0 0.0
    %3490 = vmatpush1.msra.mxu0 0.0
    %3491 = vmatprep.subr.mxu0 0.0
    %3492 = vmatpush1.msra.mxu0 0.0
    %3493 = vmatprep.subr.mxu0 0.0
    %3494 = vmatpush1.msra.mxu0 0.0
    %3495 = vmatprep.subr.mxu0 0.0
    %3496 = vmatpush1.msra.mxu0 0.0
    %3497 = vmatprep.subr.mxu0 0.0
    %3498 = vmatpush1.msra.mxu0 0.0
    %3499 = vmatprep.subr.mxu0 0.0
    %3500 = vmatpush1.msra.mxu0 0.0
    %3501 = vmatprep.subr.mxu0 0.0
    %3502 = vmatpush1.msra.mxu0 0.0
    %3503 = vmatprep.subr.mxu0 0.0
    %3504 = vmatpush1.msra.mxu0 0.0
    %3505 = vmatprep.subr.mxu0 0.0
    %3506 = vmatpush1.msra.mxu0 0.0
    %3507 = vmatprep.subr.mxu0 0.0
    %3508 = vmatpush1.msra.mxu0 0.0
    %3509 = vmatprep.subr.mxu0 0.0
    %3510 = vmatpush1.msra.mxu0 0.0
    %3511 = vmatprep.mubr.f32.mxu0 0.0
    %3512 = vmatmul.mubr.f32.gmra.mrb[0].mxu0 %v1748
    %v3513 = vpop.f32.mrb[0].mxu0
    %v3514 = vadd.f32 0.0, %v3513
    %v3515 = vpop.f32.mrb[0].mxu0
    %3516 = vdwg.mxu0
    %v3517 = vadd.f32 %v3444, %v3514
    %v3518 = vadd.f32 %v3517, %v2307
    %vm3519 = vcmp.ge.f32.partialorder %v3518, 0.0
    %v3520 = vmul.f32 %v3518, 0.2
    %v3521 = vsel %vm3519, %v3518, %v3520
    %s3522 = scalar_lea.vmem [#allocation9], 512
    %v3523 = vld [vmem:[%s3522] sm:$0xff]
    %v3524 = vld [vmem:[%s3522 + $0x8] sm:$0xff]
    %v3525 = vld [vmem:[%s3522 + $0x10] sm:$0xff]
    %v3526 = vld [vmem:[%s3522 + $0x18] sm:$0xff]
    %v3527 = vld [vmem:[%s3522 + $0x20] sm:$0xff]
    %v3528 = vld [vmem:[%s3522 + $0x28] sm:$0xff]
    %v3529 = vld [vmem:[%s3522 + $0x30] sm:$0xff]
    %v3530 = vld [vmem:[%s3522 + $0x38] sm:$0xff]
    %v3531 = vld [vmem:[%s3522 + $0x40] sm:$0xff]
    %v3532 = vld [vmem:[%s3522 + $0x48] sm:$0xff]
    %v3533 = vld [vmem:[%s3522 + $0x50] sm:$0xff]
    %v3534 = vld [vmem:[%s3522 + $0x58] sm:$0xff]
    %v3535 = vld [vmem:[%s3522 + $0x60] sm:$0xff]
    %v3536 = vld [vmem:[%s3522 + $0x68] sm:$0xff]
    %v3537 = vld [vmem:[%s3522 + $0x70] sm:$0xff]
    %v3538 = vld [vmem:[%s3522 + $0x78] sm:$0xff]
    %3539 = vmatprep.subr.mxu0 0.0
    %3540 = vmatpush1.msra.mxu0 %v3523
    %3541 = vmatprep.subr.mxu0 0.0
    %3542 = vmatpush1.msra.mxu0 %v3524
    %3543 = vmatprep.subr.mxu0 0.0
    %3544 = vmatpush1.msra.mxu0 %v3525
    %3545 = vmatprep.subr.mxu0 0.0
    %3546 = vmatpush1.msra.mxu0 %v3526
    %3547 = vmatprep.subr.mxu0 0.0
    %3548 = vmatpush1.msra.mxu0 %v3527
    %3549 = vmatprep.subr.mxu0 0.0
    %3550 = vmatpush1.msra.mxu0 %v3528
    %3551 = vmatprep.subr.mxu0 0.0
    %3552 = vmatpush1.msra.mxu0 %v3529
    %3553 = vmatprep.subr.mxu0 0.0
    %3554 = vmatpush1.msra.mxu0 %v3530
    %3555 = vmatprep.subr.mxu0 0.0
    %3556 = vmatpush1.msra.mxu0 %v3531
    %3557 = vmatprep.subr.mxu0 0.0
    %3558 = vmatpush1.msra.mxu0 %v3532
    %3559 = vmatprep.subr.mxu0 0.0
    %3560 = vmatpush1.msra.mxu0 %v3533
    %3561 = vmatprep.subr.mxu0 0.0
    %3562 = vmatpush1.msra.mxu0 %v3534
    %3563 = vmatprep.subr.mxu0 0.0
    %3564 = vmatpush1.msra.mxu0 %v3535
    %3565 = vmatprep.subr.mxu0 0.0
    %3566 = vmatpush1.msra.mxu0 %v3536
    %3567 = vmatprep.subr.mxu0 0.0
    %3568 = vmatpush1.msra.mxu0 %v3537
    %3569 = vmatprep.subr.mxu0 0.0
    %3570 = vmatpush1.msra.mxu0 %v3538
    %3571 = vmatprep.subr.mxu0 0.0
    %3572 = vmatpush1.msra.mxu0 0.0
    %3573 = vmatprep.subr.mxu0 0.0
    %3574 = vmatpush1.msra.mxu0 0.0
    %3575 = vmatprep.subr.mxu0 0.0
    %3576 = vmatpush1.msra.mxu0 0.0
    %3577 = vmatprep.subr.mxu0 0.0
    %3578 = vmatpush1.msra.mxu0 0.0
    %3579 = vmatprep.subr.mxu0 0.0
    %3580 = vmatpush1.msra.mxu0 0.0
    %3581 = vmatprep.subr.mxu0 0.0
    %3582 = vmatpush1.msra.mxu0 0.0
    %3583 = vmatprep.subr.mxu0 0.0
    %3584 = vmatpush1.msra.mxu0 0.0
    %3585 = vmatprep.subr.mxu0 0.0
    %3586 = vmatpush1.msra.mxu0 0.0
    %3587 = vmatprep.subr.mxu0 0.0
    %3588 = vmatpush1.msra.mxu0 0.0
    %3589 = vmatprep.subr.mxu0 0.0
    %3590 = vmatpush1.msra.mxu0 0.0
    %3591 = vmatprep.subr.mxu0 0.0
    %3592 = vmatpush1.msra.mxu0 0.0
    %3593 = vmatprep.subr.mxu0 0.0
    %3594 = vmatpush1.msra.mxu0 0.0
    %3595 = vmatprep.subr.mxu0 0.0
    %3596 = vmatpush1.msra.mxu0 0.0
    %3597 = vmatprep.subr.mxu0 0.0
    %3598 = vmatpush1.msra.mxu0 0.0
    %3599 = vmatprep.subr.mxu0 0.0
    %3600 = vmatpush1.msra.mxu0 0.0
    %3601 = vmatprep.subr.mxu0 0.0
    %3602 = vmatpush1.msra.mxu0 0.0
    %3603 = vmatprep.mubr.f32.mxu0 0.0
    %3604 = vmatmul.mubr.f32.gmra.mrb[0].mxu0 %v3521
    %v3605 = vpop.f32.mrb[0].mxu0
    %v3606 = vadd.f32 0.0, %v3605
    %v3607 = vpop.f32.mrb[0].mxu0
    %3608 = vdwg.mxu0
    %v3609 = vadd.f32 %v3306, %v3606
    %3610 = vmatprep.subr.mxu0 0.0
    %3611 = vmatpush1.msra.mxu0 %v2059
    %3612 = vmatprep.subr.mxu0 0.0
    %3613 = vmatpush1.msra.mxu0 %v2060
    %3614 = vmatprep.subr.mxu0 0.0
    %3615 = vmatpush1.msra.mxu0 %v2061
    %3616 = vmatprep.subr.mxu0 0.0
    %3617 = vmatpush1.msra.mxu0 %v2062
    %3618 = vmatprep.subr.mxu0 0.0
    %3619 = vmatpush1.msra.mxu0 %v2063
    %3620 = vmatprep.subr.mxu0 0.0
    %3621 = vmatpush1.msra.mxu0 %v2064
    %3622 = vmatprep.subr.mxu0 0.0
    %3623 = vmatpush1.msra.mxu0 %v2065
    %3624 = vmatprep.subr.mxu0 0.0
    %3625 = vmatpush1.msra.mxu0 %v2066
    %3626 = vmatprep.subr.mxu0 0.0
    %3627 = vmatpush1.msra.mxu0 %v2067
    %3628 = vmatprep.subr.mxu0 0.0
    %3629 = vmatpush1.msra.mxu0 %v2068
    %3630 = vmatprep.subr.mxu0 0.0
    %3631 = vmatpush1.msra.mxu0 %v2069
    %3632 = vmatprep.subr.mxu0 0.0
    %3633 = vmatpush1.msra.mxu0 %v2070
    %3634 = vmatprep.subr.mxu0 0.0
    %3635 = vmatpush1.msra.mxu0 %v2071
    %3636 = vmatprep.subr.mxu0 0.0
    %3637 = vmatpush1.msra.mxu0 %v2072
    %3638 = vmatprep.subr.mxu0 0.0
    %3639 = vmatpush1.msra.mxu0 %v2073
    %3640 = vmatprep.subr.mxu0 0.0
    %3641 = vmatpush1.msra.mxu0 %v2074
    %3642 = vmatprep.subr.mxu0 0.0
    %3643 = vmatpush1.msra.mxu0 0.0
    %3644 = vmatprep.subr.mxu0 0.0
    %3645 = vmatpush1.msra.mxu0 0.0
    %3646 = vmatprep.subr.mxu0 0.0
    %3647 = vmatpush1.msra.mxu0 0.0
    %3648 = vmatprep.subr.mxu0 0.0
    %3649 = vmatpush1.msra.mxu0 0.0
    %3650 = vmatprep.subr.mxu0 0.0
    %3651 = vmatpush1.msra.mxu0 0.0
    %3652 = vmatprep.subr.mxu0 0.0
    %3653 = vmatpush1.msra.mxu0 0.0
    %3654 = vmatprep.subr.mxu0 0.0
    %3655 = vmatpush1.msra.mxu0 0.0
    %3656 = vmatprep.subr.mxu0 0.0
    %3657 = vmatpush1.msra.mxu0 0.0
    %3658 = vmatprep.subr.mxu0 0.0
    %3659 = vmatpush1.msra.mxu0 0.0
    %3660 = vmatprep.subr.mxu0 0.0
    %3661 = vmatpush1.msra.mxu0 0.0
    %3662 = vmatprep.subr.mxu0 0.0
    %3663 = vmatpush1.msra.mxu0 0.0
    %3664 = vmatprep.subr.mxu0 0.0
    %3665 = vmatpush1.msra.mxu0 0.0
    %3666 = vmatprep.subr.mxu0 0.0
    %3667 = vmatpush1.msra.mxu0 0.0
    %3668 = vmatprep.subr.mxu0 0.0
    %3669 = vmatpush1.msra.mxu0 0.0
    %3670 = vmatprep.subr.mxu0 0.0
    %3671 = vmatpush1.msra.mxu0 0.0
    %3672 = vmatprep.subr.mxu0 0.0
    %3673 = vmatpush1.msra.mxu0 0.0
    %3674 = vmatprep.mubr.f32.mxu0 0.0
    %3675 = vmatmul.mubr.f32.gmra.mrb[0].mxu0 %v1821
    %v3676 = vpop.f32.mrb[0].mxu0
    %v3677 = vadd.f32 0.0, %v3676
    %v3678 = vpop.f32.mrb[0].mxu0
    %3679 = vdwg.mxu0
    %3680 = vmatprep.subr.mxu0 0.0
    %3681 = vmatpush1.msra.mxu0 %v2042
    %3682 = vmatprep.subr.mxu0 0.0
    %3683 = vmatpush1.msra.mxu0 %v2043
    %3684 = vmatprep.subr.mxu0 0.0
    %3685 = vmatpush1.msra.mxu0 %v2044
    %3686 = vmatprep.subr.mxu0 0.0
    %3687 = vmatpush1.msra.mxu0 %v2045
    %3688 = vmatprep.subr.mxu0 0.0
    %3689 = vmatpush1.msra.mxu0 %v2046
    %3690 = vmatprep.subr.mxu0 0.0
    %3691 = vmatpush1.msra.mxu0 %v2047
    %3692 = vmatprep.subr.mxu0 0.0
    %3693 = vmatpush1.msra.mxu0 %v2048
    %3694 = vmatprep.subr.mxu0 0.0
    %3695 = vmatpush1.msra.mxu0 %v2049
    %3696 = vmatprep.subr.mxu0 0.0
    %3697 = vmatpush1.msra.mxu0 %v2050
    %3698 = vmatprep.subr.mxu0 0.0
    %3699 = vmatpush1.msra.mxu0 %v2051
    %3700 = vmatprep.subr.mxu0 0.0
    %3701 = vmatpush1.msra.mxu0 %v2052
    %3702 = vmatprep.subr.mxu0 0.0
    %3703 = vmatpush1.msra.mxu0 %v2053
    %3704 = vmatprep.subr.mxu0 0.0
    %3705 = vmatpush1.msra.mxu0 %v2054
    %3706 = vmatprep.subr.mxu0 0.0
    %3707 = vmatpush1.msra.mxu0 %v2055
    %3708 = vmatprep.subr.mxu0 0.0
    %3709 = vmatpush1.msra.mxu0 %v2056
    %3710 = vmatprep.subr.mxu0 0.0
    %3711 = vmatpush1.msra.mxu0 %v2057
    %3712 = vmatprep.subr.mxu0 0.0
    %3713 = vmatpush1.msra.mxu0 0.0
    %3714 = vmatprep.subr.mxu0 0.0
    %3715 = vmatpush1.msra.mxu0 0.0
    %3716 = vmatprep.subr.mxu0 0.0
    %3717 = vmatpush1.msra.mxu0 0.0
    %3718 = vmatprep.subr.mxu0 0.0
    %3719 = vmatpush1.msra.mxu0 0.0
    %3720 = vmatprep.subr.mxu0 0.0
    %3721 = vmatpush1.msra.mxu0 0.0
    %3722 = vmatprep.subr.mxu0 0.0
    %3723 = vmatpush1.msra.mxu0 0.0
    %3724 = vmatprep.subr.mxu0 0.0
    %3725 = vmatpush1.msra.mxu0 0.0
    %3726 = vmatprep.subr.mxu0 0.0
    %3727 = vmatpush1.msra.mxu0 0.0
    %3728 = vmatprep.subr.mxu0 0.0
    %3729 = vmatpush1.msra.mxu0 0.0
    %3730 = vmatprep.subr.mxu0 0.0
    %3731 = vmatpush1.msra.mxu0 0.0
    %3732 = vmatprep.subr.mxu0 0.0
    %3733 = vmatpush1.msra.mxu0 0.0
    %3734 = vmatprep.subr.mxu0 0.0
    %3735 = vmatpush1.msra.mxu0 0.0
    %3736 = vmatprep.subr.mxu0 0.0
    %3737 = vmatpush1.msra.mxu0 0.0
    %3738 = vmatprep.subr.mxu0 0.0
    %3739 = vmatpush1.msra.mxu0 0.0
    %3740 = vmatprep.subr.mxu0 0.0
    %3741 = vmatpush1.msra.mxu0 0.0
    %3742 = vmatprep.subr.mxu0 0.0
    %3743 = vmatpush1.msra.mxu0 0.0
    %3744 = vmatprep.mubr.f32.mxu0 0.0
    %3745 = vmatmul.mubr.f32.gmra.mrb[0].mxu0 %v1748
    %v3746 = vpop.f32.mrb[0].mxu0
    %v3747 = vadd.f32 %v3677, %v3746
    %v3748 = vpop.f32.mrb[0].mxu0
    %3749 = vdwg.mxu0
    %3750 = vmatprep.subr.mxu0 0.0
    %3751 = vmatpush1.msra.mxu0 %v2216
    %3752 = vmatprep.subr.mxu0 0.0
    %3753 = vmatpush1.msra.mxu0 %v2217
    %3754 = vmatprep.subr.mxu0 0.0
    %3755 = vmatpush1.msra.mxu0 %v2218
    %3756 = vmatprep.subr.mxu0 0.0
    %3757 = vmatpush1.msra.mxu0 %v2219
    %3758 = vmatprep.subr.mxu0 0.0
    %3759 = vmatpush1.msra.mxu0 %v2220
    %3760 = vmatprep.subr.mxu0 0.0
    %3761 = vmatpush1.msra.mxu0 %v2221
    %3762 = vmatprep.subr.mxu0 0.0
    %3763 = vmatpush1.msra.mxu0 %v2222
    %3764 = vmatprep.subr.mxu0 0.0
    %3765 = vmatpush1.msra.mxu0 %v2223
    %3766 = vmatprep.subr.mxu0 0.0
    %3767 = vmatpush1.msra.mxu0 %v2224
    %3768 = vmatprep.subr.mxu0 0.0
    %3769 = vmatpush1.msra.mxu0 %v2225
    %3770 = vmatprep.subr.mxu0 0.0
    %3771 = vmatpush1.msra.mxu0 %v2226
    %3772 = vmatprep.subr.mxu0 0.0
    %3773 = vmatpush1.msra.mxu0 %v2227
    %3774 = vmatprep.subr.mxu0 0.0
    %3775 = vmatpush1.msra.mxu0 %v2228
    %3776 = vmatprep.subr.mxu0 0.0
    %3777 = vmatpush1.msra.mxu0 %v2229
    %3778 = vmatprep.subr.mxu0 0.0
    %3779 = vmatpush1.msra.mxu0 %v2230
    %3780 = vmatprep.subr.mxu0 0.0
    %3781 = vmatpush1.msra.mxu0 %v2231
    %3782 = vmatprep.subr.mxu0 0.0
    %3783 = vmatpush1.msra.mxu0 0.0
    %3784 = vmatprep.subr.mxu0 0.0
    %3785 = vmatpush1.msra.mxu0 0.0
    %3786 = vmatprep.subr.mxu0 0.0
    %3787 = vmatpush1.msra.mxu0 0.0
    %3788 = vmatprep.subr.mxu0 0.0
    %3789 = vmatpush1.msra.mxu0 0.0
    %3790 = vmatprep.subr.mxu0 0.0
    %3791 = vmatpush1.msra.mxu0 0.0
    %3792 = vmatprep.subr.mxu0 0.0
    %3793 = vmatpush1.msra.mxu0 0.0
    %3794 = vmatprep.subr.mxu0 0.0
    %3795 = vmatpush1.msra.mxu0 0.0
    %3796 = vmatprep.subr.mxu0 0.0
    %3797 = vmatpush1.msra.mxu0 0.0
    %3798 = vmatprep.subr.mxu0 0.0
    %3799 = vmatpush1.msra.mxu0 0.0
    %3800 = vmatprep.subr.mxu0 0.0
    %3801 = vmatpush1.msra.mxu0 0.0
    %3802 = vmatprep.subr.mxu0 0.0
    %3803 = vmatpush1.msra.mxu0 0.0
    %3804 = vmatprep.subr.mxu0 0.0
    %3805 = vmatpush1.msra.mxu0 0.0
    %3806 = vmatprep.subr.mxu0 0.0
    %3807 = vmatpush1.msra.mxu0 0.0
    %3808 = vmatprep.subr.mxu0 0.0
    %3809 = vmatpush1.msra.mxu0 0.0
    %3810 = vmatprep.subr.mxu0 0.0
    %3811 = vmatpush1.msra.mxu0 0.0
    %3812 = vmatprep.subr.mxu0 0.0
    %3813 = vmatpush1.msra.mxu0 0.0
    %3814 = vmatprep.mubr.f32.mxu0 0.0
    %3815 = vmatmul.mubr.f32.gmra.mrb[0].mxu0 %v1894
    %v3816 = vpop.f32.mrb[0].mxu0
    %v3817 = vadd.f32 0.0, %v3816
    %v3818 = vpop.f32.mrb[0].mxu0
    %3819 = vdwg.mxu0
    %v3820 = vadd.f32 %v3747, %v3817
    %v3821 = vadd.f32 %v3820, %v2307
    %vm3822 = vcmp.ge.f32.partialorder %v3821, 0.0
    %v3823 = vmul.f32 %v3821, 0.2
    %v3824 = vsel %vm3822, %v3821, %v3823
    %s3825 = scalar_lea.vmem [#allocation9], 640
    %v3826 = vld [vmem:[%s3825] sm:$0xff]
    %v3827 = vld [vmem:[%s3825 + $0x8] sm:$0xff]
    %v3828 = vld [vmem:[%s3825 + $0x10] sm:$0xff]
    %v3829 = vld [vmem:[%s3825 + $0x18] sm:$0xff]
    %v3830 = vld [vmem:[%s3825 + $0x20] sm:$0xff]
    %v3831 = vld [vmem:[%s3825 + $0x28] sm:$0xff]
    %v3832 = vld [vmem:[%s3825 + $0x30] sm:$0xff]
    %v3833 = vld [vmem:[%s3825 + $0x38] sm:$0xff]
    %v3834 = vld [vmem:[%s3825 + $0x40] sm:$0xff]
    %v3835 = vld [vmem:[%s3825 + $0x48] sm:$0xff]
    %v3836 = vld [vmem:[%s3825 + $0x50] sm:$0xff]
    %v3837 = vld [vmem:[%s3825 + $0x58] sm:$0xff]
    %v3838 = vld [vmem:[%s3825 + $0x60] sm:$0xff]
    %v3839 = vld [vmem:[%s3825 + $0x68] sm:$0xff]
    %v3840 = vld [vmem:[%s3825 + $0x70] sm:$0xff]
    %v3841 = vld [vmem:[%s3825 + $0x78] sm:$0xff]
    %3842 = vmatprep.subr.mxu0 0.0
    %3843 = vmatpush1.msra.mxu0 %v3826
    %3844 = vmatprep.subr.mxu0 0.0
    %3845 = vmatpush1.msra.mxu0 %v3827
    %3846 = vmatprep.subr.mxu0 0.0
    %3847 = vmatpush1.msra.mxu0 %v3828
    %3848 = vmatprep.subr.mxu0 0.0
    %3849 = vmatpush1.msra.mxu0 %v3829
    %3850 = vmatprep.subr.mxu0 0.0
    %3851 = vmatpush1.msra.mxu0 %v3830
    %3852 = vmatprep.subr.mxu0 0.0
    %3853 = vmatpush1.msra.mxu0 %v3831
    %3854 = vmatprep.subr.mxu0 0.0
    %3855 = vmatpush1.msra.mxu0 %v3832
    %3856 = vmatprep.subr.mxu0 0.0
    %3857 = vmatpush1.msra.mxu0 %v3833
    %3858 = vmatprep.subr.mxu0 0.0
    %3859 = vmatpush1.msra.mxu0 %v3834
    %3860 = vmatprep.subr.mxu0 0.0
    %3861 = vmatpush1.msra.mxu0 %v3835
    %3862 = vmatprep.subr.mxu0 0.0
    %3863 = vmatpush1.msra.mxu0 %v3836
    %3864 = vmatprep.subr.mxu0 0.0
    %3865 = vmatpush1.msra.mxu0 %v3837
    %3866 = vmatprep.subr.mxu0 0.0
    %3867 = vmatpush1.msra.mxu0 %v3838
    %3868 = vmatprep.subr.mxu0 0.0
    %3869 = vmatpush1.msra.mxu0 %v3839
    %3870 = vmatprep.subr.mxu0 0.0
    %3871 = vmatpush1.msra.mxu0 %v3840
    %3872 = vmatprep.subr.mxu0 0.0
    %3873 = vmatpush1.msra.mxu0 %v3841
    %3874 = vmatprep.subr.mxu0 0.0
    %3875 = vmatpush1.msra.mxu0 0.0
    %3876 = vmatprep.subr.mxu0 0.0
    %3877 = vmatpush1.msra.mxu0 0.0
    %3878 = vmatprep.subr.mxu0 0.0
    %3879 = vmatpush1.msra.mxu0 0.0
    %3880 = vmatprep.subr.mxu0 0.0
    %3881 = vmatpush1.msra.mxu0 0.0
    %3882 = vmatprep.subr.mxu0 0.0
    %3883 = vmatpush1.msra.mxu0 0.0
    %3884 = vmatprep.subr.mxu0 0.0
    %3885 = vmatpush1.msra.mxu0 0.0
    %3886 = vmatprep.subr.mxu0 0.0
    %3887 = vmatpush1.msra.mxu0 0.0
    %3888 = vmatprep.subr.mxu0 0.0
    %3889 = vmatpush1.msra.mxu0 0.0
    %3890 = vmatprep.subr.mxu0 0.0
    %3891 = vmatpush1.msra.mxu0 0.0
    %3892 = vmatprep.subr.mxu0 0.0
    %3893 = vmatpush1.msra.mxu0 0.0
    %3894 = vmatprep.subr.mxu0 0.0
    %3895 = vmatpush1.msra.mxu0 0.0
    %3896 = vmatprep.subr.mxu0 0.0
    %3897 = vmatpush1.msra.mxu0 0.0
    %3898 = vmatprep.subr.mxu0 0.0
    %3899 = vmatpush1.msra.mxu0 0.0
    %3900 = vmatprep.subr.mxu0 0.0
    %3901 = vmatpush1.msra.mxu0 0.0
    %3902 = vmatprep.subr.mxu0 0.0
    %3903 = vmatpush1.msra.mxu0 0.0
    %3904 = vmatprep.subr.mxu0 0.0
    %3905 = vmatpush1.msra.mxu0 0.0
    %3906 = vmatprep.mubr.f32.mxu0 0.0
    %3907 = vmatmul.mubr.f32.gmra.mrb[0].mxu0 %v3824
    %v3908 = vpop.f32.mrb[0].mxu0
    %v3909 = vadd.f32 0.0, %v3908
    %v3910 = vpop.f32.mrb[0].mxu0
    %3911 = vdwg.mxu0
    %v3912 = vadd.f32 %v3609, %v3909
    %3913 = vmatprep.subr.mxu0 0.0
    %3914 = vmatpush1.msra.mxu0 %v2059
    %3915 = vmatprep.subr.mxu0 0.0
    %3916 = vmatpush1.msra.mxu0 %v2060
    %3917 = vmatprep.subr.mxu0 0.0
    %3918 = vmatpush1.msra.mxu0 %v2061
    %3919 = vmatprep.subr.mxu0 0.0
    %3920 = vmatpush1.msra.mxu0 %v2062
    %3921 = vmatprep.subr.mxu0 0.0
    %3922 = vmatpush1.msra.mxu0 %v2063
    %3923 = vmatprep.subr.mxu0 0.0
    %3924 = vmatpush1.msra.mxu0 %v2064
    %3925 = vmatprep.subr.mxu0 0.0
    %3926 = vmatpush1.msra.mxu0 %v2065
    %3927 = vmatprep.subr.mxu0 0.0
    %3928 = vmatpush1.msra.mxu0 %v2066
    %3929 = vmatprep.subr.mxu0 0.0
    %3930 = vmatpush1.msra.mxu0 %v2067
    %3931 = vmatprep.subr.mxu0 0.0
    %3932 = vmatpush1.msra.mxu0 %v2068
    %3933 = vmatprep.subr.mxu0 0.0
    %3934 = vmatpush1.msra.mxu0 %v2069
    %3935 = vmatprep.subr.mxu0 0.0
    %3936 = vmatpush1.msra.mxu0 %v2070
    %3937 = vmatprep.subr.mxu0 0.0
    %3938 = vmatpush1.msra.mxu0 %v2071
    %3939 = vmatprep.subr.mxu0 0.0
    %3940 = vmatpush1.msra.mxu0 %v2072
    %3941 = vmatprep.subr.mxu0 0.0
    %3942 = vmatpush1.msra.mxu0 %v2073
    %3943 = vmatprep.subr.mxu0 0.0
    %3944 = vmatpush1.msra.mxu0 %v2074
    %3945 = vmatprep.subr.mxu0 0.0
    %3946 = vmatpush1.msra.mxu0 0.0
    %3947 = vmatprep.subr.mxu0 0.0
    %3948 = vmatpush1.msra.mxu0 0.0
    %3949 = vmatprep.subr.mxu0 0.0
    %3950 = vmatpush1.msra.mxu0 0.0
    %3951 = vmatprep.subr.mxu0 0.0
    %3952 = vmatpush1.msra.mxu0 0.0
    %3953 = vmatprep.subr.mxu0 0.0
    %3954 = vmatpush1.msra.mxu0 0.0
    %3955 = vmatprep.subr.mxu0 0.0
    %3956 = vmatpush1.msra.mxu0 0.0
    %3957 = vmatprep.subr.mxu0 0.0
    %3958 = vmatpush1.msra.mxu0 0.0
    %3959 = vmatprep.subr.mxu0 0.0
    %3960 = vmatpush1.msra.mxu0 0.0
    %3961 = vmatprep.subr.mxu0 0.0
    %3962 = vmatpush1.msra.mxu0 0.0
    %3963 = vmatprep.subr.mxu0 0.0
    %3964 = vmatpush1.msra.mxu0 0.0
    %3965 = vmatprep.subr.mxu0 0.0
    %3966 = vmatpush1.msra.mxu0 0.0
    %3967 = vmatprep.subr.mxu0 0.0
    %3968 = vmatpush1.msra.mxu0 0.0
    %3969 = vmatprep.subr.mxu0 0.0
    %3970 = vmatpush1.msra.mxu0 0.0
    %3971 = vmatprep.subr.mxu0 0.0
    %3972 = vmatpush1.msra.mxu0 0.0
    %3973 = vmatprep.subr.mxu0 0.0
    %3974 = vmatpush1.msra.mxu0 0.0
    %3975 = vmatprep.subr.mxu0 0.0
    %3976 = vmatpush1.msra.mxu0 0.0
    %3977 = vmatprep.mubr.f32.mxu0 0.0
    %3978 = vmatmul.mubr.f32.gmra.mrb[0].mxu0 %v1967
    %v3979 = vpop.f32.mrb[0].mxu0
    %v3980 = vadd.f32 0.0, %v3979
    %v3981 = vpop.f32.mrb[0].mxu0
    %3982 = vdwg.mxu0
    %3983 = vmatprep.subr.mxu0 0.0
    %3984 = vmatpush1.msra.mxu0 %v2042
    %3985 = vmatprep.subr.mxu0 0.0
    %3986 = vmatpush1.msra.mxu0 %v2043
    %3987 = vmatprep.subr.mxu0 0.0
    %3988 = vmatpush1.msra.mxu0 %v2044
    %3989 = vmatprep.subr.mxu0 0.0
    %3990 = vmatpush1.msra.mxu0 %v2045
    %3991 = vmatprep.subr.mxu0 0.0
    %3992 = vmatpush1.msra.mxu0 %v2046
    %3993 = vmatprep.subr.mxu0 0.0
    %3994 = vmatpush1.msra.mxu0 %v2047
    %3995 = vmatprep.subr.mxu0 0.0
    %3996 = vmatpush1.msra.mxu0 %v2048
    %3997 = vmatprep.subr.mxu0 0.0
    %3998 = vmatpush1.msra.mxu0 %v2049
    %3999 = vmatprep.subr.mxu0 0.0
    %4000 = vmatpush1.msra.mxu0 %v2050
    %4001 = vmatprep.subr.mxu0 0.0
    %4002 = vmatpush1.msra.mxu0 %v2051
    %4003 = vmatprep.subr.mxu0 0.0
    %4004 = vmatpush1.msra.mxu0 %v2052
    %4005 = vmatprep.subr.mxu0 0.0
    %4006 = vmatpush1.msra.mxu0 %v2053
    %4007 = vmatprep.subr.mxu0 0.0
    %4008 = vmatpush1.msra.mxu0 %v2054
    %4009 = vmatprep.subr.mxu0 0.0
    %4010 = vmatpush1.msra.mxu0 %v2055
    %4011 = vmatprep.subr.mxu0 0.0
    %4012 = vmatpush1.msra.mxu0 %v2056
    %4013 = vmatprep.subr.mxu0 0.0
    %4014 = vmatpush1.msra.mxu0 %v2057
    %4015 = vmatprep.subr.mxu0 0.0
    %4016 = vmatpush1.msra.mxu0 0.0
    %4017 = vmatprep.subr.mxu0 0.0
    %4018 = vmatpush1.msra.mxu0 0.0
    %4019 = vmatprep.subr.mxu0 0.0
    %4020 = vmatpush1.msra.mxu0 0.0
    %4021 = vmatprep.subr.mxu0 0.0
    %4022 = vmatpush1.msra.mxu0 0.0
    %4023 = vmatprep.subr.mxu0 0.0
    %4024 = vmatpush1.msra.mxu0 0.0
    %4025 = vmatprep.subr.mxu0 0.0
    %4026 = vmatpush1.msra.mxu0 0.0
    %4027 = vmatprep.subr.mxu0 0.0
    %4028 = vmatpush1.msra.mxu0 0.0
    %4029 = vmatprep.subr.mxu0 0.0
    %4030 = vmatpush1.msra.mxu0 0.0
    %4031 = vmatprep.subr.mxu0 0.0
    %4032 = vmatpush1.msra.mxu0 0.0
    %4033 = vmatprep.subr.mxu0 0.0
    %4034 = vmatpush1.msra.mxu0 0.0
    %4035 = vmatprep.subr.mxu0 0.0
    %4036 = vmatpush1.msra.mxu0 0.0
    %4037 = vmatprep.subr.mxu0 0.0
    %4038 = vmatpush1.msra.mxu0 0.0
    %4039 = vmatprep.subr.mxu0 0.0
    %4040 = vmatpush1.msra.mxu0 0.0
    %4041 = vmatprep.subr.mxu0 0.0
    %4042 = vmatpush1.msra.mxu0 0.0
    %4043 = vmatprep.subr.mxu0 0.0
    %4044 = vmatpush1.msra.mxu0 0.0
    %4045 = vmatprep.subr.mxu0 0.0
    %4046 = vmatpush1.msra.mxu0 0.0
    %4047 = vmatprep.mubr.f32.mxu0 0.0
    %4048 = vmatmul.mubr.f32.gmra.mrb[0].mxu0 %v1894
    %v4049 = vpop.f32.mrb[0].mxu0
    %v4050 = vadd.f32 %v3980, %v4049
    %v4051 = vpop.f32.mrb[0].mxu0
    %4052 = vdwg.mxu0
    %4053 = vmatprep.subr.mxu0 0.0
    %4054 = vmatpush1.msra.mxu0 %v2216
    %4055 = vmatprep.subr.mxu0 0.0
    %4056 = vmatpush1.msra.mxu0 %v2217
    %4057 = vmatprep.subr.mxu0 0.0
    %4058 = vmatpush1.msra.mxu0 %v2218
    %4059 = vmatprep.subr.mxu0 0.0
    %4060 = vmatpush1.msra.mxu0 %v2219
    %4061 = vmatprep.subr.mxu0 0.0
    %4062 = vmatpush1.msra.mxu0 %v2220
    %4063 = vmatprep.subr.mxu0 0.0
    %4064 = vmatpush1.msra.mxu0 %v2221
    %4065 = vmatprep.subr.mxu0 0.0
    %4066 = vmatpush1.msra.mxu0 %v2222
    %4067 = vmatprep.subr.mxu0 0.0
    %4068 = vmatpush1.msra.mxu0 %v2223
    %4069 = vmatprep.subr.mxu0 0.0
    %4070 = vmatpush1.msra.mxu0 %v2224
    %4071 = vmatprep.subr.mxu0 0.0
    %4072 = vmatpush1.msra.mxu0 %v2225
    %4073 = vmatprep.subr.mxu0 0.0
    %4074 = vmatpush1.msra.mxu0 %v2226
    %4075 = vmatprep.subr.mxu0 0.0
    %4076 = vmatpush1.msra.mxu0 %v2227
    %4077 = vmatprep.subr.mxu0 0.0
    %4078 = vmatpush1.msra.mxu0 %v2228
    %4079 = vmatprep.subr.mxu0 0.0
    %4080 = vmatpush1.msra.mxu0 %v2229
    %4081 = vmatprep.subr.mxu0 0.0
    %4082 = vmatpush1.msra.mxu0 %v2230
    %4083 = vmatprep.subr.mxu0 0.0
    %4084 = vmatpush1.msra.mxu0 %v2231
    %4085 = vmatprep.subr.mxu0 0.0
    %4086 = vmatpush1.msra.mxu0 0.0
    %4087 = vmatprep.subr.mxu0 0.0
    %4088 = vmatpush1.msra.mxu0 0.0
    %4089 = vmatprep.subr.mxu0 0.0
    %4090 = vmatpush1.msra.mxu0 0.0
    %4091 = vmatprep.subr.mxu0 0.0
    %4092 = vmatpush1.msra.mxu0 0.0
    %4093 = vmatprep.subr.mxu0 0.0
    %4094 = vmatpush1.msra.mxu0 0.0
    %4095 = vmatprep.subr.mxu0 0.0
    %4096 = vmatpush1.msra.mxu0 0.0
    %4097 = vmatprep.subr.mxu0 0.0
    %4098 = vmatpush1.msra.mxu0 0.0
    %4099 = vmatprep.subr.mxu0 0.0
    %4100 = vmatpush1.msra.mxu0 0.0
    %4101 = vmatprep.subr.mxu0 0.0
    %4102 = vmatpush1.msra.mxu0 0.0
    %4103 = vmatprep.subr.mxu0 0.0
    %4104 = vmatpush1.msra.mxu0 0.0
    %4105 = vmatprep.subr.mxu0 0.0
    %4106 = vmatpush1.msra.mxu0 0.0
    %4107 = vmatprep.subr.mxu0 0.0
    %4108 = vmatpush1.msra.mxu0 0.0
    %4109 = vmatprep.subr.mxu0 0.0
    %4110 = vmatpush1.msra.mxu0 0.0
    %4111 = vmatprep.subr.mxu0 0.0
    %4112 = vmatpush1.msra.mxu0 0.0
    %4113 = vmatprep.subr.mxu0 0.0
    %4114 = vmatpush1.msra.mxu0 0.0
    %4115 = vmatprep.subr.mxu0 0.0
    %4116 = vmatpush1.msra.mxu0 0.0
    %4117 = vmatprep.mubr.f32.mxu0 0.0
    %4118 = vmatmul.mubr.f32.gmra.mrb[0].mxu0 %v2040
    %v4119 = vpop.f32.mrb[0].mxu0
    %v4120 = vadd.f32 0.0, %v4119
    %v4121 = vpop.f32.mrb[0].mxu0
    %4122 = vdwg.mxu0
    %v4123 = vadd.f32 %v4050, %v4120
    %v4124 = vadd.f32 %v4123, %v2307
    %vm4125 = vcmp.ge.f32.partialorder %v4124, 0.0
    %v4126 = vmul.f32 %v4124, 0.2
    %v4127 = vsel %vm4125, %v4124, %v4126
    %s4128 = scalar_lea.vmem [#allocation9], 768
    %v4129 = vld [vmem:[%s4128] sm:$0xff]
    %v4130 = vld [vmem:[%s4128 + $0x8] sm:$0xff]
    %v4131 = vld [vmem:[%s4128 + $0x10] sm:$0xff]
    %v4132 = vld [vmem:[%s4128 + $0x18] sm:$0xff]
    %v4133 = vld [vmem:[%s4128 + $0x20] sm:$0xff]
    %v4134 = vld [vmem:[%s4128 + $0x28] sm:$0xff]
    %v4135 = vld [vmem:[%s4128 + $0x30] sm:$0xff]
    %v4136 = vld [vmem:[%s4128 + $0x38] sm:$0xff]
    %v4137 = vld [vmem:[%s4128 + $0x40] sm:$0xff]
    %v4138 = vld [vmem:[%s4128 + $0x48] sm:$0xff]
    %v4139 = vld [vmem:[%s4128 + $0x50] sm:$0xff]
    %v4140 = vld [vmem:[%s4128 + $0x58] sm:$0xff]
    %v4141 = vld [vmem:[%s4128 + $0x60] sm:$0xff]
    %v4142 = vld [vmem:[%s4128 + $0x68] sm:$0xff]
    %v4143 = vld [vmem:[%s4128 + $0x70] sm:$0xff]
    %v4144 = vld [vmem:[%s4128 + $0x78] sm:$0xff]
    %4145 = vmatprep.subr.mxu0 0.0
    %4146 = vmatpush1.msra.mxu0 %v4129
    %4147 = vmatprep.subr.mxu0 0.0
    %4148 = vmatpush1.msra.mxu0 %v4130
    %4149 = vmatprep.subr.mxu0 0.0
    %4150 = vmatpush1.msra.mxu0 %v4131
    %4151 = vmatprep.subr.mxu0 0.0
    %4152 = vmatpush1.msra.mxu0 %v4132
    %4153 = vmatprep.subr.mxu0 0.0
    %4154 = vmatpush1.msra.mxu0 %v4133
    %4155 = vmatprep.subr.mxu0 0.0
    %4156 = vmatpush1.msra.mxu0 %v4134
    %4157 = vmatprep.subr.mxu0 0.0
    %4158 = vmatpush1.msra.mxu0 %v4135
    %4159 = vmatprep.subr.mxu0 0.0
    %4160 = vmatpush1.msra.mxu0 %v4136
    %4161 = vmatprep.subr.mxu0 0.0
    %4162 = vmatpush1.msra.mxu0 %v4137
    %4163 = vmatprep.subr.mxu0 0.0
    %4164 = vmatpush1.msra.mxu0 %v4138
    %4165 = vmatprep.subr.mxu0 0.0
    %4166 = vmatpush1.msra.mxu0 %v4139
    %4167 = vmatprep.subr.mxu0 0.0
    %4168 = vmatpush1.msra.mxu0 %v4140
    %4169 = vmatprep.subr.mxu0 0.0
    %4170 = vmatpush1.msra.mxu0 %v4141
    %4171 = vmatprep.subr.mxu0 0.0
    %4172 = vmatpush1.msra.mxu0 %v4142
    %4173 = vmatprep.subr.mxu0 0.0
    %4174 = vmatpush1.msra.mxu0 %v4143
    %4175 = vmatprep.subr.mxu0 0.0
    %4176 = vmatpush1.msra.mxu0 %v4144
    %4177 = vmatprep.subr.mxu0 0.0
    %4178 = vmatpush1.msra.mxu0 0.0
    %4179 = vmatprep.subr.mxu0 0.0
    %4180 = vmatpush1.msra.mxu0 0.0
    %4181 = vmatprep.subr.mxu0 0.0
    %4182 = vmatpush1.msra.mxu0 0.0
    %4183 = vmatprep.subr.mxu0 0.0
    %4184 = vmatpush1.msra.mxu0 0.0
    %4185 = vmatprep.subr.mxu0 0.0
    %4186 = vmatpush1.msra.mxu0 0.0
    %4187 = vmatprep.subr.mxu0 0.0
    %4188 = vmatpush1.msra.mxu0 0.0
    %4189 = vmatprep.subr.mxu0 0.0
    %4190 = vmatpush1.msra.mxu0 0.0
    %4191 = vmatprep.subr.mxu0 0.0
    %4192 = vmatpush1.msra.mxu0 0.0
    %4193 = vmatprep.subr.mxu0 0.0
    %4194 = vmatpush1.msra.mxu0 0.0
    %4195 = vmatprep.subr.mxu0 0.0
    %4196 = vmatpush1.msra.mxu0 0.0
    %4197 = vmatprep.subr.mxu0 0.0
    %4198 = vmatpush1.msra.mxu0 0.0
    %4199 = vmatprep.subr.mxu0 0.0
    %4200 = vmatpush1.msra.mxu0 0.0
    %4201 = vmatprep.subr.mxu0 0.0
    %4202 = vmatpush1.msra.mxu0 0.0
    %4203 = vmatprep.subr.mxu0 0.0
    %4204 = vmatpush1.msra.mxu0 0.0
    %4205 = vmatprep.subr.mxu0 0.0
    %4206 = vmatpush1.msra.mxu0 0.0
    %4207 = vmatprep.subr.mxu0 0.0
    %4208 = vmatpush1.msra.mxu0 0.0
    %4209 = vmatprep.mubr.f32.mxu0 0.0
    %4210 = vmatmul.mubr.f32.gmra.mrb[0].mxu0 %v4127
    %v4211 = vpop.f32.mrb[0].mxu0
    %v4212 = vadd.f32 0.0, %v4211
    %v4213 = vpop.f32.mrb[0].mxu0
    %4214 = vdwg.mxu0
    %v4215 = vadd.f32 %v3912, %v4212
    %v4216 = vld [vmem:[%s8] sm:$0x1]
    %v4218 = vlaneseq
    %v4219 = vshrl.u32 %v4218, 7
    %v4220 = vsub.s32 0, %v4219
    %v4221 = vrot.slane %v4216, %v4220
    %v4223 = vadd.f32 %v4215, %v4221
    %v4224 = vsub.f32 0.0, %v4223
    %v4225 = vmul.f32 %v4224, 1.442695
    %v4226 = vpow.pop %v4225
    %v4227 = vadd.f32 %v4226, 1.0
    %v4228 = vrcp.pop %v4227
    %v4229 = vmul.f32 1.0, %v4228
    %4230 = vst [vmem:[%s9] sm:$0xf] %v4229
    // Predicated region
    $region58: #{conv_discriminator_forward.1} parent=1 // pred_check
      _
    $region59: #{conv_discriminator_forward.1} parent=1 // pred_check_branch
      %4232 = sbr.rel (0) target = $region61
    $region60: #{conv_discriminator_forward.1} parent=1 // pred_region
      _
    $region61: #{conv_discriminator_forward.1} parent=1 // pred_fallthru
      _
    // Predicated region
    $region62: #{conv_discriminator_forward.1} parent=1 // pred_check
      _
    $region63: #{conv_discriminator_forward.1} parent=1 // pred_check_branch
      %4234 = sbr.rel (0) target = $region65
    $region64: #{conv_discriminator_forward.1} parent=1 // pred_region
      _
    $region65: #{conv_discriminator_forward.1} parent=1 // pred_fallthru
      _
    %4235 = vsyncpa [#allocation3], 1
    %4236 = vsyncpa [#allocation5], 1
    %4237 = vsyncpa [#allocation8], 1

</llo_original>
